<compile_context>
chip_gen: v5e
topology: v5e:2x2
jax: 0.10.0
libtpu: 0.0.40
codegen_flags: <defaults>
</compile_context>

<pallas_src>
import functools

import jax
import jax.numpy as jnp
from jax import lax
from jax.experimental import pallas as pl
from jax.experimental.pallas import tpu as pltpu

# ----------------------------- config ----------------------------------------
PAD_IDX = 0
B = 2            # real batch
B_PAD = 8        # padded to sublane granule
S_SRC = 8        # source sequence length
S_TGT = 8        # target sequence length
EMB = 16         # embedding dim
HID = 32         # LSTM hidden dim
SRC_VOCAB = 32
TGT_VOCAB = 32
VOCAB_PAD = 128  # lane-dense logits / one-hots
NEG_INF = -1e30


def _should_fold_embedding():
    # Fold decoder embedding into the fused weights only on 256-deep MXUs
    # (v6e / v7x).  On v5e (128-deep) keep the separate K=80 matmuls.
    try:
        kind = jax.devices()[0].device_kind.lower()
    except Exception:
        return False
    return ("v6" in kind) or ("v7" in kind)


FOLD_EMB = _should_fold_embedding()
XIN = (VOCAB_PAD if FOLD_EMB else EMB) + 2 * HID   # fused contraction dim


def _vmem():
    return pl.BlockSpec(memory_space=pltpu.MemorySpace.VMEM)


def _smem():
    return pl.BlockSpec(memory_space=pltpu.MemorySpace.SMEM)


def _lstm_cell(gates, c):
    # one sigmoid over the full (B, 4H) slab, tanh only on the g slice
    s = jax.nn.sigmoid(gates)
    i = s[:, 0 * HID:1 * HID]
    f = s[:, 1 * HID:2 * HID]
    o = s[:, 3 * HID:4 * HID]
    g = jnp.tanh(gates[:, 2 * HID:3 * HID])
    c_new = f * c + i * g
    h_new = o * jnp.tanh(c_new)
    return h_new, c_new


# --------------------------- fused seq2seq kernel ------------------------------
def _seq2seq_kernel(tf_ref,       # SMEM (S_TGT,) int32   teacher-forcing flags
                    ih_ref,       # (S_SRC, B_PAD, 4*HID) precomputed x@Wih + b
                    whh_ref,      # (HID, 4*HID)          encoder recurrent weights
                    bias_ref,     # (B_PAD, S_SRC*B_PAD)  block-diag + PAD bias
                    tgt_oh_ref,   # (S_TGT, B_PAD, VOCAB_PAD) target one-hots
                    emb_ref,      # (VOCAB_PAD, EMB)      decoder emb (unused if folded)
                    wg_ref,       # (XIN, 4*HID)          fused decoder gate weights
                    bg_ref,       # (1, 4*HID)
                    wfc_ref,      # (XIN, VOCAB_PAD)      fused fc weights (padded)
                    bfc_ref,      # (1, VOCAB_PAD)        padded cols = -1e30
                    out_ref,      # (S_TGT, B_PAD, VOCAB_PAD) logits slab
                    *, fold_emb):
    f32 = jnp.float32

    # ------------- encoder recurrence: keep the 8 h's live in vregs ------------
    h = jnp.zeros((B_PAD, HID), f32)
    c = jnp.zeros((B_PAD, HID), f32)
    hs = []
    for t in range(S_SRC):                                   # fully unrolled
        gates = ih_ref[t] + jnp.dot(h, whh_ref[...], preferred_element_type=f32)
        h, c = _lstm_cell(gates, c)
        hs.append(h)
    # (S_SRC*B_PAD, HID), row index = t*B_PAD + b  (sublane-granule concat)
    enc2d = jnp.concatenate(hs, axis=0)
    enc2d_t = enc2d.T                                        # hoisted, one transpose

    # --------------------------- decoder loop ----------------------------------
    attn_bias = bias_ref[...]                                # (B_PAD, 64)
    bg_b = jnp.broadcast_to(bg_ref[...], (B_PAD, 4 * HID))   # hoisted broadcasts
    bfc_b = jnp.broadcast_to(bfc_ref[...], (B_PAD, VOCAB_PAD))
    lane = lax.broadcasted_iota(jnp.int32, (B_PAD, VOCAB_PAD), 1)

    out_ref[0] = jnp.zeros((B_PAD, VOCAB_PAD), f32)          # outputs[:, 0] stays zero

    inp_oh = tgt_oh_ref[0]                                   # <sos> tokens (one-hot)
    for t in range(1, S_TGT):                                # fully unrolled
        # masked Luong dot attention: two plain MXU matmuls over 64 lanes
        scores = jnp.dot(h, enc2d_t, preferred_element_type=f32) + attn_bias
        m = jnp.max(scores, axis=-1, keepdims=True)
        e = jnp.exp(scores - m)
        denom = jnp.sum(e, axis=-1, keepdims=True)
        attn = e * pl.reciprocal(denom, approx=True)
        ctx = jnp.dot(attn, enc2d, preferred_element_type=f32)        # (B, HID)

        if fold_emb:
            # embedding folded into wg/wfc: feed one-hots straight in (K=192)
            prefix = jnp.concatenate([inp_oh, ctx], axis=-1)          # (B, 160)
        else:
            # in-kernel embedding lookup via one-hot matmul (MXU), K=80
            emb = jnp.dot(inp_oh, emb_ref[...], preferred_element_type=f32)
            prefix = jnp.concatenate([emb, ctx], axis=-1)             # (B, 48)

        # fused LSTM gate matmul over [emb|onehot ; ctx ; h]
        xin = jnp.concatenate([prefix, h], axis=-1)                   # (B, XIN)
        gates = jnp.dot(xin, wg_ref[...], preferred_element_type=f32) + bg_b
        h, c = _lstm_cell(gates, c)

        # fused output projection: same prefix, only the h tail changes
        xout = jnp.concatenate([prefix, h], axis=-1)                  # (B, XIN)
        logits = jnp.dot(xout, wfc_ref[...], preferred_element_type=f32) + bfc_b
        out_ref[t] = logits                                           # lane-dense

        # next input: teacher forcing or greedy argmax (argmax only if needed)
        tgt_oh_t = tgt_oh_ref[t]

        def _greedy(logits=logits):
            mx = jnp.max(logits, axis=-1, keepdims=True)
            first = jnp.min(jnp.where(logits == mx, lane, VOCAB_PAD),
                            axis=-1, keepdims=True)
            return (lane == first).astype(f32)

        inp_oh = lax.cond(tf_ref[t] == 1, lambda oh=tgt_oh_t: oh, _greedy)


# ----------------------------- parameter init ---------------------------------
def init_params(key):
    ks = jax.random.split(key, 13)
    n = lambda k, shape: (0.1 * jax.random.normal(k, shape)).astype(jnp.float32)
    return {
        # encoder: embedding + LSTM(EMB -> HID)
        'enc_emb': n(ks[0], (SRC_VOCAB, EMB)),
        'enc_wih': n(ks[1], (EMB, 4 * HID)),
        'enc_whh': n(ks[2], (HID, 4 * HID)),
        'enc_b':   n(ks[3], (1, 4 * HID)),
        # decoder: embedding + attention + LSTM([EMB;HID] -> HID) + fc -> vocab
        'dec_emb':   n(ks[4], (TGT_VOCAB, EMB)),
        'dec_wih_e': n(ks[5], (EMB, 4 * HID)),
        'dec_wih_c': n(ks[6], (HID, 4 * HID)),
        'dec_whh':   n(ks[7], (HID, 4 * HID)),
        'dec_b':     n(ks[8], (1, 4 * HID)),
        'dec_wfc_h': n(ks[9], (HID, TGT_VOCAB)),
        'dec_wfc_c': n(ks[10], (HID, TGT_VOCAB)),
        'dec_wfc_e': n(ks[11], (EMB, TGT_VOCAB)),
        'dec_bfc':   n(ks[12], (1, TGT_VOCAB)),
    }


# ----------------------------- Seq2Seq forward --------------------------------
@jax.jit
def seq2seq_forward(params, input_seq, target_seq, teacher_forcing_ratio, rng):
    batch_size, src_len = input_seq.shape
    target_len = target_seq.shape[1]
    pad_b = B_PAD - batch_size

    # pad batch to the sublane granule (padded rows are discarded at the end)
    inp_p = jnp.pad(input_seq, ((0, pad_b), (0, 0)), constant_values=PAD_IDX)
    tgt_p = jnp.pad(target_seq, ((0, pad_b), (0, 0)), constant_values=PAD_IDX)

    # block-diagonal additive attention bias over flattened (t*B_PAD + b') lanes:
    # 0 only on the query row's own batch column when that source token != PAD.
    valid = (inp_p != PAD_IDX)                                  # (B_PAD, S_SRC)
    same_b = jnp.eye(B_PAD, dtype=bool)                         # (B_PAD, B_PAD)
    keep = valid[:, :, None] & same_b[:, None, :]               # (B, S, B')
    attn_bias = jnp.where(keep, 0.0, NEG_INF).astype(jnp.float32)
    attn_bias = attn_bias.reshape(B_PAD, S_SRC * B_PAD)         # (8, 64)

    # encoder input projection hoisted out of the recurrence (time-major)
    src_emb = jnp.take(params['enc_emb'], inp_p.T, axis=0)      # (S, B_PAD, EMB)
    ih_enc = (jnp.einsum('sbe,eg->sbg', src_emb, params['enc_wih'])
              + params['enc_b']).astype(jnp.float32)            # (S, B_PAD, 4H)

    # padded decoder embedding table & target one-hots (vocab padded to 128 lanes)
    dec_emb_p = jnp.zeros((VOCAB_PAD, EMB), jnp.float32)
    dec_emb_p = dec_emb_p.at[:TGT_VOCAB].set(params['dec_emb'])
    tgt_oh = jax.nn.one_hot(tgt_p.T, VOCAB_PAD, dtype=jnp.float32)

    # fused decoder weights; unified row ordering [emb|onehot ; ctx ; h]
    if FOLD_EMB:
        w_g_e = dec_emb_p @ params['dec_wih_e']                 # (128, 4H)
        w_f_e = dec_emb_p @ params['dec_wfc_e']                 # (128, V)
    else:
        w_g_e = params['dec_wih_e']                             # (16, 4H)
        w_f_e = params['dec_wfc_e']                             # (16, V)
    w_gates = jnp.concatenate([w_g_e, params['dec_wih_c'], params['dec_whh']],
                              axis=0)                           # (XIN, 4H)
    b_gates = params['dec_b']
    w_fc_real = jnp.concatenate([w_f_e, params['dec_wfc_c'], params['dec_wfc_h']],
                                axis=0)                         # (XIN, V)
    w_fc = jnp.zeros((XIN, VOCAB_PAD), jnp.float32).at[:, :TGT_VOCAB].set(w_fc_real)
    b_fc = jnp.full((1, VOCAB_PAD), NEG_INF, jnp.float32)
    b_fc = b_fc.at[:, :TGT_VOCAB].set(params['dec_bfc'])

    # teacher-forcing draws: one shared scalar per timestep (as torch.rand(1))
    tf_flags = (jax.random.uniform(rng, (target_len,))
                < teacher_forcing_ratio).astype(jnp.int32)

    out = pl.pallas_call(
        functools.partial(_seq2seq_kernel, fold_emb=FOLD_EMB),
        out_shape=jax.ShapeDtypeStruct((S_TGT, B_PAD, VOCAB_PAD), jnp.float32),
        in_specs=[_smem()] + [_vmem()] * 9,
        out_specs=_vmem(),
    )(tf_flags, ih_enc, params['enc_whh'], attn_bias, tgt_oh, dec_emb_p,
      w_gates, b_gates, w_fc, b_fc)

    # (T, B_pad, V_pad) -> (B, T, V)
    return jnp.transpose(out, (1, 0, 2))[:batch_size, :, :TGT_VOCAB]


# ----------------------------------- main --------------------------------------
if __name__ == "__main__":
    key = jax.random.PRNGKey(0)
    k_param, k_src, k_tgt, k_tf = jax.random.split(key, 4)

    params = init_params(k_param)

    input_seq = jax.random.randint(k_src, (B, S_SRC), 1, SRC_VOCAB, dtype=jnp.int32)
    input_seq = input_seq.at[:, -2:].set(PAD_IDX)                 # force some padding
    target_seq = jax.random.randint(k_tgt, (B, S_TGT), 1, TGT_VOCAB, dtype=jnp.int32)

    outputs = seq2seq_forward(params, input_seq, target_seq, 0.5, k_tf)
    outputs = jax.block_until_ready(outputs)

    assert outputs.shape == (B, S_TGT, TGT_VOCAB)
    assert bool(jnp.all(jnp.isfinite(outputs)))
    print("KERNEL_OK")
</pallas_src>

<mosaic_0001>
module attributes {stable_mosaic.version = 11 : i64} {
  func.func @_seq2seq_kernel(%arg0: memref<8xi32, #tpu.memory_space<smem>>, %arg1: memref<8x8x128xf32, #tpu.memory_space<vmem>>, %arg2: memref<32x128xf32, #tpu.memory_space<vmem>>, %arg3: memref<8x64xf32, #tpu.memory_space<vmem>>, %arg4: memref<8x8x128xf32, #tpu.memory_space<vmem>>, %arg5: memref<128x16xf32, #tpu.memory_space<vmem>>, %arg6: memref<80x128xf32, #tpu.memory_space<vmem>>, %arg7: memref<1x128xf32, #tpu.memory_space<vmem>>, %arg8: memref<80x128xf32, #tpu.memory_space<vmem>>, %arg9: memref<1x128xf32, #tpu.memory_space<vmem>>, %arg10: memref<8x8x128xf32, #tpu.memory_space<vmem>>) attributes {dimension_semantics = [], scalar_prefetch = 0 : i64, scratch_operands = 0 : i64, tpu.core_type = #tpu.core_type<tc>} {
    %cst = arith.constant 0.000000e+00 : f32
    %0 = vector.broadcast %cst : f32 to vector<8x32xf32>
    %cst_0 = arith.constant 0.000000e+00 : f32
    %1 = vector.broadcast %cst_0 : f32 to vector<8x32xf32>
    %c0 = arith.constant 0 : index
    %c0_1 = arith.constant 0 : index
    %c0_2 = arith.constant 0 : index
    %2 = vector.load %arg1[%c0, %c0_1, %c0_2] : memref<8x8x128xf32, #tpu.memory_space<vmem>>, vector<1x8x128xf32>
    %3 = vector.shape_cast %2 : vector<1x8x128xf32> to vector<8x128xf32>
    %c0_3 = arith.constant 0 : index
    %c0_4 = arith.constant 0 : index
    %4 = vector.load %arg2[%c0_3, %c0_4] : memref<32x128xf32, #tpu.memory_space<vmem>>, vector<32x128xf32>
    %cst_5 = arith.constant dense<0.000000e+00> : vector<8x128xf32>
    %5 = tpu.matmul %0, %4, %cst_5 {dimension_numbers = #tpu.dot_dimension_numbers<[1], [0], [0], [1], [0, 0, 1, 1], [], []>} : vector<8x32xf32>, vector<32x128xf32>, vector<8x128xf32> -> vector<8x128xf32>
    %6 = arith.addf %3, %5 : vector<8x128xf32>
    %7 = arith.negf %6 : vector<8x128xf32>
    %8 = math.exp %7 : vector<8x128xf32>
    %cst_6 = arith.constant 1.000000e+00 : f32
    %9 = vector.broadcast %cst_6 : f32 to vector<8x128xf32>
    %10 = arith.addf %9, %8 : vector<8x128xf32>
    %11 = arith.divf %9, %10 : vector<8x128xf32>
    %12 = vector.extract_strided_slice %11 {offsets = [0, 0], sizes = [8, 32], strides = [1, 1]} : vector<8x128xf32> to vector<8x32xf32>
    %13 = vector.extract_strided_slice %11 {offsets = [0, 32], sizes = [8, 32], strides = [1, 1]} : vector<8x128xf32> to vector<8x32xf32>
    %14 = vector.extract_strided_slice %11 {offsets = [0, 96], sizes = [8, 32], strides = [1, 1]} : vector<8x128xf32> to vector<8x32xf32>
    %15 = vector.extract_strided_slice %6 {offsets = [0, 64], sizes = [8, 32], strides = [1, 1]} : vector<8x128xf32> to vector<8x32xf32>
    %16 = math.tanh %15 : vector<8x32xf32>
    %17 = arith.mulf %13, %1 : vector<8x32xf32>
    %18 = arith.mulf %12, %16 : vector<8x32xf32>
    %19 = arith.addf %17, %18 : vector<8x32xf32>
    %20 = math.tanh %19 : vector<8x32xf32>
    %21 = arith.mulf %14, %20 : vector<8x32xf32>
    %c1 = arith.constant 1 : index
    %c0_7 = arith.constant 0 : index
    %c0_8 = arith.constant 0 : index
    %22 = vector.load %arg1[%c1, %c0_7, %c0_8] : memref<8x8x128xf32, #tpu.memory_space<vmem>>, vector<1x8x128xf32>
    %23 = vector.shape_cast %22 : vector<1x8x128xf32> to vector<8x128xf32>
    %c0_9 = arith.constant 0 : index
    %c0_10 = arith.constant 0 : index
    %24 = vector.load %arg2[%c0_9, %c0_10] : memref<32x128xf32, #tpu.memory_space<vmem>>, vector<32x128xf32>
    %cst_11 = arith.constant dense<0.000000e+00> : vector<8x128xf32>
    %25 = tpu.matmul %21, %24, %cst_11 {dimension_numbers = #tpu.dot_dimension_numbers<[1], [0], [0], [1], [0, 0, 1, 1], [], []>} : vector<8x32xf32>, vector<32x128xf32>, vector<8x128xf32> -> vector<8x128xf32>
    %26 = arith.addf %23, %25 : vector<8x128xf32>
    %27 = arith.negf %26 : vector<8x128xf32>
    %28 = math.exp %27 : vector<8x128xf32>
    %cst_12 = arith.constant 1.000000e+00 : f32
    %29 = vector.broadcast %cst_12 : f32 to vector<8x128xf32>
    %30 = arith.addf %29, %28 : vector<8x128xf32>
    %31 = arith.divf %29, %30 : vector<8x128xf32>
    %32 = vector.extract_strided_slice %31 {offsets = [0, 0], sizes = [8, 32], strides = [1, 1]} : vector<8x128xf32> to vector<8x32xf32>
    %33 = vector.extract_strided_slice %31 {offsets = [0, 32], sizes = [8, 32], strides = [1, 1]} : vector<8x128xf32> to vector<8x32xf32>
    %34 = vector.extract_strided_slice %31 {offsets = [0, 96], sizes = [8, 32], strides = [1, 1]} : vector<8x128xf32> to vector<8x32xf32>
    %35 = vector.extract_strided_slice %26 {offsets = [0, 64], sizes = [8, 32], strides = [1, 1]} : vector<8x128xf32> to vector<8x32xf32>
    %36 = math.tanh %35 : vector<8x32xf32>
    %37 = arith.mulf %33, %19 : vector<8x32xf32>
    %38 = arith.mulf %32, %36 : vector<8x32xf32>
    %39 = arith.addf %37, %38 : vector<8x32xf32>
    %40 = math.tanh %39 : vector<8x32xf32>
    %41 = arith.mulf %34, %40 : vector<8x32xf32>
    %c2 = arith.constant 2 : index
    %c0_13 = arith.constant 0 : index
    %c0_14 = arith.constant 0 : index
    %42 = vector.load %arg1[%c2, %c0_13, %c0_14] : memref<8x8x128xf32, #tpu.memory_space<vmem>>, vector<1x8x128xf32>
    %43 = vector.shape_cast %42 : vector<1x8x128xf32> to vector<8x128xf32>
    %c0_15 = arith.constant 0 : index
    %c0_16 = arith.constant 0 : index
    %44 = vector.load %arg2[%c0_15, %c0_16] : memref<32x128xf32, #tpu.memory_space<vmem>>, vector<32x128xf32>
    %cst_17 = arith.constant dense<0.000000e+00> : vector<8x128xf32>
    %45 = tpu.matmul %41, %44, %cst_17 {dimension_numbers = #tpu.dot_dimension_numbers<[1], [0], [0], [1], [0, 0, 1, 1], [], []>} : vector<8x32xf32>, vector<32x128xf32>, vector<8x128xf32> -> vector<8x128xf32>
    %46 = arith.addf %43, %45 : vector<8x128xf32>
    %47 = arith.negf %46 : vector<8x128xf32>
    %48 = math.exp %47 : vector<8x128xf32>
    %cst_18 = arith.constant 1.000000e+00 : f32
    %49 = vector.broadcast %cst_18 : f32 to vector<8x128xf32>
    %50 = arith.addf %49, %48 : vector<8x128xf32>
    %51 = arith.divf %49, %50 : vector<8x128xf32>
    %52 = vector.extract_strided_slice %51 {offsets = [0, 0], sizes = [8, 32], strides = [1, 1]} : vector<8x128xf32> to vector<8x32xf32>
    %53 = vector.extract_strided_slice %51 {offsets = [0, 32], sizes = [8, 32], strides = [1, 1]} : vector<8x128xf32> to vector<8x32xf32>
    %54 = vector.extract_strided_slice %51 {offsets = [0, 96], sizes = [8, 32], strides = [1, 1]} : vector<8x128xf32> to vector<8x32xf32>
    %55 = vector.extract_strided_slice %46 {offsets = [0, 64], sizes = [8, 32], strides = [1, 1]} : vector<8x128xf32> to vector<8x32xf32>
    %56 = math.tanh %55 : vector<8x32xf32>
    %57 = arith.mulf %53, %39 : vector<8x32xf32>
    %58 = arith.mulf %52, %56 : vector<8x32xf32>
    %59 = arith.addf %57, %58 : vector<8x32xf32>
    %60 = math.tanh %59 : vector<8x32xf32>
    %61 = arith.mulf %54, %60 : vector<8x32xf32>
    %c3 = arith.constant 3 : index
    %c0_19 = arith.constant 0 : index
    %c0_20 = arith.constant 0 : index
    %62 = vector.load %arg1[%c3, %c0_19, %c0_20] : memref<8x8x128xf32, #tpu.memory_space<vmem>>, vector<1x8x128xf32>
    %63 = vector.shape_cast %62 : vector<1x8x128xf32> to vector<8x128xf32>
    %c0_21 = arith.constant 0 : index
    %c0_22 = arith.constant 0 : index
    %64 = vector.load %arg2[%c0_21, %c0_22] : memref<32x128xf32, #tpu.memory_space<vmem>>, vector<32x128xf32>
    %cst_23 = arith.constant dense<0.000000e+00> : vector<8x128xf32>
    %65 = tpu.matmul %61, %64, %cst_23 {dimension_numbers = #tpu.dot_dimension_numbers<[1], [0], [0], [1], [0, 0, 1, 1], [], []>} : vector<8x32xf32>, vector<32x128xf32>, vector<8x128xf32> -> vector<8x128xf32>
    %66 = arith.addf %63, %65 : vector<8x128xf32>
    %67 = arith.negf %66 : vector<8x128xf32>
    %68 = math.exp %67 : vector<8x128xf32>
    %cst_24 = arith.constant 1.000000e+00 : f32
    %69 = vector.broadcast %cst_24 : f32 to vector<8x128xf32>
    %70 = arith.addf %69, %68 : vector<8x128xf32>
    %71 = arith.divf %69, %70 : vector<8x128xf32>
    %72 = vector.extract_strided_slice %71 {offsets = [0, 0], sizes = [8, 32], strides = [1, 1]} : vector<8x128xf32> to vector<8x32xf32>
    %73 = vector.extract_strided_slice %71 {offsets = [0, 32], sizes = [8, 32], strides = [1, 1]} : vector<8x128xf32> to vector<8x32xf32>
    %74 = vector.extract_strided_slice %71 {offsets = [0, 96], sizes = [8, 32], strides = [1, 1]} : vector<8x128xf32> to vector<8x32xf32>
    %75 = vector.extract_strided_slice %66 {offsets = [0, 64], sizes = [8, 32], strides = [1, 1]} : vector<8x128xf32> to vector<8x32xf32>
    %76 = math.tanh %75 : vector<8x32xf32>
    %77 = arith.mulf %73, %59 : vector<8x32xf32>
    %78 = arith.mulf %72, %76 : vector<8x32xf32>
    %79 = arith.addf %77, %78 : vector<8x32xf32>
    %80 = math.tanh %79 : vector<8x32xf32>
    %81 = arith.mulf %74, %80 : vector<8x32xf32>
    %c4 = arith.constant 4 : index
    %c0_25 = arith.constant 0 : index
    %c0_26 = arith.constant 0 : index
    %82 = vector.load %arg1[%c4, %c0_25, %c0_26] : memref<8x8x128xf32, #tpu.memory_space<vmem>>, vector<1x8x128xf32>
    %83 = vector.shape_cast %82 : vector<1x8x128xf32> to vector<8x128xf32>
    %c0_27 = arith.constant 0 : index
    %c0_28 = arith.constant 0 : index
    %84 = vector.load %arg2[%c0_27, %c0_28] : memref<32x128xf32, #tpu.memory_space<vmem>>, vector<32x128xf32>
    %cst_29 = arith.constant dense<0.000000e+00> : vector<8x128xf32>
    %85 = tpu.matmul %81, %84, %cst_29 {dimension_numbers = #tpu.dot_dimension_numbers<[1], [0], [0], [1], [0, 0, 1, 1], [], []>} : vector<8x32xf32>, vector<32x128xf32>, vector<8x128xf32> -> vector<8x128xf32>
    %86 = arith.addf %83, %85 : vector<8x128xf32>
    %87 = arith.negf %86 : vector<8x128xf32>
    %88 = math.exp %87 : vector<8x128xf32>
    %cst_30 = arith.constant 1.000000e+00 : f32
    %89 = vector.broadcast %cst_30 : f32 to vector<8x128xf32>
    %90 = arith.addf %89, %88 : vector<8x128xf32>
    %91 = arith.divf %89, %90 : vector<8x128xf32>
    %92 = vector.extract_strided_slice %91 {offsets = [0, 0], sizes = [8, 32], strides = [1, 1]} : vector<8x128xf32> to vector<8x32xf32>
    %93 = vector.extract_strided_slice %91 {offsets = [0, 32], sizes = [8, 32], strides = [1, 1]} : vector<8x128xf32> to vector<8x32xf32>
    %94 = vector.extract_strided_slice %91 {offsets = [0, 96], sizes = [8, 32], strides = [1, 1]} : vector<8x128xf32> to vector<8x32xf32>
    %95 = vector.extract_strided_slice %86 {offsets = [0, 64], sizes = [8, 32], strides = [1, 1]} : vector<8x128xf32> to vector<8x32xf32>
    %96 = math.tanh %95 : vector<8x32xf32>
    %97 = arith.mulf %93, %79 : vector<8x32xf32>
    %98 = arith.mulf %92, %96 : vector<8x32xf32>
    %99 = arith.addf %97, %98 : vector<8x32xf32>
    %100 = math.tanh %99 : vector<8x32xf32>
    %101 = arith.mulf %94, %100 : vector<8x32xf32>
    %c5 = arith.constant 5 : index
    %c0_31 = arith.constant 0 : index
    %c0_32 = arith.constant 0 : index
    %102 = vector.load %arg1[%c5, %c0_31, %c0_32] : memref<8x8x128xf32, #tpu.memory_space<vmem>>, vector<1x8x128xf32>
    %103 = vector.shape_cast %102 : vector<1x8x128xf32> to vector<8x128xf32>
    %c0_33 = arith.constant 0 : index
    %c0_34 = arith.constant 0 : index
    %104 = vector.load %arg2[%c0_33, %c0_34] : memref<32x128xf32, #tpu.memory_space<vmem>>, vector<32x128xf32>
    %cst_35 = arith.constant dense<0.000000e+00> : vector<8x128xf32>
    %105 = tpu.matmul %101, %104, %cst_35 {dimension_numbers = #tpu.dot_dimension_numbers<[1], [0], [0], [1], [0, 0, 1, 1], [], []>} : vector<8x32xf32>, vector<32x128xf32>, vector<8x128xf32> -> vector<8x128xf32>
    %106 = arith.addf %103, %105 : vector<8x128xf32>
    %107 = arith.negf %106 : vector<8x128xf32>
    %108 = math.exp %107 : vector<8x128xf32>
    %cst_36 = arith.constant 1.000000e+00 : f32
    %109 = vector.broadcast %cst_36 : f32 to vector<8x128xf32>
    %110 = arith.addf %109, %108 : vector<8x128xf32>
    %111 = arith.divf %109, %110 : vector<8x128xf32>
    %112 = vector.extract_strided_slice %111 {offsets = [0, 0], sizes = [8, 32], strides = [1, 1]} : vector<8x128xf32> to vector<8x32xf32>
    %113 = vector.extract_strided_slice %111 {offsets = [0, 32], sizes = [8, 32], strides = [1, 1]} : vector<8x128xf32> to vector<8x32xf32>
    %114 = vector.extract_strided_slice %111 {offsets = [0, 96], sizes = [8, 32], strides = [1, 1]} : vector<8x128xf32> to vector<8x32xf32>
    %115 = vector.extract_strided_slice %106 {offsets = [0, 64], sizes = [8, 32], strides = [1, 1]} : vector<8x128xf32> to vector<8x32xf32>
    %116 = math.tanh %115 : vector<8x32xf32>
    %117 = arith.mulf %113, %99 : vector<8x32xf32>
    %118 = arith.mulf %112, %116 : vector<8x32xf32>
    %119 = arith.addf %117, %118 : vector<8x32xf32>
    %120 = math.tanh %119 : vector<8x32xf32>
    %121 = arith.mulf %114, %120 : vector<8x32xf32>
    %c6 = arith.constant 6 : index
    %c0_37 = arith.constant 0 : index
    %c0_38 = arith.constant 0 : index
    %122 = vector.load %arg1[%c6, %c0_37, %c0_38] : memref<8x8x128xf32, #tpu.memory_space<vmem>>, vector<1x8x128xf32>
    %123 = vector.shape_cast %122 : vector<1x8x128xf32> to vector<8x128xf32>
    %c0_39 = arith.constant 0 : index
    %c0_40 = arith.constant 0 : index
    %124 = vector.load %arg2[%c0_39, %c0_40] : memref<32x128xf32, #tpu.memory_space<vmem>>, vector<32x128xf32>
    %cst_41 = arith.constant dense<0.000000e+00> : vector<8x128xf32>
    %125 = tpu.matmul %121, %124, %cst_41 {dimension_numbers = #tpu.dot_dimension_numbers<[1], [0], [0], [1], [0, 0, 1, 1], [], []>} : vector<8x32xf32>, vector<32x128xf32>, vector<8x128xf32> -> vector<8x128xf32>
    %126 = arith.addf %123, %125 : vector<8x128xf32>
    %127 = arith.negf %126 : vector<8x128xf32>
    %128 = math.exp %127 : vector<8x128xf32>
    %cst_42 = arith.constant 1.000000e+00 : f32
    %129 = vector.broadcast %cst_42 : f32 to vector<8x128xf32>
    %130 = arith.addf %129, %128 : vector<8x128xf32>
    %131 = arith.divf %129, %130 : vector<8x128xf32>
    %132 = vector.extract_strided_slice %131 {offsets = [0, 0], sizes = [8, 32], strides = [1, 1]} : vector<8x128xf32> to vector<8x32xf32>
    %133 = vector.extract_strided_slice %131 {offsets = [0, 32], sizes = [8, 32], strides = [1, 1]} : vector<8x128xf32> to vector<8x32xf32>
    %134 = vector.extract_strided_slice %131 {offsets = [0, 96], sizes = [8, 32], strides = [1, 1]} : vector<8x128xf32> to vector<8x32xf32>
    %135 = vector.extract_strided_slice %126 {offsets = [0, 64], sizes = [8, 32], strides = [1, 1]} : vector<8x128xf32> to vector<8x32xf32>
    %136 = math.tanh %135 : vector<8x32xf32>
    %137 = arith.mulf %133, %119 : vector<8x32xf32>
    %138 = arith.mulf %132, %136 : vector<8x32xf32>
    %139 = arith.addf %137, %138 : vector<8x32xf32>
    %140 = math.tanh %139 : vector<8x32xf32>
    %141 = arith.mulf %134, %140 : vector<8x32xf32>
    %c7 = arith.constant 7 : index
    %c0_43 = arith.constant 0 : index
    %c0_44 = arith.constant 0 : index
    %142 = vector.load %arg1[%c7, %c0_43, %c0_44] : memref<8x8x128xf32, #tpu.memory_space<vmem>>, vector<1x8x128xf32>
    %143 = vector.shape_cast %142 : vector<1x8x128xf32> to vector<8x128xf32>
    %c0_45 = arith.constant 0 : index
    %c0_46 = arith.constant 0 : index
    %144 = vector.load %arg2[%c0_45, %c0_46] : memref<32x128xf32, #tpu.memory_space<vmem>>, vector<32x128xf32>
    %cst_47 = arith.constant dense<0.000000e+00> : vector<8x128xf32>
    %145 = tpu.matmul %141, %144, %cst_47 {dimension_numbers = #tpu.dot_dimension_numbers<[1], [0], [0], [1], [0, 0, 1, 1], [], []>} : vector<8x32xf32>, vector<32x128xf32>, vector<8x128xf32> -> vector<8x128xf32>
    %146 = arith.addf %143, %145 : vector<8x128xf32>
    %147 = arith.negf %146 : vector<8x128xf32>
    %148 = math.exp %147 : vector<8x128xf32>
    %cst_48 = arith.constant 1.000000e+00 : f32
    %149 = vector.broadcast %cst_48 : f32 to vector<8x128xf32>
    %150 = arith.addf %149, %148 : vector<8x128xf32>
    %151 = arith.divf %149, %150 : vector<8x128xf32>
    %152 = vector.extract_strided_slice %151 {offsets = [0, 0], sizes = [8, 32], strides = [1, 1]} : vector<8x128xf32> to vector<8x32xf32>
    %153 = vector.extract_strided_slice %151 {offsets = [0, 32], sizes = [8, 32], strides = [1, 1]} : vector<8x128xf32> to vector<8x32xf32>
    %154 = vector.extract_strided_slice %151 {offsets = [0, 96], sizes = [8, 32], strides = [1, 1]} : vector<8x128xf32> to vector<8x32xf32>
    %155 = vector.extract_strided_slice %146 {offsets = [0, 64], sizes = [8, 32], strides = [1, 1]} : vector<8x128xf32> to vector<8x32xf32>
    %156 = math.tanh %155 : vector<8x32xf32>
    %157 = arith.mulf %153, %139 : vector<8x32xf32>
    %158 = arith.mulf %152, %156 : vector<8x32xf32>
    %159 = arith.addf %157, %158 : vector<8x32xf32>
    %160 = math.tanh %159 : vector<8x32xf32>
    %161 = arith.mulf %154, %160 : vector<8x32xf32>
    %162 = tpu.concatenate %21, %41, %61, %81, %101, %121, %141, %161 in 0 : vector<8x32xf32>, vector<8x32xf32>, vector<8x32xf32>, vector<8x32xf32>, vector<8x32xf32>, vector<8x32xf32>, vector<8x32xf32>, vector<8x32xf32> -> vector<64x32xf32>
    %163 = tpu.transpose %162, [1, 0] : vector<64x32xf32> -> vector<32x64xf32>
    %c0_49 = arith.constant 0 : index
    %c0_50 = arith.constant 0 : index
    %164 = vector.load %arg3[%c0_49, %c0_50] : memref<8x64xf32, #tpu.memory_space<vmem>>, vector<8x64xf32>
    %c0_51 = arith.constant 0 : index
    %c0_52 = arith.constant 0 : index
    %165 = vector.load %arg7[%c0_51, %c0_52] : memref<1x128xf32, #tpu.memory_space<vmem>>, vector<1x128xf32>
    %166 = vector.shape_cast %165 : vector<1x128xf32> to vector<1x128xf32>
    %167 = vector.broadcast %166 : vector<1x128xf32> to vector<8x128xf32>
    %c0_53 = arith.constant 0 : index
    %c0_54 = arith.constant 0 : index
    %168 = vector.load %arg9[%c0_53, %c0_54] : memref<1x128xf32, #tpu.memory_space<vmem>>, vector<1x128xf32>
    %169 = vector.shape_cast %168 : vector<1x128xf32> to vector<1x128xf32>
    %170 = vector.broadcast %169 : vector<1x128xf32> to vector<8x128xf32>
    %171 = tpu.iota {dimensions = array<i32: 1>} : vector<8x128xi32>
    %cst_55 = arith.constant 0.000000e+00 : f32
    %172 = vector.broadcast %cst_55 : f32 to vector<8x128xf32>
    %c0_56 = arith.constant 0 : index
    %c0_57 = arith.constant 0 : index
    %c0_58 = arith.constant 0 : index
    %173 = vector.load %arg10[%c0_56, %c0_57, %c0_58] : memref<8x8x128xf32, #tpu.memory_space<vmem>>, vector<1x8x128xf32>
    %174 = vector.shape_cast %173 : vector<1x8x128xf32> to vector<8x128xf32>
    %175 = vector.shape_cast %172 : vector<8x128xf32> to vector<1x8x128xf32>
    tpu.vector_store %arg10[%c0_56, %c0_57, %c0_58], %175 {strides = array<i32>} : memref<8x8x128xf32, #tpu.memory_space<vmem>>, vector<1x8x128xf32>,
    %c0_59 = arith.constant 0 : index
    %c0_60 = arith.constant 0 : index
    %c0_61 = arith.constant 0 : index
    %176 = vector.load %arg4[%c0_59, %c0_60, %c0_61] : memref<8x8x128xf32, #tpu.memory_space<vmem>>, vector<1x8x128xf32>
    %177 = vector.shape_cast %176 : vector<1x8x128xf32> to vector<8x128xf32>
    %cst_62 = arith.constant dense<0.000000e+00> : vector<8x64xf32>
    %178 = tpu.matmul %161, %163, %cst_62 {dimension_numbers = #tpu.dot_dimension_numbers<[1], [0], [0], [1], [0, 0, 1, 1], [], []>} : vector<8x32xf32>, vector<32x64xf32>, vector<8x64xf32> -> vector<8x64xf32>
    %179 = arith.addf %178, %164 : vector<8x64xf32>
    %cst_63 = arith.constant dense<0xFF800000> : vector<8xf32>
    %180 = vector.multi_reduction <maximumf>, %179, %cst_63 [1] : vector<8x64xf32> to vector<8xf32>
    %181 = vector.shape_cast %180 : vector<8xf32> to vector<8x1xf32>
    %182 = vector.broadcast %181 : vector<8x1xf32> to vector<8x64xf32>
    %183 = arith.subf %179, %182 : vector<8x64xf32>
    %184 = math.exp %183 : vector<8x64xf32>
    %cst_64 = arith.constant dense<0.000000e+00> : vector<8xf32>
    %185 = vector.multi_reduction <add>, %184, %cst_64 [1] : vector<8x64xf32> to vector<8xf32>
    %186 = vector.shape_cast %185 : vector<8xf32> to vector<8x1xf32>
    %187 = tpu.reciprocal %186 {approx = true} : vector<8x1xf32> -> vector<8x1xf32>
    %188 = vector.broadcast %187 : vector<8x1xf32> to vector<8x64xf32>
    %189 = arith.mulf %184, %188 : vector<8x64xf32>
    %cst_65 = arith.constant dense<0.000000e+00> : vector<8x32xf32>
    %190 = tpu.matmul %189, %162, %cst_65 {dimension_numbers = #tpu.dot_dimension_numbers<[1], [0], [0], [1], [0, 0, 1, 1], [], []>} : vector<8x64xf32>, vector<64x32xf32>, vector<8x32xf32> -> vector<8x32xf32>
    %c0_66 = arith.constant 0 : index
    %c0_67 = arith.constant 0 : index
    %191 = vector.load %arg5[%c0_66, %c0_67] : memref<128x16xf32, #tpu.memory_space<vmem>>, vector<128x16xf32>
    %cst_68 = arith.constant dense<0.000000e+00> : vector<8x16xf32>
    %192 = tpu.matmul %177, %191, %cst_68 {dimension_numbers = #tpu.dot_dimension_numbers<[1], [0], [0], [1], [0, 0, 1, 1], [], []>} : vector<8x128xf32>, vector<128x16xf32>, vector<8x16xf32> -> vector<8x16xf32>
    %193 = tpu.concatenate %192, %190 in 1 : vector<8x16xf32>, vector<8x32xf32> -> vector<8x48xf32>
    %194 = tpu.concatenate %193, %161 in 1 : vector<8x48xf32>, vector<8x32xf32> -> vector<8x80xf32>
    %c0_69 = arith.constant 0 : index
    %c0_70 = arith.constant 0 : index
    %195 = vector.load %arg6[%c0_69, %c0_70] : memref<80x128xf32, #tpu.memory_space<vmem>>, vector<80x128xf32>
    %cst_71 = arith.constant dense<0.000000e+00> : vector<8x128xf32>
    %196 = tpu.matmul %194, %195, %cst_71 {dimension_numbers = #tpu.dot_dimension_numbers<[1], [0], [0], [1], [0, 0, 1, 1], [], []>} : vector<8x80xf32>, vector<80x128xf32>, vector<8x128xf32> -> vector<8x128xf32>
    %197 = arith.addf %196, %167 : vector<8x128xf32>
    %198 = arith.negf %197 : vector<8x128xf32>
    %199 = math.exp %198 : vector<8x128xf32>
    %cst_72 = arith.constant 1.000000e+00 : f32
    %200 = vector.broadcast %cst_72 : f32 to vector<8x128xf32>
    %201 = arith.addf %200, %199 : vector<8x128xf32>
    %202 = arith.divf %200, %201 : vector<8x128xf32>
    %203 = vector.extract_strided_slice %202 {offsets = [0, 0], sizes = [8, 32], strides = [1, 1]} : vector<8x128xf32> to vector<8x32xf32>
    %204 = vector.extract_strided_slice %202 {offsets = [0, 32], sizes = [8, 32], strides = [1, 1]} : vector<8x128xf32> to vector<8x32xf32>
    %205 = vector.extract_strided_slice %202 {offsets = [0, 96], sizes = [8, 32], strides = [1, 1]} : vector<8x128xf32> to vector<8x32xf32>
    %206 = vector.extract_strided_slice %197 {offsets = [0, 64], sizes = [8, 32], strides = [1, 1]} : vector<8x128xf32> to vector<8x32xf32>
    %207 = math.tanh %206 : vector<8x32xf32>
    %208 = arith.mulf %204, %159 : vector<8x32xf32>
    %209 = arith.mulf %203, %207 : vector<8x32xf32>
    %210 = arith.addf %208, %209 : vector<8x32xf32>
    %211 = math.tanh %210 : vector<8x32xf32>
    %212 = arith.mulf %205, %211 : vector<8x32xf32>
    %213 = tpu.concatenate %193, %212 in 1 : vector<8x48xf32>, vector<8x32xf32> -> vector<8x80xf32>
    %c0_73 = arith.constant 0 : index
    %c0_74 = arith.constant 0 : index
    %214 = vector.load %arg8[%c0_73, %c0_74] : memref<80x128xf32, #tpu.memory_space<vmem>>, vector<80x128xf32>
    %cst_75 = arith.constant dense<0.000000e+00> : vector<8x128xf32>
    %215 = tpu.matmul %213, %214, %cst_75 {dimension_numbers = #tpu.dot_dimension_numbers<[1], [0], [0], [1], [0, 0, 1, 1], [], []>} : vector<8x80xf32>, vector<80x128xf32>, vector<8x128xf32> -> vector<8x128xf32>
    %216 = arith.addf %215, %170 : vector<8x128xf32>
    %c1_76 = arith.constant 1 : index
    %c0_77 = arith.constant 0 : index
    %c0_78 = arith.constant 0 : index
    %217 = vector.load %arg10[%c1_76, %c0_77, %c0_78] : memref<8x8x128xf32, #tpu.memory_space<vmem>>, vector<1x8x128xf32>
    %218 = vector.shape_cast %217 : vector<1x8x128xf32> to vector<8x128xf32>
    %219 = vector.shape_cast %216 : vector<8x128xf32> to vector<1x8x128xf32>
    tpu.vector_store %arg10[%c1_76, %c0_77, %c0_78], %219 {strides = array<i32>} : memref<8x8x128xf32, #tpu.memory_space<vmem>>, vector<1x8x128xf32>,
    %c1_79 = arith.constant 1 : index
    %c0_80 = arith.constant 0 : index
    %c0_81 = arith.constant 0 : index
    %220 = vector.load %arg4[%c1_79, %c0_80, %c0_81] : memref<8x8x128xf32, #tpu.memory_space<vmem>>, vector<1x8x128xf32>
    %221 = vector.shape_cast %220 : vector<1x8x128xf32> to vector<8x128xf32>
    %c1_82 = arith.constant 1 : index
    %222 = memref.load %arg0[%c1_82] : memref<8xi32, #tpu.memory_space<smem>>
    %c1_i32 = arith.constant 1 : i32
    %223 = arith.cmpi eq, %222, %c1_i32 : i32
    %224 = arith.extui %223 : i1 to i32
    %c0_i32 = arith.constant 0 : i32
    %225 = arith.cmpi ne, %224, %c0_i32 : i32
    %226 = scf.if %225 -> (vector<8x128xf32>) {
      scf.yield %221 : vector<8x128xf32>
    } else {
      %cst_215 = arith.constant dense<0xFF800000> : vector<8xf32>
      %514 = vector.multi_reduction <maximumf>, %216, %cst_215 [1] : vector<8x128xf32> to vector<8xf32>
      %515 = vector.shape_cast %514 : vector<8xf32> to vector<8x1xf32>
      %516 = vector.broadcast %515 : vector<8x1xf32> to vector<8x128xf32>
      %517 = arith.cmpf oeq, %216, %516 : vector<8x128xf32>
      %c128_i32 = arith.constant 128 : i32
      %518 = vector.broadcast %c128_i32 : i32 to vector<8x128xi32>
      %519 = arith.select %517, %171, %518 : vector<8x128xi1>, vector<8x128xi32>
      %cst_216 = arith.constant dense<2147483647> : vector<8xi32>
      %520 = vector.multi_reduction <minsi>, %519, %cst_216 [1] : vector<8x128xi32> to vector<8xi32>
      %521 = vector.shape_cast %520 : vector<8xi32> to vector<8x1xi32>
      %522 = vector.broadcast %521 : vector<8x1xi32> to vector<8x128xi32>
      %523 = arith.cmpi eq, %171, %522 : vector<8x128xi32>
      %524 = arith.extui %523 : vector<8x128xi1> to vector<8x128xi32>
      %525 = arith.sitofp %524 : vector<8x128xi32> to vector<8x128xf32>
      scf.yield %525 : vector<8x128xf32>
    }
    %cst_83 = arith.constant dense<0.000000e+00> : vector<8x64xf32>
    %227 = tpu.matmul %212, %163, %cst_83 {dimension_numbers = #tpu.dot_dimension_numbers<[1], [0], [0], [1], [0, 0, 1, 1], [], []>} : vector<8x32xf32>, vector<32x64xf32>, vector<8x64xf32> -> vector<8x64xf32>
    %228 = arith.addf %227, %164 : vector<8x64xf32>
    %cst_84 = arith.constant dense<0xFF800000> : vector<8xf32>
    %229 = vector.multi_reduction <maximumf>, %228, %cst_84 [1] : vector<8x64xf32> to vector<8xf32>
    %230 = vector.shape_cast %229 : vector<8xf32> to vector<8x1xf32>
    %231 = vector.broadcast %230 : vector<8x1xf32> to vector<8x64xf32>
    %232 = arith.subf %228, %231 : vector<8x64xf32>
    %233 = math.exp %232 : vector<8x64xf32>
    %cst_85 = arith.constant dense<0.000000e+00> : vector<8xf32>
    %234 = vector.multi_reduction <add>, %233, %cst_85 [1] : vector<8x64xf32> to vector<8xf32>
    %235 = vector.shape_cast %234 : vector<8xf32> to vector<8x1xf32>
    %236 = tpu.reciprocal %235 {approx = true} : vector<8x1xf32> -> vector<8x1xf32>
    %237 = vector.broadcast %236 : vector<8x1xf32> to vector<8x64xf32>
    %238 = arith.mulf %233, %237 : vector<8x64xf32>
    %cst_86 = arith.constant dense<0.000000e+00> : vector<8x32xf32>
    %239 = tpu.matmul %238, %162, %cst_86 {dimension_numbers = #tpu.dot_dimension_numbers<[1], [0], [0], [1], [0, 0, 1, 1], [], []>} : vector<8x64xf32>, vector<64x32xf32>, vector<8x32xf32> -> vector<8x32xf32>
    %c0_87 = arith.constant 0 : index
    %c0_88 = arith.constant 0 : index
    %240 = vector.load %arg5[%c0_87, %c0_88] : memref<128x16xf32, #tpu.memory_space<vmem>>, vector<128x16xf32>
    %cst_89 = arith.constant dense<0.000000e+00> : vector<8x16xf32>
    %241 = tpu.matmul %226, %240, %cst_89 {dimension_numbers = #tpu.dot_dimension_numbers<[1], [0], [0], [1], [0, 0, 1, 1], [], []>} : vector<8x128xf32>, vector<128x16xf32>, vector<8x16xf32> -> vector<8x16xf32>
    %242 = tpu.concatenate %241, %239 in 1 : vector<8x16xf32>, vector<8x32xf32> -> vector<8x48xf32>
    %243 = tpu.concatenate %242, %212 in 1 : vector<8x48xf32>, vector<8x32xf32> -> vector<8x80xf32>
    %c0_90 = arith.constant 0 : index
    %c0_91 = arith.constant 0 : index
    %244 = vector.load %arg6[%c0_90, %c0_91] : memref<80x128xf32, #tpu.memory_space<vmem>>, vector<80x128xf32>
    %cst_92 = arith.constant dense<0.000000e+00> : vector<8x128xf32>
    %245 = tpu.matmul %243, %244, %cst_92 {dimension_numbers = #tpu.dot_dimension_numbers<[1], [0], [0], [1], [0, 0, 1, 1], [], []>} : vector<8x80xf32>, vector<80x128xf32>, vector<8x128xf32> -> vector<8x128xf32>
    %246 = arith.addf %245, %167 : vector<8x128xf32>
    %247 = arith.negf %246 : vector<8x128xf32>
    %248 = math.exp %247 : vector<8x128xf32>
    %cst_93 = arith.constant 1.000000e+00 : f32
    %249 = vector.broadcast %cst_93 : f32 to vector<8x128xf32>
    %250 = arith.addf %249, %248 : vector<8x128xf32>
    %251 = arith.divf %249, %250 : vector<8x128xf32>
    %252 = vector.extract_strided_slice %251 {offsets = [0, 0], sizes = [8, 32], strides = [1, 1]} : vector<8x128xf32> to vector<8x32xf32>
    %253 = vector.extract_strided_slice %251 {offsets = [0, 32], sizes = [8, 32], strides = [1, 1]} : vector<8x128xf32> to vector<8x32xf32>
    %254 = vector.extract_strided_slice %251 {offsets = [0, 96], sizes = [8, 32], strides = [1, 1]} : vector<8x128xf32> to vector<8x32xf32>
    %255 = vector.extract_strided_slice %246 {offsets = [0, 64], sizes = [8, 32], strides = [1, 1]} : vector<8x128xf32> to vector<8x32xf32>
    %256 = math.tanh %255 : vector<8x32xf32>
    %257 = arith.mulf %253, %210 : vector<8x32xf32>
    %258 = arith.mulf %252, %256 : vector<8x32xf32>
    %259 = arith.addf %257, %258 : vector<8x32xf32>
    %260 = math.tanh %259 : vector<8x32xf32>
    %261 = arith.mulf %254, %260 : vector<8x32xf32>
    %262 = tpu.concatenate %242, %261 in 1 : vector<8x48xf32>, vector<8x32xf32> -> vector<8x80xf32>
    %c0_94 = arith.constant 0 : index
    %c0_95 = arith.constant 0 : index
    %263 = vector.load %arg8[%c0_94, %c0_95] : memref<80x128xf32, #tpu.memory_space<vmem>>, vector<80x128xf32>
    %cst_96 = arith.constant dense<0.000000e+00> : vector<8x128xf32>
    %264 = tpu.matmul %262, %263, %cst_96 {dimension_numbers = #tpu.dot_dimension_numbers<[1], [0], [0], [1], [0, 0, 1, 1], [], []>} : vector<8x80xf32>, vector<80x128xf32>, vector<8x128xf32> -> vector<8x128xf32>
    %265 = arith.addf %264, %170 : vector<8x128xf32>
    %c2_97 = arith.constant 2 : index
    %c0_98 = arith.constant 0 : index
    %c0_99 = arith.constant 0 : index
    %266 = vector.load %arg10[%c2_97, %c0_98, %c0_99] : memref<8x8x128xf32, #tpu.memory_space<vmem>>, vector<1x8x128xf32>
    %267 = vector.shape_cast %266 : vector<1x8x128xf32> to vector<8x128xf32>
    %268 = vector.shape_cast %265 : vector<8x128xf32> to vector<1x8x128xf32>
    tpu.vector_store %arg10[%c2_97, %c0_98, %c0_99], %268 {strides = array<i32>} : memref<8x8x128xf32, #tpu.memory_space<vmem>>, vector<1x8x128xf32>,
    %c2_100 = arith.constant 2 : index
    %c0_101 = arith.constant 0 : index
    %c0_102 = arith.constant 0 : index
    %269 = vector.load %arg4[%c2_100, %c0_101, %c0_102] : memref<8x8x128xf32, #tpu.memory_space<vmem>>, vector<1x8x128xf32>
    %270 = vector.shape_cast %269 : vector<1x8x128xf32> to vector<8x128xf32>
    %c2_103 = arith.constant 2 : index
    %271 = memref.load %arg0[%c2_103] : memref<8xi32, #tpu.memory_space<smem>>
    %c1_i32_104 = arith.constant 1 : i32
    %272 = arith.cmpi eq, %271, %c1_i32_104 : i32
    %273 = arith.extui %272 : i1 to i32
    %c0_i32_105 = arith.constant 0 : i32
    %274 = arith.cmpi ne, %273, %c0_i32_105 : i32
    %275 = scf.if %274 -> (vector<8x128xf32>) {
      scf.yield %270 : vector<8x128xf32>
    } else {
      %cst_215 = arith.constant dense<0xFF800000> : vector<8xf32>
      %514 = vector.multi_reduction <maximumf>, %265, %cst_215 [1] : vector<8x128xf32> to vector<8xf32>
      %515 = vector.shape_cast %514 : vector<8xf32> to vector<8x1xf32>
      %516 = vector.broadcast %515 : vector<8x1xf32> to vector<8x128xf32>
      %517 = arith.cmpf oeq, %265, %516 : vector<8x128xf32>
      %c128_i32 = arith.constant 128 : i32
      %518 = vector.broadcast %c128_i32 : i32 to vector<8x128xi32>
      %519 = arith.select %517, %171, %518 : vector<8x128xi1>, vector<8x128xi32>
      %cst_216 = arith.constant dense<2147483647> : vector<8xi32>
      %520 = vector.multi_reduction <minsi>, %519, %cst_216 [1] : vector<8x128xi32> to vector<8xi32>
      %521 = vector.shape_cast %520 : vector<8xi32> to vector<8x1xi32>
      %522 = vector.broadcast %521 : vector<8x1xi32> to vector<8x128xi32>
      %523 = arith.cmpi eq, %171, %522 : vector<8x128xi32>
      %524 = arith.extui %523 : vector<8x128xi1> to vector<8x128xi32>
      %525 = arith.sitofp %524 : vector<8x128xi32> to vector<8x128xf32>
      scf.yield %525 : vector<8x128xf32>
    }
    %cst_106 = arith.constant dense<0.000000e+00> : vector<8x64xf32>
    %276 = tpu.matmul %261, %163, %cst_106 {dimension_numbers = #tpu.dot_dimension_numbers<[1], [0], [0], [1], [0, 0, 1, 1], [], []>} : vector<8x32xf32>, vector<32x64xf32>, vector<8x64xf32> -> vector<8x64xf32>
    %277 = arith.addf %276, %164 : vector<8x64xf32>
    %cst_107 = arith.constant dense<0xFF800000> : vector<8xf32>
    %278 = vector.multi_reduction <maximumf>, %277, %cst_107 [1] : vector<8x64xf32> to vector<8xf32>
    %279 = vector.shape_cast %278 : vector<8xf32> to vector<8x1xf32>
    %280 = vector.broadcast %279 : vector<8x1xf32> to vector<8x64xf32>
    %281 = arith.subf %277, %280 : vector<8x64xf32>
    %282 = math.exp %281 : vector<8x64xf32>
    %cst_108 = arith.constant dense<0.000000e+00> : vector<8xf32>
    %283 = vector.multi_reduction <add>, %282, %cst_108 [1] : vector<8x64xf32> to vector<8xf32>
    %284 = vector.shape_cast %283 : vector<8xf32> to vector<8x1xf32>
    %285 = tpu.reciprocal %284 {approx = true} : vector<8x1xf32> -> vector<8x1xf32>
    %286 = vector.broadcast %285 : vector<8x1xf32> to vector<8x64xf32>
    %287 = arith.mulf %282, %286 : vector<8x64xf32>
    %cst_109 = arith.constant dense<0.000000e+00> : vector<8x32xf32>
    %288 = tpu.matmul %287, %162, %cst_109 {dimension_numbers = #tpu.dot_dimension_numbers<[1], [0], [0], [1], [0, 0, 1, 1], [], []>} : vector<8x64xf32>, vector<64x32xf32>, vector<8x32xf32> -> vector<8x32xf32>
    %c0_110 = arith.constant 0 : index
    %c0_111 = arith.constant 0 : index
    %289 = vector.load %arg5[%c0_110, %c0_111] : memref<128x16xf32, #tpu.memory_space<vmem>>, vector<128x16xf32>
    %cst_112 = arith.constant dense<0.000000e+00> : vector<8x16xf32>
    %290 = tpu.matmul %275, %289, %cst_112 {dimension_numbers = #tpu.dot_dimension_numbers<[1], [0], [0], [1], [0, 0, 1, 1], [], []>} : vector<8x128xf32>, vector<128x16xf32>, vector<8x16xf32> -> vector<8x16xf32>
    %291 = tpu.concatenate %290, %288 in 1 : vector<8x16xf32>, vector<8x32xf32> -> vector<8x48xf32>
    %292 = tpu.concatenate %291, %261 in 1 : vector<8x48xf32>, vector<8x32xf32> -> vector<8x80xf32>
    %c0_113 = arith.constant 0 : index
    %c0_114 = arith.constant 0 : index
    %293 = vector.load %arg6[%c0_113, %c0_114] : memref<80x128xf32, #tpu.memory_space<vmem>>, vector<80x128xf32>
    %cst_115 = arith.constant dense<0.000000e+00> : vector<8x128xf32>
    %294 = tpu.matmul %292, %293, %cst_115 {dimension_numbers = #tpu.dot_dimension_numbers<[1], [0], [0], [1], [0, 0, 1, 1], [], []>} : vector<8x80xf32>, vector<80x128xf32>, vector<8x128xf32> -> vector<8x128xf32>
    %295 = arith.addf %294, %167 : vector<8x128xf32>
    %296 = arith.negf %295 : vector<8x128xf32>
    %297 = math.exp %296 : vector<8x128xf32>
    %cst_116 = arith.constant 1.000000e+00 : f32
    %298 = vector.broadcast %cst_116 : f32 to vector<8x128xf32>
    %299 = arith.addf %298, %297 : vector<8x128xf32>
    %300 = arith.divf %298, %299 : vector<8x128xf32>
    %301 = vector.extract_strided_slice %300 {offsets = [0, 0], sizes = [8, 32], strides = [1, 1]} : vector<8x128xf32> to vector<8x32xf32>
    %302 = vector.extract_strided_slice %300 {offsets = [0, 32], sizes = [8, 32], strides = [1, 1]} : vector<8x128xf32> to vector<8x32xf32>
    %303 = vector.extract_strided_slice %300 {offsets = [0, 96], sizes = [8, 32], strides = [1, 1]} : vector<8x128xf32> to vector<8x32xf32>
    %304 = vector.extract_strided_slice %295 {offsets = [0, 64], sizes = [8, 32], strides = [1, 1]} : vector<8x128xf32> to vector<8x32xf32>
    %305 = math.tanh %304 : vector<8x32xf32>
    %306 = arith.mulf %302, %259 : vector<8x32xf32>
    %307 = arith.mulf %301, %305 : vector<8x32xf32>
    %308 = arith.addf %306, %307 : vector<8x32xf32>
    %309 = math.tanh %308 : vector<8x32xf32>
    %310 = arith.mulf %303, %309 : vector<8x32xf32>
    %311 = tpu.concatenate %291, %310 in 1 : vector<8x48xf32>, vector<8x32xf32> -> vector<8x80xf32>
    %c0_117 = arith.constant 0 : index
    %c0_118 = arith.constant 0 : index
    %312 = vector.load %arg8[%c0_117, %c0_118] : memref<80x128xf32, #tpu.memory_space<vmem>>, vector<80x128xf32>
    %cst_119 = arith.constant dense<0.000000e+00> : vector<8x128xf32>
    %313 = tpu.matmul %311, %312, %cst_119 {dimension_numbers = #tpu.dot_dimension_numbers<[1], [0], [0], [1], [0, 0, 1, 1], [], []>} : vector<8x80xf32>, vector<80x128xf32>, vector<8x128xf32> -> vector<8x128xf32>
    %314 = arith.addf %313, %170 : vector<8x128xf32>
    %c3_120 = arith.constant 3 : index
    %c0_121 = arith.constant 0 : index
    %c0_122 = arith.constant 0 : index
    %315 = vector.load %arg10[%c3_120, %c0_121, %c0_122] : memref<8x8x128xf32, #tpu.memory_space<vmem>>, vector<1x8x128xf32>
    %316 = vector.shape_cast %315 : vector<1x8x128xf32> to vector<8x128xf32>
    %317 = vector.shape_cast %314 : vector<8x128xf32> to vector<1x8x128xf32>
    tpu.vector_store %arg10[%c3_120, %c0_121, %c0_122], %317 {strides = array<i32>} : memref<8x8x128xf32, #tpu.memory_space<vmem>>, vector<1x8x128xf32>,
    %c3_123 = arith.constant 3 : index
    %c0_124 = arith.constant 0 : index
    %c0_125 = arith.constant 0 : index
    %318 = vector.load %arg4[%c3_123, %c0_124, %c0_125] : memref<8x8x128xf32, #tpu.memory_space<vmem>>, vector<1x8x128xf32>
    %319 = vector.shape_cast %318 : vector<1x8x128xf32> to vector<8x128xf32>
    %c3_126 = arith.constant 3 : index
    %320 = memref.load %arg0[%c3_126] : memref<8xi32, #tpu.memory_space<smem>>
    %c1_i32_127 = arith.constant 1 : i32
    %321 = arith.cmpi eq, %320, %c1_i32_127 : i32
    %322 = arith.extui %321 : i1 to i32
    %c0_i32_128 = arith.constant 0 : i32
    %323 = arith.cmpi ne, %322, %c0_i32_128 : i32
    %324 = scf.if %323 -> (vector<8x128xf32>) {
      scf.yield %319 : vector<8x128xf32>
    } else {
      %cst_215 = arith.constant dense<0xFF800000> : vector<8xf32>
      %514 = vector.multi_reduction <maximumf>, %314, %cst_215 [1] : vector<8x128xf32> to vector<8xf32>
      %515 = vector.shape_cast %514 : vector<8xf32> to vector<8x1xf32>
      %516 = vector.broadcast %515 : vector<8x1xf32> to vector<8x128xf32>
      %517 = arith.cmpf oeq, %314, %516 : vector<8x128xf32>
      %c128_i32 = arith.constant 128 : i32
      %518 = vector.broadcast %c128_i32 : i32 to vector<8x128xi32>
      %519 = arith.select %517, %171, %518 : vector<8x128xi1>, vector<8x128xi32>
      %cst_216 = arith.constant dense<2147483647> : vector<8xi32>
      %520 = vector.multi_reduction <minsi>, %519, %cst_216 [1] : vector<8x128xi32> to vector<8xi32>
      %521 = vector.shape_cast %520 : vector<8xi32> to vector<8x1xi32>
      %522 = vector.broadcast %521 : vector<8x1xi32> to vector<8x128xi32>
      %523 = arith.cmpi eq, %171, %522 : vector<8x128xi32>
      %524 = arith.extui %523 : vector<8x128xi1> to vector<8x128xi32>
      %525 = arith.sitofp %524 : vector<8x128xi32> to vector<8x128xf32>
      scf.yield %525 : vector<8x128xf32>
    }
    %cst_129 = arith.constant dense<0.000000e+00> : vector<8x64xf32>
    %325 = tpu.matmul %310, %163, %cst_129 {dimension_numbers = #tpu.dot_dimension_numbers<[1], [0], [0], [1], [0, 0, 1, 1], [], []>} : vector<8x32xf32>, vector<32x64xf32>, vector<8x64xf32> -> vector<8x64xf32>
    %326 = arith.addf %325, %164 : vector<8x64xf32>
    %cst_130 = arith.constant dense<0xFF800000> : vector<8xf32>
    %327 = vector.multi_reduction <maximumf>, %326, %cst_130 [1] : vector<8x64xf32> to vector<8xf32>
    %328 = vector.shape_cast %327 : vector<8xf32> to vector<8x1xf32>
    %329 = vector.broadcast %328 : vector<8x1xf32> to vector<8x64xf32>
    %330 = arith.subf %326, %329 : vector<8x64xf32>
    %331 = math.exp %330 : vector<8x64xf32>
    %cst_131 = arith.constant dense<0.000000e+00> : vector<8xf32>
    %332 = vector.multi_reduction <add>, %331, %cst_131 [1] : vector<8x64xf32> to vector<8xf32>
    %333 = vector.shape_cast %332 : vector<8xf32> to vector<8x1xf32>
    %334 = tpu.reciprocal %333 {approx = true} : vector<8x1xf32> -> vector<8x1xf32>
    %335 = vector.broadcast %334 : vector<8x1xf32> to vector<8x64xf32>
    %336 = arith.mulf %331, %335 : vector<8x64xf32>
    %cst_132 = arith.constant dense<0.000000e+00> : vector<8x32xf32>
    %337 = tpu.matmul %336, %162, %cst_132 {dimension_numbers = #tpu.dot_dimension_numbers<[1], [0], [0], [1], [0, 0, 1, 1], [], []>} : vector<8x64xf32>, vector<64x32xf32>, vector<8x32xf32> -> vector<8x32xf32>
    %c0_133 = arith.constant 0 : index
    %c0_134 = arith.constant 0 : index
    %338 = vector.load %arg5[%c0_133, %c0_134] : memref<128x16xf32, #tpu.memory_space<vmem>>, vector<128x16xf32>
    %cst_135 = arith.constant dense<0.000000e+00> : vector<8x16xf32>
    %339 = tpu.matmul %324, %338, %cst_135 {dimension_numbers = #tpu.dot_dimension_numbers<[1], [0], [0], [1], [0, 0, 1, 1], [], []>} : vector<8x128xf32>, vector<128x16xf32>, vector<8x16xf32> -> vector<8x16xf32>
    %340 = tpu.concatenate %339, %337 in 1 : vector<8x16xf32>, vector<8x32xf32> -> vector<8x48xf32>
    %341 = tpu.concatenate %340, %310 in 1 : vector<8x48xf32>, vector<8x32xf32> -> vector<8x80xf32>
    %c0_136 = arith.constant 0 : index
    %c0_137 = arith.constant 0 : index
    %342 = vector.load %arg6[%c0_136, %c0_137] : memref<80x128xf32, #tpu.memory_space<vmem>>, vector<80x128xf32>
    %cst_138 = arith.constant dense<0.000000e+00> : vector<8x128xf32>
    %343 = tpu.matmul %341, %342, %cst_138 {dimension_numbers = #tpu.dot_dimension_numbers<[1], [0], [0], [1], [0, 0, 1, 1], [], []>} : vector<8x80xf32>, vector<80x128xf32>, vector<8x128xf32> -> vector<8x128xf32>
    %344 = arith.addf %343, %167 : vector<8x128xf32>
    %345 = arith.negf %344 : vector<8x128xf32>
    %346 = math.exp %345 : vector<8x128xf32>
    %cst_139 = arith.constant 1.000000e+00 : f32
    %347 = vector.broadcast %cst_139 : f32 to vector<8x128xf32>
    %348 = arith.addf %347, %346 : vector<8x128xf32>
    %349 = arith.divf %347, %348 : vector<8x128xf32>
    %350 = vector.extract_strided_slice %349 {offsets = [0, 0], sizes = [8, 32], strides = [1, 1]} : vector<8x128xf32> to vector<8x32xf32>
    %351 = vector.extract_strided_slice %349 {offsets = [0, 32], sizes = [8, 32], strides = [1, 1]} : vector<8x128xf32> to vector<8x32xf32>
    %352 = vector.extract_strided_slice %349 {offsets = [0, 96], sizes = [8, 32], strides = [1, 1]} : vector<8x128xf32> to vector<8x32xf32>
    %353 = vector.extract_strided_slice %344 {offsets = [0, 64], sizes = [8, 32], strides = [1, 1]} : vector<8x128xf32> to vector<8x32xf32>
    %354 = math.tanh %353 : vector<8x32xf32>
    %355 = arith.mulf %351, %308 : vector<8x32xf32>
    %356 = arith.mulf %350, %354 : vector<8x32xf32>
    %357 = arith.addf %355, %356 : vector<8x32xf32>
    %358 = math.tanh %357 : vector<8x32xf32>
    %359 = arith.mulf %352, %358 : vector<8x32xf32>
    %360 = tpu.concatenate %340, %359 in 1 : vector<8x48xf32>, vector<8x32xf32> -> vector<8x80xf32>
    %c0_140 = arith.constant 0 : index
    %c0_141 = arith.constant 0 : index
    %361 = vector.load %arg8[%c0_140, %c0_141] : memref<80x128xf32, #tpu.memory_space<vmem>>, vector<80x128xf32>
    %cst_142 = arith.constant dense<0.000000e+00> : vector<8x128xf32>
    %362 = tpu.matmul %360, %361, %cst_142 {dimension_numbers = #tpu.dot_dimension_numbers<[1], [0], [0], [1], [0, 0, 1, 1], [], []>} : vector<8x80xf32>, vector<80x128xf32>, vector<8x128xf32> -> vector<8x128xf32>
    %363 = arith.addf %362, %170 : vector<8x128xf32>
    %c4_143 = arith.constant 4 : index
    %c0_144 = arith.constant 0 : index
    %c0_145 = arith.constant 0 : index
    %364 = vector.load %arg10[%c4_143, %c0_144, %c0_145] : memref<8x8x128xf32, #tpu.memory_space<vmem>>, vector<1x8x128xf32>
    %365 = vector.shape_cast %364 : vector<1x8x128xf32> to vector<8x128xf32>
    %366 = vector.shape_cast %363 : vector<8x128xf32> to vector<1x8x128xf32>
    tpu.vector_store %arg10[%c4_143, %c0_144, %c0_145], %366 {strides = array<i32>} : memref<8x8x128xf32, #tpu.memory_space<vmem>>, vector<1x8x128xf32>,
    %c4_146 = arith.constant 4 : index
    %c0_147 = arith.constant 0 : index
    %c0_148 = arith.constant 0 : index
    %367 = vector.load %arg4[%c4_146, %c0_147, %c0_148] : memref<8x8x128xf32, #tpu.memory_space<vmem>>, vector<1x8x128xf32>
    %368 = vector.shape_cast %367 : vector<1x8x128xf32> to vector<8x128xf32>
    %c4_149 = arith.constant 4 : index
    %369 = memref.load %arg0[%c4_149] : memref<8xi32, #tpu.memory_space<smem>>
    %c1_i32_150 = arith.constant 1 : i32
    %370 = arith.cmpi eq, %369, %c1_i32_150 : i32
    %371 = arith.extui %370 : i1 to i32
    %c0_i32_151 = arith.constant 0 : i32
    %372 = arith.cmpi ne, %371, %c0_i32_151 : i32
    %373 = scf.if %372 -> (vector<8x128xf32>) {
      scf.yield %368 : vector<8x128xf32>
    } else {
      %cst_215 = arith.constant dense<0xFF800000> : vector<8xf32>
      %514 = vector.multi_reduction <maximumf>, %363, %cst_215 [1] : vector<8x128xf32> to vector<8xf32>
      %515 = vector.shape_cast %514 : vector<8xf32> to vector<8x1xf32>
      %516 = vector.broadcast %515 : vector<8x1xf32> to vector<8x128xf32>
      %517 = arith.cmpf oeq, %363, %516 : vector<8x128xf32>
      %c128_i32 = arith.constant 128 : i32
      %518 = vector.broadcast %c128_i32 : i32 to vector<8x128xi32>
      %519 = arith.select %517, %171, %518 : vector<8x128xi1>, vector<8x128xi32>
      %cst_216 = arith.constant dense<2147483647> : vector<8xi32>
      %520 = vector.multi_reduction <minsi>, %519, %cst_216 [1] : vector<8x128xi32> to vector<8xi32>
      %521 = vector.shape_cast %520 : vector<8xi32> to vector<8x1xi32>
      %522 = vector.broadcast %521 : vector<8x1xi32> to vector<8x128xi32>
      %523 = arith.cmpi eq, %171, %522 : vector<8x128xi32>
      %524 = arith.extui %523 : vector<8x128xi1> to vector<8x128xi32>
      %525 = arith.sitofp %524 : vector<8x128xi32> to vector<8x128xf32>
      scf.yield %525 : vector<8x128xf32>
    }
    %cst_152 = arith.constant dense<0.000000e+00> : vector<8x64xf32>
    %374 = tpu.matmul %359, %163, %cst_152 {dimension_numbers = #tpu.dot_dimension_numbers<[1], [0], [0], [1], [0, 0, 1, 1], [], []>} : vector<8x32xf32>, vector<32x64xf32>, vector<8x64xf32> -> vector<8x64xf32>
    %375 = arith.addf %374, %164 : vector<8x64xf32>
    %cst_153 = arith.constant dense<0xFF800000> : vector<8xf32>
    %376 = vector.multi_reduction <maximumf>, %375, %cst_153 [1] : vector<8x64xf32> to vector<8xf32>
    %377 = vector.shape_cast %376 : vector<8xf32> to vector<8x1xf32>
    %378 = vector.broadcast %377 : vector<8x1xf32> to vector<8x64xf32>
    %379 = arith.subf %375, %378 : vector<8x64xf32>
    %380 = math.exp %379 : vector<8x64xf32>
    %cst_154 = arith.constant dense<0.000000e+00> : vector<8xf32>
    %381 = vector.multi_reduction <add>, %380, %cst_154 [1] : vector<8x64xf32> to vector<8xf32>
    %382 = vector.shape_cast %381 : vector<8xf32> to vector<8x1xf32>
    %383 = tpu.reciprocal %382 {approx = true} : vector<8x1xf32> -> vector<8x1xf32>
    %384 = vector.broadcast %383 : vector<8x1xf32> to vector<8x64xf32>
    %385 = arith.mulf %380, %384 : vector<8x64xf32>
    %cst_155 = arith.constant dense<0.000000e+00> : vector<8x32xf32>
    %386 = tpu.matmul %385, %162, %cst_155 {dimension_numbers = #tpu.dot_dimension_numbers<[1], [0], [0], [1], [0, 0, 1, 1], [], []>} : vector<8x64xf32>, vector<64x32xf32>, vector<8x32xf32> -> vector<8x32xf32>
    %c0_156 = arith.constant 0 : index
    %c0_157 = arith.constant 0 : index
    %387 = vector.load %arg5[%c0_156, %c0_157] : memref<128x16xf32, #tpu.memory_space<vmem>>, vector<128x16xf32>
    %cst_158 = arith.constant dense<0.000000e+00> : vector<8x16xf32>
    %388 = tpu.matmul %373, %387, %cst_158 {dimension_numbers = #tpu.dot_dimension_numbers<[1], [0], [0], [1], [0, 0, 1, 1], [], []>} : vector<8x128xf32>, vector<128x16xf32>, vector<8x16xf32> -> vector<8x16xf32>
    %389 = tpu.concatenate %388, %386 in 1 : vector<8x16xf32>, vector<8x32xf32> -> vector<8x48xf32>
    %390 = tpu.concatenate %389, %359 in 1 : vector<8x48xf32>, vector<8x32xf32> -> vector<8x80xf32>
    %c0_159 = arith.constant 0 : index
    %c0_160 = arith.constant 0 : index
    %391 = vector.load %arg6[%c0_159, %c0_160] : memref<80x128xf32, #tpu.memory_space<vmem>>, vector<80x128xf32>
    %cst_161 = arith.constant dense<0.000000e+00> : vector<8x128xf32>
    %392 = tpu.matmul %390, %391, %cst_161 {dimension_numbers = #tpu.dot_dimension_numbers<[1], [0], [0], [1], [0, 0, 1, 1], [], []>} : vector<8x80xf32>, vector<80x128xf32>, vector<8x128xf32> -> vector<8x128xf32>
    %393 = arith.addf %392, %167 : vector<8x128xf32>
    %394 = arith.negf %393 : vector<8x128xf32>
    %395 = math.exp %394 : vector<8x128xf32>
    %cst_162 = arith.constant 1.000000e+00 : f32
    %396 = vector.broadcast %cst_162 : f32 to vector<8x128xf32>
    %397 = arith.addf %396, %395 : vector<8x128xf32>
    %398 = arith.divf %396, %397 : vector<8x128xf32>
    %399 = vector.extract_strided_slice %398 {offsets = [0, 0], sizes = [8, 32], strides = [1, 1]} : vector<8x128xf32> to vector<8x32xf32>
    %400 = vector.extract_strided_slice %398 {offsets = [0, 32], sizes = [8, 32], strides = [1, 1]} : vector<8x128xf32> to vector<8x32xf32>
    %401 = vector.extract_strided_slice %398 {offsets = [0, 96], sizes = [8, 32], strides = [1, 1]} : vector<8x128xf32> to vector<8x32xf32>
    %402 = vector.extract_strided_slice %393 {offsets = [0, 64], sizes = [8, 32], strides = [1, 1]} : vector<8x128xf32> to vector<8x32xf32>
    %403 = math.tanh %402 : vector<8x32xf32>
    %404 = arith.mulf %400, %357 : vector<8x32xf32>
    %405 = arith.mulf %399, %403 : vector<8x32xf32>
    %406 = arith.addf %404, %405 : vector<8x32xf32>
    %407 = math.tanh %406 : vector<8x32xf32>
    %408 = arith.mulf %401, %407 : vector<8x32xf32>
    %409 = tpu.concatenate %389, %408 in 1 : vector<8x48xf32>, vector<8x32xf32> -> vector<8x80xf32>
    %c0_163 = arith.constant 0 : index
    %c0_164 = arith.constant 0 : index
    %410 = vector.load %arg8[%c0_163, %c0_164] : memref<80x128xf32, #tpu.memory_space<vmem>>, vector<80x128xf32>
    %cst_165 = arith.constant dense<0.000000e+00> : vector<8x128xf32>
    %411 = tpu.matmul %409, %410, %cst_165 {dimension_numbers = #tpu.dot_dimension_numbers<[1], [0], [0], [1], [0, 0, 1, 1], [], []>} : vector<8x80xf32>, vector<80x128xf32>, vector<8x128xf32> -> vector<8x128xf32>
    %412 = arith.addf %411, %170 : vector<8x128xf32>
    %c5_166 = arith.constant 5 : index
    %c0_167 = arith.constant 0 : index
    %c0_168 = arith.constant 0 : index
    %413 = vector.load %arg10[%c5_166, %c0_167, %c0_168] : memref<8x8x128xf32, #tpu.memory_space<vmem>>, vector<1x8x128xf32>
    %414 = vector.shape_cast %413 : vector<1x8x128xf32> to vector<8x128xf32>
    %415 = vector.shape_cast %412 : vector<8x128xf32> to vector<1x8x128xf32>
    tpu.vector_store %arg10[%c5_166, %c0_167, %c0_168], %415 {strides = array<i32>} : memref<8x8x128xf32, #tpu.memory_space<vmem>>, vector<1x8x128xf32>,
    %c5_169 = arith.constant 5 : index
    %c0_170 = arith.constant 0 : index
    %c0_171 = arith.constant 0 : index
    %416 = vector.load %arg4[%c5_169, %c0_170, %c0_171] : memref<8x8x128xf32, #tpu.memory_space<vmem>>, vector<1x8x128xf32>
    %417 = vector.shape_cast %416 : vector<1x8x128xf32> to vector<8x128xf32>
    %c5_172 = arith.constant 5 : index
    %418 = memref.load %arg0[%c5_172] : memref<8xi32, #tpu.memory_space<smem>>
    %c1_i32_173 = arith.constant 1 : i32
    %419 = arith.cmpi eq, %418, %c1_i32_173 : i32
    %420 = arith.extui %419 : i1 to i32
    %c0_i32_174 = arith.constant 0 : i32
    %421 = arith.cmpi ne, %420, %c0_i32_174 : i32
    %422 = scf.if %421 -> (vector<8x128xf32>) {
      scf.yield %417 : vector<8x128xf32>
    } else {
      %cst_215 = arith.constant dense<0xFF800000> : vector<8xf32>
      %514 = vector.multi_reduction <maximumf>, %412, %cst_215 [1] : vector<8x128xf32> to vector<8xf32>
      %515 = vector.shape_cast %514 : vector<8xf32> to vector<8x1xf32>
      %516 = vector.broadcast %515 : vector<8x1xf32> to vector<8x128xf32>
      %517 = arith.cmpf oeq, %412, %516 : vector<8x128xf32>
      %c128_i32 = arith.constant 128 : i32
      %518 = vector.broadcast %c128_i32 : i32 to vector<8x128xi32>
      %519 = arith.select %517, %171, %518 : vector<8x128xi1>, vector<8x128xi32>
      %cst_216 = arith.constant dense<2147483647> : vector<8xi32>
      %520 = vector.multi_reduction <minsi>, %519, %cst_216 [1] : vector<8x128xi32> to vector<8xi32>
      %521 = vector.shape_cast %520 : vector<8xi32> to vector<8x1xi32>
      %522 = vector.broadcast %521 : vector<8x1xi32> to vector<8x128xi32>
      %523 = arith.cmpi eq, %171, %522 : vector<8x128xi32>
      %524 = arith.extui %523 : vector<8x128xi1> to vector<8x128xi32>
      %525 = arith.sitofp %524 : vector<8x128xi32> to vector<8x128xf32>
      scf.yield %525 : vector<8x128xf32>
    }
    %cst_175 = arith.constant dense<0.000000e+00> : vector<8x64xf32>
    %423 = tpu.matmul %408, %163, %cst_175 {dimension_numbers = #tpu.dot_dimension_numbers<[1], [0], [0], [1], [0, 0, 1, 1], [], []>} : vector<8x32xf32>, vector<32x64xf32>, vector<8x64xf32> -> vector<8x64xf32>
    %424 = arith.addf %423, %164 : vector<8x64xf32>
    %cst_176 = arith.constant dense<0xFF800000> : vector<8xf32>
    %425 = vector.multi_reduction <maximumf>, %424, %cst_176 [1] : vector<8x64xf32> to vector<8xf32>
    %426 = vector.shape_cast %425 : vector<8xf32> to vector<8x1xf32>
    %427 = vector.broadcast %426 : vector<8x1xf32> to vector<8x64xf32>
    %428 = arith.subf %424, %427 : vector<8x64xf32>
    %429 = math.exp %428 : vector<8x64xf32>
    %cst_177 = arith.constant dense<0.000000e+00> : vector<8xf32>
    %430 = vector.multi_reduction <add>, %429, %cst_177 [1] : vector<8x64xf32> to vector<8xf32>
    %431 = vector.shape_cast %430 : vector<8xf32> to vector<8x1xf32>
    %432 = tpu.reciprocal %431 {approx = true} : vector<8x1xf32> -> vector<8x1xf32>
    %433 = vector.broadcast %432 : vector<8x1xf32> to vector<8x64xf32>
    %434 = arith.mulf %429, %433 : vector<8x64xf32>
    %cst_178 = arith.constant dense<0.000000e+00> : vector<8x32xf32>
    %435 = tpu.matmul %434, %162, %cst_178 {dimension_numbers = #tpu.dot_dimension_numbers<[1], [0], [0], [1], [0, 0, 1, 1], [], []>} : vector<8x64xf32>, vector<64x32xf32>, vector<8x32xf32> -> vector<8x32xf32>
    %c0_179 = arith.constant 0 : index
    %c0_180 = arith.constant 0 : index
    %436 = vector.load %arg5[%c0_179, %c0_180] : memref<128x16xf32, #tpu.memory_space<vmem>>, vector<128x16xf32>
    %cst_181 = arith.constant dense<0.000000e+00> : vector<8x16xf32>
    %437 = tpu.matmul %422, %436, %cst_181 {dimension_numbers = #tpu.dot_dimension_numbers<[1], [0], [0], [1], [0, 0, 1, 1], [], []>} : vector<8x128xf32>, vector<128x16xf32>, vector<8x16xf32> -> vector<8x16xf32>
    %438 = tpu.concatenate %437, %435 in 1 : vector<8x16xf32>, vector<8x32xf32> -> vector<8x48xf32>
    %439 = tpu.concatenate %438, %408 in 1 : vector<8x48xf32>, vector<8x32xf32> -> vector<8x80xf32>
    %c0_182 = arith.constant 0 : index
    %c0_183 = arith.constant 0 : index
    %440 = vector.load %arg6[%c0_182, %c0_183] : memref<80x128xf32, #tpu.memory_space<vmem>>, vector<80x128xf32>
    %cst_184 = arith.constant dense<0.000000e+00> : vector<8x128xf32>
    %441 = tpu.matmul %439, %440, %cst_184 {dimension_numbers = #tpu.dot_dimension_numbers<[1], [0], [0], [1], [0, 0, 1, 1], [], []>} : vector<8x80xf32>, vector<80x128xf32>, vector<8x128xf32> -> vector<8x128xf32>
    %442 = arith.addf %441, %167 : vector<8x128xf32>
    %443 = arith.negf %442 : vector<8x128xf32>
    %444 = math.exp %443 : vector<8x128xf32>
    %cst_185 = arith.constant 1.000000e+00 : f32
    %445 = vector.broadcast %cst_185 : f32 to vector<8x128xf32>
    %446 = arith.addf %445, %444 : vector<8x128xf32>
    %447 = arith.divf %445, %446 : vector<8x128xf32>
    %448 = vector.extract_strided_slice %447 {offsets = [0, 0], sizes = [8, 32], strides = [1, 1]} : vector<8x128xf32> to vector<8x32xf32>
    %449 = vector.extract_strided_slice %447 {offsets = [0, 32], sizes = [8, 32], strides = [1, 1]} : vector<8x128xf32> to vector<8x32xf32>
    %450 = vector.extract_strided_slice %447 {offsets = [0, 96], sizes = [8, 32], strides = [1, 1]} : vector<8x128xf32> to vector<8x32xf32>
    %451 = vector.extract_strided_slice %442 {offsets = [0, 64], sizes = [8, 32], strides = [1, 1]} : vector<8x128xf32> to vector<8x32xf32>
    %452 = math.tanh %451 : vector<8x32xf32>
    %453 = arith.mulf %449, %406 : vector<8x32xf32>
    %454 = arith.mulf %448, %452 : vector<8x32xf32>
    %455 = arith.addf %453, %454 : vector<8x32xf32>
    %456 = math.tanh %455 : vector<8x32xf32>
    %457 = arith.mulf %450, %456 : vector<8x32xf32>
    %458 = tpu.concatenate %438, %457 in 1 : vector<8x48xf32>, vector<8x32xf32> -> vector<8x80xf32>
    %c0_186 = arith.constant 0 : index
    %c0_187 = arith.constant 0 : index
    %459 = vector.load %arg8[%c0_186, %c0_187] : memref<80x128xf32, #tpu.memory_space<vmem>>, vector<80x128xf32>
    %cst_188 = arith.constant dense<0.000000e+00> : vector<8x128xf32>
    %460 = tpu.matmul %458, %459, %cst_188 {dimension_numbers = #tpu.dot_dimension_numbers<[1], [0], [0], [1], [0, 0, 1, 1], [], []>} : vector<8x80xf32>, vector<80x128xf32>, vector<8x128xf32> -> vector<8x128xf32>
    %461 = arith.addf %460, %170 : vector<8x128xf32>
    %c6_189 = arith.constant 6 : index
    %c0_190 = arith.constant 0 : index
    %c0_191 = arith.constant 0 : index
    %462 = vector.load %arg10[%c6_189, %c0_190, %c0_191] : memref<8x8x128xf32, #tpu.memory_space<vmem>>, vector<1x8x128xf32>
    %463 = vector.shape_cast %462 : vector<1x8x128xf32> to vector<8x128xf32>
    %464 = vector.shape_cast %461 : vector<8x128xf32> to vector<1x8x128xf32>
    tpu.vector_store %arg10[%c6_189, %c0_190, %c0_191], %464 {strides = array<i32>} : memref<8x8x128xf32, #tpu.memory_space<vmem>>, vector<1x8x128xf32>,
    %c6_192 = arith.constant 6 : index
    %c0_193 = arith.constant 0 : index
    %c0_194 = arith.constant 0 : index
    %465 = vector.load %arg4[%c6_192, %c0_193, %c0_194] : memref<8x8x128xf32, #tpu.memory_space<vmem>>, vector<1x8x128xf32>
    %466 = vector.shape_cast %465 : vector<1x8x128xf32> to vector<8x128xf32>
    %c6_195 = arith.constant 6 : index
    %467 = memref.load %arg0[%c6_195] : memref<8xi32, #tpu.memory_space<smem>>
    %c1_i32_196 = arith.constant 1 : i32
    %468 = arith.cmpi eq, %467, %c1_i32_196 : i32
    %469 = arith.extui %468 : i1 to i32
    %c0_i32_197 = arith.constant 0 : i32
    %470 = arith.cmpi ne, %469, %c0_i32_197 : i32
    %471 = scf.if %470 -> (vector<8x128xf32>) {
      scf.yield %466 : vector<8x128xf32>
    } else {
      %cst_215 = arith.constant dense<0xFF800000> : vector<8xf32>
      %514 = vector.multi_reduction <maximumf>, %461, %cst_215 [1] : vector<8x128xf32> to vector<8xf32>
      %515 = vector.shape_cast %514 : vector<8xf32> to vector<8x1xf32>
      %516 = vector.broadcast %515 : vector<8x1xf32> to vector<8x128xf32>
      %517 = arith.cmpf oeq, %461, %516 : vector<8x128xf32>
      %c128_i32 = arith.constant 128 : i32
      %518 = vector.broadcast %c128_i32 : i32 to vector<8x128xi32>
      %519 = arith.select %517, %171, %518 : vector<8x128xi1>, vector<8x128xi32>
      %cst_216 = arith.constant dense<2147483647> : vector<8xi32>
      %520 = vector.multi_reduction <minsi>, %519, %cst_216 [1] : vector<8x128xi32> to vector<8xi32>
      %521 = vector.shape_cast %520 : vector<8xi32> to vector<8x1xi32>
      %522 = vector.broadcast %521 : vector<8x1xi32> to vector<8x128xi32>
      %523 = arith.cmpi eq, %171, %522 : vector<8x128xi32>
      %524 = arith.extui %523 : vector<8x128xi1> to vector<8x128xi32>
      %525 = arith.sitofp %524 : vector<8x128xi32> to vector<8x128xf32>
      scf.yield %525 : vector<8x128xf32>
    }
    %cst_198 = arith.constant dense<0.000000e+00> : vector<8x64xf32>
    %472 = tpu.matmul %457, %163, %cst_198 {dimension_numbers = #tpu.dot_dimension_numbers<[1], [0], [0], [1], [0, 0, 1, 1], [], []>} : vector<8x32xf32>, vector<32x64xf32>, vector<8x64xf32> -> vector<8x64xf32>
    %473 = arith.addf %472, %164 : vector<8x64xf32>
    %cst_199 = arith.constant dense<0xFF800000> : vector<8xf32>
    %474 = vector.multi_reduction <maximumf>, %473, %cst_199 [1] : vector<8x64xf32> to vector<8xf32>
    %475 = vector.shape_cast %474 : vector<8xf32> to vector<8x1xf32>
    %476 = vector.broadcast %475 : vector<8x1xf32> to vector<8x64xf32>
    %477 = arith.subf %473, %476 : vector<8x64xf32>
    %478 = math.exp %477 : vector<8x64xf32>
    %cst_200 = arith.constant dense<0.000000e+00> : vector<8xf32>
    %479 = vector.multi_reduction <add>, %478, %cst_200 [1] : vector<8x64xf32> to vector<8xf32>
    %480 = vector.shape_cast %479 : vector<8xf32> to vector<8x1xf32>
    %481 = tpu.reciprocal %480 {approx = true} : vector<8x1xf32> -> vector<8x1xf32>
    %482 = vector.broadcast %481 : vector<8x1xf32> to vector<8x64xf32>
    %483 = arith.mulf %478, %482 : vector<8x64xf32>
    %cst_201 = arith.constant dense<0.000000e+00> : vector<8x32xf32>
    %484 = tpu.matmul %483, %162, %cst_201 {dimension_numbers = #tpu.dot_dimension_numbers<[1], [0], [0], [1], [0, 0, 1, 1], [], []>} : vector<8x64xf32>, vector<64x32xf32>, vector<8x32xf32> -> vector<8x32xf32>
    %c0_202 = arith.constant 0 : index
    %c0_203 = arith.constant 0 : index
    %485 = vector.load %arg5[%c0_202, %c0_203] : memref<128x16xf32, #tpu.memory_space<vmem>>, vector<128x16xf32>
    %cst_204 = arith.constant dense<0.000000e+00> : vector<8x16xf32>
    %486 = tpu.matmul %471, %485, %cst_204 {dimension_numbers = #tpu.dot_dimension_numbers<[1], [0], [0], [1], [0, 0, 1, 1], [], []>} : vector<8x128xf32>, vector<128x16xf32>, vector<8x16xf32> -> vector<8x16xf32>
    %487 = tpu.concatenate %486, %484 in 1 : vector<8x16xf32>, vector<8x32xf32> -> vector<8x48xf32>
    %488 = tpu.concatenate %487, %457 in 1 : vector<8x48xf32>, vector<8x32xf32> -> vector<8x80xf32>
    %c0_205 = arith.constant 0 : index
    %c0_206 = arith.constant 0 : index
    %489 = vector.load %arg6[%c0_205, %c0_206] : memref<80x128xf32, #tpu.memory_space<vmem>>, vector<80x128xf32>
    %cst_207 = arith.constant dense<0.000000e+00> : vector<8x128xf32>
    %490 = tpu.matmul %488, %489, %cst_207 {dimension_numbers = #tpu.dot_dimension_numbers<[1], [0], [0], [1], [0, 0, 1, 1], [], []>} : vector<8x80xf32>, vector<80x128xf32>, vector<8x128xf32> -> vector<8x128xf32>
    %491 = arith.addf %490, %167 : vector<8x128xf32>
    %492 = arith.negf %491 : vector<8x128xf32>
    %493 = math.exp %492 : vector<8x128xf32>
    %cst_208 = arith.constant 1.000000e+00 : f32
    %494 = vector.broadcast %cst_208 : f32 to vector<8x128xf32>
    %495 = arith.addf %494, %493 : vector<8x128xf32>
    %496 = arith.divf %494, %495 : vector<8x128xf32>
    %497 = vector.extract_strided_slice %496 {offsets = [0, 0], sizes = [8, 32], strides = [1, 1]} : vector<8x128xf32> to vector<8x32xf32>
    %498 = vector.extract_strided_slice %496 {offsets = [0, 32], sizes = [8, 32], strides = [1, 1]} : vector<8x128xf32> to vector<8x32xf32>
    %499 = vector.extract_strided_slice %496 {offsets = [0, 96], sizes = [8, 32], strides = [1, 1]} : vector<8x128xf32> to vector<8x32xf32>
    %500 = vector.extract_strided_slice %491 {offsets = [0, 64], sizes = [8, 32], strides = [1, 1]} : vector<8x128xf32> to vector<8x32xf32>
    %501 = math.tanh %500 : vector<8x32xf32>
    %502 = arith.mulf %498, %455 : vector<8x32xf32>
    %503 = arith.mulf %497, %501 : vector<8x32xf32>
    %504 = arith.addf %502, %503 : vector<8x32xf32>
    %505 = math.tanh %504 : vector<8x32xf32>
    %506 = arith.mulf %499, %505 : vector<8x32xf32>
    %507 = tpu.concatenate %487, %506 in 1 : vector<8x48xf32>, vector<8x32xf32> -> vector<8x80xf32>
    %c0_209 = arith.constant 0 : index
    %c0_210 = arith.constant 0 : index
    %508 = vector.load %arg8[%c0_209, %c0_210] : memref<80x128xf32, #tpu.memory_space<vmem>>, vector<80x128xf32>
    %cst_211 = arith.constant dense<0.000000e+00> : vector<8x128xf32>
    %509 = tpu.matmul %507, %508, %cst_211 {dimension_numbers = #tpu.dot_dimension_numbers<[1], [0], [0], [1], [0, 0, 1, 1], [], []>} : vector<8x80xf32>, vector<80x128xf32>, vector<8x128xf32> -> vector<8x128xf32>
    %510 = arith.addf %509, %170 : vector<8x128xf32>
    %c7_212 = arith.constant 7 : index
    %c0_213 = arith.constant 0 : index
    %c0_214 = arith.constant 0 : index
    %511 = vector.load %arg10[%c7_212, %c0_213, %c0_214] : memref<8x8x128xf32, #tpu.memory_space<vmem>>, vector<1x8x128xf32>
    %512 = vector.shape_cast %511 : vector<1x8x128xf32> to vector<8x128xf32>
    %513 = vector.shape_cast %510 : vector<8x128xf32> to vector<1x8x128xf32>
    tpu.vector_store %arg10[%c7_212, %c0_213, %c0_214], %513 {strides = array<i32>} : memref<8x8x128xf32, #tpu.memory_space<vmem>>, vector<1x8x128xf32>,
    return
  }
}

</mosaic_0001>

<llo_original>
// kernel: seq2seq_forward.1
$region0: #{seq2seq_forward.1}
  #allocation0 [shape = 'u32[]', space=smem, size = 0x4, offset = 0x4, fixed_abs, tag = 'smem constant byte address 0x4 - core index']
  #allocation1 [shape = 'u32[72,128]{1,0:T(1,128)}', space=vmem, size = 0x9000, scoped, tag = 'internal scratch']
  %s0 = inlined_call_operand.vmem [shape: s32[8], index: 0, kind: input, shape index: {}]
  %s1 = inlined_call_operand.vmem [shape: f32[8,8,128], index: 1, kind: input, shape index: {}]
  %s2 = inlined_call_operand.vmem [shape: f32[32,128], index: 2, kind: input, shape index: {}]
  %s3 = inlined_call_operand.vmem [shape: f32[8,64], index: 3, kind: input, shape index: {}]
  %s4 = inlined_call_operand.vmem [shape: f32[8,8,128], index: 4, kind: input, shape index: {}]
  %s5 = inlined_call_operand.vmem [shape: f32[128,16], index: 5, kind: input, shape index: {}]
  %s6 = inlined_call_operand.vmem [shape: f32[80,128], index: 6, kind: input, shape index: {}]
  %s7 = inlined_call_operand.vmem [shape: f32[1,128], index: 7, kind: input, shape index: {}]
  %s8 = inlined_call_operand.vmem [shape: f32[80,128], index: 8, kind: input, shape index: {}]
  %s9 = inlined_call_operand.vmem [shape: f32[1,128], index: 9, kind: input, shape index: {}]
  %s10 = inlined_call_operand.vmem [shape: f32[8,8,128], index: 10, kind: output, shape index: {}]
  %s11 = sld [smem:[#allocation0]]
  $region102: #{seq2seq_forward.1} parent=0
    _
  %s13 = ssub.s32 1, %s11
  %s14 = scalar_select 0, %s13, %s11
  $region1: #{seq2seq_forward.1} parent=0
    #allocation2 [shape = 'u8[512]{0}', space=smem, size = 0x200, scoped, tag = 'input window, operand 0, single buffered']
    #allocation3 [shape = 's32[1]{0}', space=sflag, size = 0x4, scoped, tag = 'scoped memory for seq2seq_forward.1']
    %15 = vsyncpa [#allocation3], 0
    // Predicated region
    $region2: #{seq2seq_forward.1} parent=1 // pred_check
      _
    $region3: #{seq2seq_forward.1} parent=1 // pred_check_branch
      %17 = sbr.rel (0) target = $region5
    $region4: #{seq2seq_forward.1} parent=1 // pred_region
      %19 = vsyncadd [#allocation3], 0
      %s21 = sshll.u32 %s0, 4
      %s22 = int_to_ptr.vmem [resolvable:$true] %s21
      %24 = dma.vmem_to_smem %s22, 16, [#allocation2], [#allocation3]
    $region5: #{seq2seq_forward.1} parent=1 // pred_fallthru
      _
    // Predicated region
    $region6: #{seq2seq_forward.1} parent=1 // pred_check
      _
    $region7: #{seq2seq_forward.1} parent=1 // pred_check_branch
      %26 = sbr.rel (0) target = $region9
    $region8: #{seq2seq_forward.1} parent=1 // pred_region
      _
    $region9: #{seq2seq_forward.1} parent=1 // pred_fallthru
      _
    // Predicated region
    $region10: #{seq2seq_forward.1} parent=1 // pred_check
      _
    $region11: #{seq2seq_forward.1} parent=1 // pred_check_branch
      %28 = sbr.rel (0) target = $region13
    $region12: #{seq2seq_forward.1} parent=1 // pred_region
      _
    $region13: #{seq2seq_forward.1} parent=1 // pred_fallthru
      _
    // Predicated region
    $region14: #{seq2seq_forward.1} parent=1 // pred_check
      _
    $region15: #{seq2seq_forward.1} parent=1 // pred_check_branch
      %30 = sbr.rel (0) target = $region17
    $region16: #{seq2seq_forward.1} parent=1 // pred_region
      _
    $region17: #{seq2seq_forward.1} parent=1 // pred_fallthru
      _
    // Predicated region
    $region18: #{seq2seq_forward.1} parent=1 // pred_check
      _
    $region19: #{seq2seq_forward.1} parent=1 // pred_check_branch
      %32 = sbr.rel (0) target = $region21
    $region20: #{seq2seq_forward.1} parent=1 // pred_region
      _
    $region21: #{seq2seq_forward.1} parent=1 // pred_fallthru
      _
    // Predicated region
    $region22: #{seq2seq_forward.1} parent=1 // pred_check
      _
    $region23: #{seq2seq_forward.1} parent=1 // pred_check_branch
      %34 = sbr.rel (0) target = $region25
    $region24: #{seq2seq_forward.1} parent=1 // pred_region
      _
    $region25: #{seq2seq_forward.1} parent=1 // pred_fallthru
      _
    // Predicated region
    $region26: #{seq2seq_forward.1} parent=1 // pred_check
      _
    $region27: #{seq2seq_forward.1} parent=1 // pred_check_branch
      %36 = sbr.rel (0) target = $region29
    $region28: #{seq2seq_forward.1} parent=1 // pred_region
      _
    $region29: #{seq2seq_forward.1} parent=1 // pred_fallthru
      _
    // Predicated region
    $region30: #{seq2seq_forward.1} parent=1 // pred_check
      _
    $region31: #{seq2seq_forward.1} parent=1 // pred_check_branch
      %38 = sbr.rel (0) target = $region33
    $region32: #{seq2seq_forward.1} parent=1 // pred_region
      _
    $region33: #{seq2seq_forward.1} parent=1 // pred_fallthru
      _
    // Predicated region
    $region34: #{seq2seq_forward.1} parent=1 // pred_check
      _
    $region35: #{seq2seq_forward.1} parent=1 // pred_check_branch
      %40 = sbr.rel (0) target = $region37
    $region36: #{seq2seq_forward.1} parent=1 // pred_region
      _
    $region37: #{seq2seq_forward.1} parent=1 // pred_fallthru
      _
    // Predicated region
    $region38: #{seq2seq_forward.1} parent=1 // pred_check
      _
    $region39: #{seq2seq_forward.1} parent=1 // pred_check_branch
      %42 = sbr.rel (0) target = $region41
    $region40: #{seq2seq_forward.1} parent=1 // pred_region
      _
    $region41: #{seq2seq_forward.1} parent=1 // pred_fallthru
      _
    // Predicated region
    $region42: #{seq2seq_forward.1} parent=1 // pred_check
      _
    $region43: #{seq2seq_forward.1} parent=1 // pred_check_branch
      %44 = sbr.rel (0) target = $region45
    $region44: #{seq2seq_forward.1} parent=1 // pred_region
      %46 = dma.done [#allocation3], 16
    $region45: #{seq2seq_forward.1} parent=1 // pred_fallthru
      _
    %47 = sfence
    %v48 = vld [vmem:[%s1] sm:$0xff]
    %v49 = vld [vmem:[%s2] sm:$0xff]
    %v50 = vld [vmem:[%s2 + $0x8] sm:$0xff]
    %v51 = vld [vmem:[%s2 + $0x10] sm:$0xff]
    %v52 = vld [vmem:[%s2 + $0x18] sm:$0xff]
    %vm53 = vcmask 261120
    %v55 = vsel %vm53, 0.0, 0
    %57 = vmatpush.msra.mxu0 0.0
    %58 = vmatpush.msra.mxu0 0.0
    %59 = vmatpush.msra.mxu0 0.0
    %60 = vmatpush.msra.mxu0 0.0
    %61 = vmatpush.msra.mxu0 0.0
    %62 = vmatpush.msra.mxu0 0.0
    %63 = vmatpush.msra.mxu0 0.0
    %64 = vmatpush.msra.mxu0 0.0
    %65 = vmatpush.msra.mxu0 0.0
    %66 = vmatpush.msra.mxu0 0.0
    %67 = vmatpush.msra.mxu0 0.0
    %68 = vmatpush.msra.mxu0 0.0
    %69 = vmatpush.msra.mxu0 %v52
    %70 = vmatpush.msra.mxu0 %v51
    %71 = vmatpush.msra.mxu0 %v50
    %72 = vmatpush.msra.mxu0 %v49
    %73 = vmatmul.f32.gmra.mxu0 %v55
    %v74 = vpop.f32.mrf.mxu0
    %v75 = vadd.f32 0.0, %v74
    %76 = vdwg.mxu0
    %v77 = vadd.f32 %v48, %v75
    %v78 = vxor.u32 %v77, 2147483648
    %v79 = vmul.f32 %v78, 1.442695
    %v80 = vpow.pop %v79
    %v81 = vadd.f32 %v80, 1.0
    %v82 = vrcp.pop %v81
    %v83 = vmul.f32 %v81, %v82
    %v84 = vsub.f32 1.0, %v83
    %v85 = vmul.f32 %v82, %v84
    %v86 = vadd.f32 %v82, %v85
    %vm87 = vweird.f32 %v81
    %vm88 = vweird.f32 %v82
    %vm89 = vmor %vm87, %vm88
    %v90 = vsel %vm89, %v82, %v86
    %v91 = vand.u32 2147483647, %v81
    %vm92 = vcmp.eq.f32.partialorder %v91, 8.507059e+37
    %v93 = vand.u32 %v81, 2147483648
    %v94 = vor.u32 1.1754944e-38, %v93
    %v95 = vsel %vm92, %v94, %v90
    %v96 = vmul.f32 1.0, %v95
    %v97 = vtanh.pop %v77
    %v98 = vmul.f32 %v96, 0.0
    %100 = vrot.lane.b32.xlu0 %v97, 64
    %v101 = vpop.permute.xlu0 %100
    %v103 = vmul.f32 %v96, %v101
    %105 = vrot.lane.b32.xlu0 %v103, 32
    %v106 = vpop.permute.xlu0 %105
    %v108 = vadd.f32 %v98, %v106
    %v109 = vtanh.pop %v108
    %111 = vrot.lane.b32.xlu0 %v109, 64
    %v112 = vpop.permute.xlu0 %111
    %v114 = vmul.f32 %v96, %v112
    %s115 = scalar_lea.vmem %s1, 8
    %v116 = vld [vmem:[%s115] sm:$0xff]
    %118 = vrot.lane.b32.xlu0 %v114, 32
    %v119 = vpop.permute.xlu0 %118
    %v120 = vsel %vm53, %v119, 0
    %122 = vmatpush.msra.mxu0 0.0
    %123 = vmatpush.msra.mxu0 0.0
    %124 = vmatpush.msra.mxu0 0.0
    %125 = vmatpush.msra.mxu0 0.0
    %126 = vmatpush.msra.mxu0 0.0
    %127 = vmatpush.msra.mxu0 0.0
    %128 = vmatpush.msra.mxu0 0.0
    %129 = vmatpush.msra.mxu0 0.0
    %130 = vmatpush.msra.mxu0 0.0
    %131 = vmatpush.msra.mxu0 0.0
    %132 = vmatpush.msra.mxu0 0.0
    %133 = vmatpush.msra.mxu0 0.0
    %134 = vmatpush.msra.mxu0 %v52
    %135 = vmatpush.msra.mxu0 %v51
    %136 = vmatpush.msra.mxu0 %v50
    %137 = vmatpush.msra.mxu0 %v49
    %138 = vmatmul.f32.gmra.mxu0 %v120
    %v139 = vpop.f32.mrf.mxu0
    %v140 = vadd.f32 0.0, %v139
    %141 = vdwg.mxu0
    %v142 = vadd.f32 %v116, %v140
    %v143 = vxor.u32 %v142, 2147483648
    %v144 = vmul.f32 %v143, 1.442695
    %v145 = vpow.pop %v144
    %v146 = vadd.f32 %v145, 1.0
    %v147 = vrcp.pop %v146
    %v148 = vmul.f32 %v146, %v147
    %v149 = vsub.f32 1.0, %v148
    %v150 = vmul.f32 %v147, %v149
    %v151 = vadd.f32 %v147, %v150
    %vm152 = vweird.f32 %v146
    %vm153 = vweird.f32 %v147
    %vm154 = vmor %vm152, %vm153
    %v155 = vsel %vm154, %v147, %v151
    %v156 = vand.u32 2147483647, %v146
    %vm157 = vcmp.eq.f32.partialorder %v156, 8.507059e+37
    %v158 = vand.u32 %v146, 2147483648
    %v159 = vor.u32 1.1754944e-38, %v158
    %v160 = vsel %vm157, %v159, %v155
    %v161 = vmul.f32 1.0, %v160
    %v162 = vtanh.pop %v142
    %v163 = vmul.f32 %v161, %v108
    %165 = vrot.lane.b32.xlu0 %v162, 64
    %v166 = vpop.permute.xlu0 %165
    %v168 = vmul.f32 %v161, %v166
    %170 = vrot.lane.b32.xlu0 %v168, 32
    %v171 = vpop.permute.xlu0 %170
    %v173 = vadd.f32 %v163, %v171
    %v174 = vtanh.pop %v173
    %176 = vrot.lane.b32.xlu0 %v174, 64
    %v177 = vpop.permute.xlu0 %176
    %v179 = vmul.f32 %v161, %v177
    %s180 = scalar_lea.vmem %s1, 16
    %v181 = vld [vmem:[%s180] sm:$0xff]
    %183 = vrot.lane.b32.xlu0 %v179, 32
    %v184 = vpop.permute.xlu0 %183
    %v185 = vsel %vm53, %v184, 0
    %187 = vmatpush.msra.mxu0 0.0
    %188 = vmatpush.msra.mxu0 0.0
    %189 = vmatpush.msra.mxu0 0.0
    %190 = vmatpush.msra.mxu0 0.0
    %191 = vmatpush.msra.mxu0 0.0
    %192 = vmatpush.msra.mxu0 0.0
    %193 = vmatpush.msra.mxu0 0.0
    %194 = vmatpush.msra.mxu0 0.0
    %195 = vmatpush.msra.mxu0 0.0
    %196 = vmatpush.msra.mxu0 0.0
    %197 = vmatpush.msra.mxu0 0.0
    %198 = vmatpush.msra.mxu0 0.0
    %199 = vmatpush.msra.mxu0 %v52
    %200 = vmatpush.msra.mxu0 %v51
    %201 = vmatpush.msra.mxu0 %v50
    %202 = vmatpush.msra.mxu0 %v49
    %203 = vmatmul.f32.gmra.mxu0 %v185
    %v204 = vpop.f32.mrf.mxu0
    %v205 = vadd.f32 0.0, %v204
    %206 = vdwg.mxu0
    %v207 = vadd.f32 %v181, %v205
    %v208 = vxor.u32 %v207, 2147483648
    %v209 = vmul.f32 %v208, 1.442695
    %v210 = vpow.pop %v209
    %v211 = vadd.f32 %v210, 1.0
    %v212 = vrcp.pop %v211
    %v213 = vmul.f32 %v211, %v212
    %v214 = vsub.f32 1.0, %v213
    %v215 = vmul.f32 %v212, %v214
    %v216 = vadd.f32 %v212, %v215
    %vm217 = vweird.f32 %v211
    %vm218 = vweird.f32 %v212
    %vm219 = vmor %vm217, %vm218
    %v220 = vsel %vm219, %v212, %v216
    %v221 = vand.u32 2147483647, %v211
    %vm222 = vcmp.eq.f32.partialorder %v221, 8.507059e+37
    %v223 = vand.u32 %v211, 2147483648
    %v224 = vor.u32 1.1754944e-38, %v223
    %v225 = vsel %vm222, %v224, %v220
    %v226 = vmul.f32 1.0, %v225
    %v227 = vtanh.pop %v207
    %v228 = vmul.f32 %v226, %v173
    %230 = vrot.lane.b32.xlu0 %v227, 64
    %v231 = vpop.permute.xlu0 %230
    %v233 = vmul.f32 %v226, %v231
    %235 = vrot.lane.b32.xlu0 %v233, 32
    %v236 = vpop.permute.xlu0 %235
    %v238 = vadd.f32 %v228, %v236
    %v239 = vtanh.pop %v238
    %241 = vrot.lane.b32.xlu0 %v239, 64
    %v242 = vpop.permute.xlu0 %241
    %v244 = vmul.f32 %v226, %v242
    %s245 = scalar_lea.vmem %s1, 24
    %v246 = vld [vmem:[%s245] sm:$0xff]
    %248 = vrot.lane.b32.xlu0 %v244, 32
    %v249 = vpop.permute.xlu0 %248
    %v250 = vsel %vm53, %v249, 0
    %252 = vmatpush.msra.mxu0 0.0
    %253 = vmatpush.msra.mxu0 0.0
    %254 = vmatpush.msra.mxu0 0.0
    %255 = vmatpush.msra.mxu0 0.0
    %256 = vmatpush.msra.mxu0 0.0
    %257 = vmatpush.msra.mxu0 0.0
    %258 = vmatpush.msra.mxu0 0.0
    %259 = vmatpush.msra.mxu0 0.0
    %260 = vmatpush.msra.mxu0 0.0
    %261 = vmatpush.msra.mxu0 0.0
    %262 = vmatpush.msra.mxu0 0.0
    %263 = vmatpush.msra.mxu0 0.0
    %264 = vmatpush.msra.mxu0 %v52
    %265 = vmatpush.msra.mxu0 %v51
    %266 = vmatpush.msra.mxu0 %v50
    %267 = vmatpush.msra.mxu0 %v49
    %268 = vmatmul.f32.gmra.mxu0 %v250
    %v269 = vpop.f32.mrf.mxu0
    %v270 = vadd.f32 0.0, %v269
    %271 = vdwg.mxu0
    %v272 = vadd.f32 %v246, %v270
    %v273 = vxor.u32 %v272, 2147483648
    %v274 = vmul.f32 %v273, 1.442695
    %v275 = vpow.pop %v274
    %v276 = vadd.f32 %v275, 1.0
    %v277 = vrcp.pop %v276
    %v278 = vmul.f32 %v276, %v277
    %v279 = vsub.f32 1.0, %v278
    %v280 = vmul.f32 %v277, %v279
    %v281 = vadd.f32 %v277, %v280
    %vm282 = vweird.f32 %v276
    %vm283 = vweird.f32 %v277
    %vm284 = vmor %vm282, %vm283
    %v285 = vsel %vm284, %v277, %v281
    %v286 = vand.u32 2147483647, %v276
    %vm287 = vcmp.eq.f32.partialorder %v286, 8.507059e+37
    %v288 = vand.u32 %v276, 2147483648
    %v289 = vor.u32 1.1754944e-38, %v288
    %v290 = vsel %vm287, %v289, %v285
    %v291 = vmul.f32 1.0, %v290
    %v292 = vtanh.pop %v272
    %v293 = vmul.f32 %v291, %v238
    %295 = vrot.lane.b32.xlu0 %v292, 64
    %v296 = vpop.permute.xlu0 %295
    %v298 = vmul.f32 %v291, %v296
    %300 = vrot.lane.b32.xlu0 %v298, 32
    %v301 = vpop.permute.xlu0 %300
    %v303 = vadd.f32 %v293, %v301
    %v304 = vtanh.pop %v303
    %306 = vrot.lane.b32.xlu0 %v304, 64
    %v307 = vpop.permute.xlu0 %306
    %v309 = vmul.f32 %v291, %v307
    %s310 = scalar_lea.vmem %s1, 32
    %v311 = vld [vmem:[%s310] sm:$0xff]
    %313 = vrot.lane.b32.xlu0 %v309, 32
    %v314 = vpop.permute.xlu0 %313
    %v315 = vsel %vm53, %v314, 0
    %317 = vmatpush.msra.mxu0 0.0
    %318 = vmatpush.msra.mxu0 0.0
    %319 = vmatpush.msra.mxu0 0.0
    %320 = vmatpush.msra.mxu0 0.0
    %321 = vmatpush.msra.mxu0 0.0
    %322 = vmatpush.msra.mxu0 0.0
    %323 = vmatpush.msra.mxu0 0.0
    %324 = vmatpush.msra.mxu0 0.0
    %325 = vmatpush.msra.mxu0 0.0
    %326 = vmatpush.msra.mxu0 0.0
    %327 = vmatpush.msra.mxu0 0.0
    %328 = vmatpush.msra.mxu0 0.0
    %329 = vmatpush.msra.mxu0 %v52
    %330 = vmatpush.msra.mxu0 %v51
    %331 = vmatpush.msra.mxu0 %v50
    %332 = vmatpush.msra.mxu0 %v49
    %333 = vmatmul.f32.gmra.mxu0 %v315
    %v334 = vpop.f32.mrf.mxu0
    %v335 = vadd.f32 0.0, %v334
    %336 = vdwg.mxu0
    %v337 = vadd.f32 %v311, %v335
    %v338 = vxor.u32 %v337, 2147483648
    %v339 = vmul.f32 %v338, 1.442695
    %v340 = vpow.pop %v339
    %v341 = vadd.f32 %v340, 1.0
    %v342 = vrcp.pop %v341
    %v343 = vmul.f32 %v341, %v342
    %v344 = vsub.f32 1.0, %v343
    %v345 = vmul.f32 %v342, %v344
    %v346 = vadd.f32 %v342, %v345
    %vm347 = vweird.f32 %v341
    %vm348 = vweird.f32 %v342
    %vm349 = vmor %vm347, %vm348
    %v350 = vsel %vm349, %v342, %v346
    %v351 = vand.u32 2147483647, %v341
    %vm352 = vcmp.eq.f32.partialorder %v351, 8.507059e+37
    %v353 = vand.u32 %v341, 2147483648
    %v354 = vor.u32 1.1754944e-38, %v353
    %v355 = vsel %vm352, %v354, %v350
    %v356 = vmul.f32 1.0, %v355
    %v357 = vtanh.pop %v337
    %v358 = vmul.f32 %v356, %v303
    %360 = vrot.lane.b32.xlu0 %v357, 64
    %v361 = vpop.permute.xlu0 %360
    %v363 = vmul.f32 %v356, %v361
    %365 = vrot.lane.b32.xlu0 %v363, 32
    %v366 = vpop.permute.xlu0 %365
    %v368 = vadd.f32 %v358, %v366
    %v369 = vtanh.pop %v368
    %371 = vrot.lane.b32.xlu0 %v369, 64
    %v372 = vpop.permute.xlu0 %371
    %v374 = vmul.f32 %v356, %v372
    %s375 = scalar_lea.vmem %s1, 40
    %v376 = vld [vmem:[%s375] sm:$0xff]
    %378 = vrot.lane.b32.xlu0 %v374, 32
    %v379 = vpop.permute.xlu0 %378
    %v380 = vsel %vm53, %v379, 0
    %382 = vmatpush.msra.mxu0 0.0
    %383 = vmatpush.msra.mxu0 0.0
    %384 = vmatpush.msra.mxu0 0.0
    %385 = vmatpush.msra.mxu0 0.0
    %386 = vmatpush.msra.mxu0 0.0
    %387 = vmatpush.msra.mxu0 0.0
    %388 = vmatpush.msra.mxu0 0.0
    %389 = vmatpush.msra.mxu0 0.0
    %390 = vmatpush.msra.mxu0 0.0
    %391 = vmatpush.msra.mxu0 0.0
    %392 = vmatpush.msra.mxu0 0.0
    %393 = vmatpush.msra.mxu0 0.0
    %394 = vmatpush.msra.mxu0 %v52
    %395 = vmatpush.msra.mxu0 %v51
    %396 = vmatpush.msra.mxu0 %v50
    %397 = vmatpush.msra.mxu0 %v49
    %398 = vmatmul.f32.gmra.mxu0 %v380
    %v399 = vpop.f32.mrf.mxu0
    %v400 = vadd.f32 0.0, %v399
    %401 = vdwg.mxu0
    %v402 = vadd.f32 %v376, %v400
    %v403 = vxor.u32 %v402, 2147483648
    %v404 = vmul.f32 %v403, 1.442695
    %v405 = vpow.pop %v404
    %v406 = vadd.f32 %v405, 1.0
    %v407 = vrcp.pop %v406
    %v408 = vmul.f32 %v406, %v407
    %v409 = vsub.f32 1.0, %v408
    %v410 = vmul.f32 %v407, %v409
    %v411 = vadd.f32 %v407, %v410
    %vm412 = vweird.f32 %v406
    %vm413 = vweird.f32 %v407
    %vm414 = vmor %vm412, %vm413
    %v415 = vsel %vm414, %v407, %v411
    %v416 = vand.u32 2147483647, %v406
    %vm417 = vcmp.eq.f32.partialorder %v416, 8.507059e+37
    %v418 = vand.u32 %v406, 2147483648
    %v419 = vor.u32 1.1754944e-38, %v418
    %v420 = vsel %vm417, %v419, %v415
    %v421 = vmul.f32 1.0, %v420
    %v422 = vtanh.pop %v402
    %v423 = vmul.f32 %v421, %v368
    %425 = vrot.lane.b32.xlu0 %v422, 64
    %v426 = vpop.permute.xlu0 %425
    %v428 = vmul.f32 %v421, %v426
    %430 = vrot.lane.b32.xlu0 %v428, 32
    %v431 = vpop.permute.xlu0 %430
    %v433 = vadd.f32 %v423, %v431
    %v434 = vtanh.pop %v433
    %436 = vrot.lane.b32.xlu0 %v434, 64
    %v437 = vpop.permute.xlu0 %436
    %v439 = vmul.f32 %v421, %v437
    %s440 = scalar_lea.vmem %s1, 48
    %v441 = vld [vmem:[%s440] sm:$0xff]
    %443 = vrot.lane.b32.xlu0 %v439, 32
    %v444 = vpop.permute.xlu0 %443
    %v445 = vsel %vm53, %v444, 0
    %447 = vmatpush.msra.mxu0 0.0
    %448 = vmatpush.msra.mxu0 0.0
    %449 = vmatpush.msra.mxu0 0.0
    %450 = vmatpush.msra.mxu0 0.0
    %451 = vmatpush.msra.mxu0 0.0
    %452 = vmatpush.msra.mxu0 0.0
    %453 = vmatpush.msra.mxu0 0.0
    %454 = vmatpush.msra.mxu0 0.0
    %455 = vmatpush.msra.mxu0 0.0
    %456 = vmatpush.msra.mxu0 0.0
    %457 = vmatpush.msra.mxu0 0.0
    %458 = vmatpush.msra.mxu0 0.0
    %459 = vmatpush.msra.mxu0 %v52
    %460 = vmatpush.msra.mxu0 %v51
    %461 = vmatpush.msra.mxu0 %v50
    %462 = vmatpush.msra.mxu0 %v49
    %463 = vmatmul.f32.gmra.mxu0 %v445
    %v464 = vpop.f32.mrf.mxu0
    %v465 = vadd.f32 0.0, %v464
    %466 = vdwg.mxu0
    %v467 = vadd.f32 %v441, %v465
    %v468 = vxor.u32 %v467, 2147483648
    %v469 = vmul.f32 %v468, 1.442695
    %v470 = vpow.pop %v469
    %v471 = vadd.f32 %v470, 1.0
    %v472 = vrcp.pop %v471
    %v473 = vmul.f32 %v471, %v472
    %v474 = vsub.f32 1.0, %v473
    %v475 = vmul.f32 %v472, %v474
    %v476 = vadd.f32 %v472, %v475
    %vm477 = vweird.f32 %v471
    %vm478 = vweird.f32 %v472
    %vm479 = vmor %vm477, %vm478
    %v480 = vsel %vm479, %v472, %v476
    %v481 = vand.u32 2147483647, %v471
    %vm482 = vcmp.eq.f32.partialorder %v481, 8.507059e+37
    %v483 = vand.u32 %v471, 2147483648
    %v484 = vor.u32 1.1754944e-38, %v483
    %v485 = vsel %vm482, %v484, %v480
    %v486 = vmul.f32 1.0, %v485
    %v487 = vtanh.pop %v467
    %v488 = vmul.f32 %v486, %v433
    %490 = vrot.lane.b32.xlu0 %v487, 64
    %v491 = vpop.permute.xlu0 %490
    %v493 = vmul.f32 %v486, %v491
    %495 = vrot.lane.b32.xlu0 %v493, 32
    %v496 = vpop.permute.xlu0 %495
    %v498 = vadd.f32 %v488, %v496
    %v499 = vtanh.pop %v498
    %501 = vrot.lane.b32.xlu0 %v499, 64
    %v502 = vpop.permute.xlu0 %501
    %v504 = vmul.f32 %v486, %v502
    %s505 = scalar_lea.vmem %s1, 56
    %v506 = vld [vmem:[%s505] sm:$0xff]
    %508 = vrot.lane.b32.xlu0 %v504, 32
    %v509 = vpop.permute.xlu0 %508
    %v510 = vsel %vm53, %v509, 0
    %512 = vmatpush.msra.mxu0 0.0
    %513 = vmatpush.msra.mxu0 0.0
    %514 = vmatpush.msra.mxu0 0.0
    %515 = vmatpush.msra.mxu0 0.0
    %516 = vmatpush.msra.mxu0 0.0
    %517 = vmatpush.msra.mxu0 0.0
    %518 = vmatpush.msra.mxu0 0.0
    %519 = vmatpush.msra.mxu0 0.0
    %520 = vmatpush.msra.mxu0 0.0
    %521 = vmatpush.msra.mxu0 0.0
    %522 = vmatpush.msra.mxu0 0.0
    %523 = vmatpush.msra.mxu0 0.0
    %524 = vmatpush.msra.mxu0 %v52
    %525 = vmatpush.msra.mxu0 %v51
    %526 = vmatpush.msra.mxu0 %v50
    %527 = vmatpush.msra.mxu0 %v49
    %528 = vmatmul.f32.gmra.mxu0 %v510
    %v529 = vpop.f32.mrf.mxu0
    %v530 = vadd.f32 0.0, %v529
    %531 = vdwg.mxu0
    %v532 = vadd.f32 %v506, %v530
    %v533 = vxor.u32 %v532, 2147483648
    %v534 = vmul.f32 %v533, 1.442695
    %v535 = vpow.pop %v534
    %v536 = vadd.f32 %v535, 1.0
    %v537 = vrcp.pop %v536
    %v538 = vmul.f32 %v536, %v537
    %v539 = vsub.f32 1.0, %v538
    %v540 = vmul.f32 %v537, %v539
    %v541 = vadd.f32 %v537, %v540
    %vm542 = vweird.f32 %v536
    %vm543 = vweird.f32 %v537
    %vm544 = vmor %vm542, %vm543
    %v545 = vsel %vm544, %v537, %v541
    %v546 = vand.u32 2147483647, %v536
    %vm547 = vcmp.eq.f32.partialorder %v546, 8.507059e+37
    %v548 = vand.u32 %v536, 2147483648
    %v549 = vor.u32 1.1754944e-38, %v548
    %v550 = vsel %vm547, %v549, %v545
    %v551 = vmul.f32 1.0, %v550
    %v552 = vtanh.pop %v532
    %v553 = vmul.f32 %v551, %v498
    %555 = vrot.lane.b32.xlu0 %v552, 64
    %v556 = vpop.permute.xlu0 %555
    %v558 = vmul.f32 %v551, %v556
    %560 = vrot.lane.b32.xlu0 %v558, 32
    %v561 = vpop.permute.xlu0 %560
    %v563 = vadd.f32 %v553, %v561
    %v564 = vtanh.pop %v563
    %566 = vrot.lane.b32.xlu0 %v564, 64
    %v567 = vpop.permute.xlu0 %566
    %v569 = vmul.f32 %v551, %v567
    %v570 = vld [vmem:[%s3] sm:$0xff]
    %v571 = vld [vmem:[%s7] sm:$0x1]
    %v573 = vperm.slane %v571, 0
    %v575 = vld [vmem:[%s9] sm:$0x1]
    %v577 = vperm.slane %v575, 0
    %v579 = vlaneseq
    %v580 = vand.u32 %v579, 127
    %581 = vst [vmem:[%s10] sm:$0xff] 0.0
    %v582 = vld [vmem:[%s4] sm:$0xff]
    %584 = vrot.lane.b32.xlu0 %v569, 32
    %v585 = vpop.permute.xlu0 %584
    %v586 = vsel %vm53, %v585, 0
    %588 = vmatpush.xpose.msra.mxu0 0.0
    %589 = vmatpush.xpose.msra.mxu0 0.0
    %590 = vmatpush.xpose.msra.mxu0 0.0
    %591 = vmatpush.xpose.msra.mxu0 0.0
    %592 = vmatpush.xpose.msra.mxu0 0.0
    %593 = vmatpush.xpose.msra.mxu0 0.0
    %594 = vmatpush.xpose.msra.mxu0 0.0
    %595 = vmatpush.xpose.msra.mxu0 0.0
    %596 = vmatpush.xpose.msra.mxu0 %v586
    %597 = vmatpush.xpose.msra.mxu0 %v510
    %598 = vmatpush.xpose.msra.mxu0 %v445
    %599 = vmatpush.xpose.msra.mxu0 %v380
    %600 = vmatpush.xpose.msra.mxu0 %v315
    %601 = vmatpush.xpose.msra.mxu0 %v250
    %602 = vmatpush.xpose.msra.mxu0 %v185
    %603 = vmatpush.xpose.msra.mxu0 %v120
    %604 = vmatmul.f32.gmra.mxu0 %v586
    %v605 = vpop.f32.mrf.mxu0
    %v606 = vadd.f32 %v570, %v605
    %607 = vdwg.mxu0
    %vm608 = vcmask 523264
    %v609 = vsel %vm608, %v606, -inf
    %610 = vmax.xlane.f32.xlu0 %v609
    %v611 = vpop.xlane.xlu0 %610
    %v612 = vsub.f32 %v606, %v611
    %v613 = vmul.f32 %v612, 1.442695
    %v614 = vpow.pop %v613
    %v615 = vsel %vm608, %v614, 0.0
    %616 = vadd.xlane.f32.xlu0 %v615
    %v617 = vpop.xlane.xlu0 %616
    %v618 = vrcp.pop %v617
    %v619 = vmul.f32 %v614, %v618
    %v629 = vsel %vm608, %v619, 0
    %631 = vmatpush.msra.mxu0 0.0
    %632 = vmatpush.msra.mxu0 0.0
    %633 = vmatpush.msra.mxu0 0.0
    %634 = vmatpush.msra.mxu0 0.0
    %635 = vmatpush.msra.mxu0 0.0
    %636 = vmatpush.msra.mxu0 0.0
    %637 = vmatpush.msra.mxu0 0.0
    %638 = vmatpush.msra.mxu0 0.0
    %639 = vmatpush.msra.mxu0 %v585
    %640 = vmatpush.msra.mxu0 %v509
    %641 = vmatpush.msra.mxu0 %v444
    %642 = vmatpush.msra.mxu0 %v379
    %643 = vmatpush.msra.mxu0 %v314
    %644 = vmatpush.msra.mxu0 %v249
    %645 = vmatpush.msra.mxu0 %v184
    %646 = vmatpush.msra.mxu0 %v119
    %647 = vmatmul.f32.gmra.mxu0 %v629
    %v648 = vpop.f32.mrf.mxu0
    %v649 = vadd.f32 0.0, %v648
    %650 = vdwg.mxu0
    %v651 = vld [vmem:[%s5] sm:$0xff]
    %v652 = vld [vmem:[%s5 + $0x8] sm:$0xff]
    %v653 = vld [vmem:[%s5 + $0x10] sm:$0xff]
    %v654 = vld [vmem:[%s5 + $0x18] sm:$0xff]
    %v655 = vld [vmem:[%s5 + $0x20] sm:$0xff]
    %v656 = vld [vmem:[%s5 + $0x28] sm:$0xff]
    %v657 = vld [vmem:[%s5 + $0x30] sm:$0xff]
    %v658 = vld [vmem:[%s5 + $0x38] sm:$0xff]
    %v659 = vld [vmem:[%s5 + $0x40] sm:$0xff]
    %v660 = vld [vmem:[%s5 + $0x48] sm:$0xff]
    %v661 = vld [vmem:[%s5 + $0x50] sm:$0xff]
    %v662 = vld [vmem:[%s5 + $0x58] sm:$0xff]
    %v663 = vld [vmem:[%s5 + $0x60] sm:$0xff]
    %v664 = vld [vmem:[%s5 + $0x68] sm:$0xff]
    %v665 = vld [vmem:[%s5 + $0x70] sm:$0xff]
    %v666 = vld [vmem:[%s5 + $0x78] sm:$0xff]
    %667 = vmatpush.msra.mxu0 %v666
    %668 = vmatpush.msra.mxu0 %v665
    %669 = vmatpush.msra.mxu0 %v664
    %670 = vmatpush.msra.mxu0 %v663
    %671 = vmatpush.msra.mxu0 %v662
    %672 = vmatpush.msra.mxu0 %v661
    %673 = vmatpush.msra.mxu0 %v660
    %674 = vmatpush.msra.mxu0 %v659
    %675 = vmatpush.msra.mxu0 %v658
    %676 = vmatpush.msra.mxu0 %v657
    %677 = vmatpush.msra.mxu0 %v656
    %678 = vmatpush.msra.mxu0 %v655
    %679 = vmatpush.msra.mxu0 %v654
    %680 = vmatpush.msra.mxu0 %v653
    %681 = vmatpush.msra.mxu0 %v652
    %682 = vmatpush.msra.mxu0 %v651
    %683 = vmatmul.f32.gmra.mxu0 %v582
    %v684 = vpop.f32.mrf.mxu0
    %v685 = vadd.f32 0.0, %v684
    %686 = vdwg.mxu0
    %688 = vrot.lane.b32.xlu0 %v649, 16
    %v689 = vpop.permute.xlu0 %688
    %vm691 = vcmask 130048
    %v692 = vsel %vm691, %v685, %v689
    %693 = vrot.lane.b32.xlu0 %v569, 80
    %v694 = vpop.permute.xlu0 %693
    %vm696 = vcmask 392192
    %v697 = vsel %vm696, %v692, %v694
    %v698 = vld [vmem:[%s6] sm:$0xff]
    %v699 = vld [vmem:[%s6 + $0x8] sm:$0xff]
    %v700 = vld [vmem:[%s6 + $0x10] sm:$0xff]
    %v701 = vld [vmem:[%s6 + $0x18] sm:$0xff]
    %v702 = vld [vmem:[%s6 + $0x20] sm:$0xff]
    %v703 = vld [vmem:[%s6 + $0x28] sm:$0xff]
    %v704 = vld [vmem:[%s6 + $0x30] sm:$0xff]
    %v705 = vld [vmem:[%s6 + $0x38] sm:$0xff]
    %v706 = vld [vmem:[%s6 + $0x40] sm:$0xff]
    %v707 = vld [vmem:[%s6 + $0x48] sm:$0xff]
    %vm708 = vcmask 654336
    %v710 = vsel %vm708, %v697, 0
    %712 = vmatpush.msra.mxu0 0.0
    %713 = vmatpush.msra.mxu0 0.0
    %714 = vmatpush.msra.mxu0 0.0
    %715 = vmatpush.msra.mxu0 0.0
    %716 = vmatpush.msra.mxu0 0.0
    %717 = vmatpush.msra.mxu0 0.0
    %718 = vmatpush.msra.mxu0 %v707
    %719 = vmatpush.msra.mxu0 %v706
    %720 = vmatpush.msra.mxu0 %v705
    %721 = vmatpush.msra.mxu0 %v704
    %722 = vmatpush.msra.mxu0 %v703
    %723 = vmatpush.msra.mxu0 %v702
    %724 = vmatpush.msra.mxu0 %v701
    %725 = vmatpush.msra.mxu0 %v700
    %726 = vmatpush.msra.mxu0 %v699
    %727 = vmatpush.msra.mxu0 %v698
    %728 = vmatmul.f32.gmra.mxu0 %v710
    %v729 = vpop.f32.mrf.mxu0
    %v730 = vadd.f32 %v573, %v729
    %731 = vdwg.mxu0
    %v732 = vxor.u32 %v730, 2147483648
    %v733 = vmul.f32 %v732, 1.442695
    %v734 = vpow.pop %v733
    %v735 = vadd.f32 %v734, 1.0
    %v736 = vrcp.pop %v735
    %v737 = vmul.f32 %v735, %v736
    %v738 = vsub.f32 1.0, %v737
    %v739 = vmul.f32 %v736, %v738
    %v740 = vadd.f32 %v736, %v739
    %vm741 = vweird.f32 %v735
    %vm742 = vweird.f32 %v736
    %vm743 = vmor %vm741, %vm742
    %v744 = vsel %vm743, %v736, %v740
    %v745 = vand.u32 2147483647, %v735
    %vm746 = vcmp.eq.f32.partialorder %v745, 8.507059e+37
    %v747 = vand.u32 %v735, 2147483648
    %v748 = vor.u32 1.1754944e-38, %v747
    %v749 = vsel %vm746, %v748, %v744
    %v750 = vmul.f32 1.0, %v749
    %v751 = vtanh.pop %v730
    %v752 = vmul.f32 %v750, %v563
    %754 = vrot.lane.b32.xlu0 %v751, 64
    %v755 = vpop.permute.xlu0 %754
    %v757 = vmul.f32 %v750, %v755
    %759 = vrot.lane.b32.xlu0 %v757, 32
    %v760 = vpop.permute.xlu0 %759
    %v762 = vadd.f32 %v752, %v760
    %v763 = vtanh.pop %v762
    %765 = vrot.lane.b32.xlu0 %v763, 64
    %v766 = vpop.permute.xlu0 %765
    %v768 = vmul.f32 %v750, %v766
    %770 = vrot.lane.b32.xlu0 %v768, 80
    %v771 = vpop.permute.xlu0 %770
    %v773 = vsel %vm696, %v692, %v771
    %v774 = vld [vmem:[%s8] sm:$0xff]
    %v775 = vld [vmem:[%s8 + $0x8] sm:$0xff]
    %v776 = vld [vmem:[%s8 + $0x10] sm:$0xff]
    %v777 = vld [vmem:[%s8 + $0x18] sm:$0xff]
    %v778 = vld [vmem:[%s8 + $0x20] sm:$0xff]
    %v779 = vld [vmem:[%s8 + $0x28] sm:$0xff]
    %v780 = vld [vmem:[%s8 + $0x30] sm:$0xff]
    %v781 = vld [vmem:[%s8 + $0x38] sm:$0xff]
    %v782 = vld [vmem:[%s8 + $0x40] sm:$0xff]
    %v783 = vld [vmem:[%s8 + $0x48] sm:$0xff]
    %v785 = vsel %vm708, %v773, 0
    %787 = vmatpush.msra.mxu0 0.0
    %788 = vmatpush.msra.mxu0 0.0
    %789 = vmatpush.msra.mxu0 0.0
    %790 = vmatpush.msra.mxu0 0.0
    %791 = vmatpush.msra.mxu0 0.0
    %792 = vmatpush.msra.mxu0 0.0
    %793 = vmatpush.msra.mxu0 %v783
    %794 = vmatpush.msra.mxu0 %v782
    %795 = vmatpush.msra.mxu0 %v781
    %796 = vmatpush.msra.mxu0 %v780
    %797 = vmatpush.msra.mxu0 %v779
    %798 = vmatpush.msra.mxu0 %v778
    %799 = vmatpush.msra.mxu0 %v777
    %800 = vmatpush.msra.mxu0 %v776
    %801 = vmatpush.msra.mxu0 %v775
    %802 = vmatpush.msra.mxu0 %v774
    %803 = vmatmul.f32.gmra.mxu0 %v785
    %v804 = vpop.f32.mrf.mxu0
    %v805 = vadd.f32 %v577, %v804
    %806 = vdwg.mxu0
    %s807 = scalar_lea.vmem %s10, 8
    %808 = vst [vmem:[%s807] sm:$0xff] %v805
    %s809 = scalar_lea.vmem %s4, 8
    %v810 = vld [vmem:[%s809] sm:$0xff]
    %s811 = sld [smem:[#allocation2 + $0x1]]
    %p812 = scmp.eq.s32.totalorder %s811, 1
    // Predicated region
    $region46: #{seq2seq_forward.1} parent=1 // pred_check
      %p813 = pneg %p812
    $region47: #{seq2seq_forward.1} parent=1 // pred_check_branch
      %815 = sbr.rel (%p813) target = $region49
    $region48: #{seq2seq_forward.1} parent=1 // pred_region
      _
    $region49: #{seq2seq_forward.1} parent=1 // pred_fallthru
      _
    %p816 = pneg %p812
    // Predicated region
    $region50: #{seq2seq_forward.1} parent=1 // pred_check
      _
    $region51: #{seq2seq_forward.1} parent=1 // pred_check_branch
      %818 = sbr.rel (%p812) target = $region53
    $region52: #{seq2seq_forward.1} parent=1 // pred_region
      %819 = vmax.xlane.f32.xlu0 %v805
      %v820 = vpop.xlane.xlu0 %819
      %vm821 = vcmp.eq.f32.partialorder %v805, %v820
      %v822 = vsel %vm821, %v580, 128
      %v823 = vand.u32 %v822, 65535
      %v824 = vshra.s32 %v822, 16
      %v825 = vcvt.s32.f32 %v823
      %v826 = vcvt.s32.f32 %v824
      %827 = vmin.xlane.f32.xlu0 %v826
      %v828 = vpop.xlane.xlu0 %827
      %vm829 = vcmp.eq.f32.partialorder %v826, %v828
      %v830 = vsel %vm829, %v825, inf
      %831 = vmin.xlane.f32.xlu0 %v830
      %v832 = vpop.xlane.xlu0 %831
      %v833 = vcvt.f32.s32 %v832
      %v834 = vcvt.f32.s32 %v828
      %v835 = vshll.u32 %v834, 16
      %v836 = vadd.s32 %v835, %v833
      %vm837 = vcmp.eq.s32.totalorder %v580, %v836
      %v838 = vsel %vm837, 1, 0
      %v839 = vcvt.s32.f32 %v838
    $region53: #{seq2seq_forward.1} parent=1 // pred_fallthru
      %v840 = vphi %v810, %v839
    %841 = vrot.lane.b32.xlu0 %v768, 32
    %v842 = vpop.permute.xlu0 %841
    %v843 = vsel %vm53, %v842, 0
    %845 = vmatpush.xpose.msra.mxu0 0.0
    %846 = vmatpush.xpose.msra.mxu0 0.0
    %847 = vmatpush.xpose.msra.mxu0 0.0
    %848 = vmatpush.xpose.msra.mxu0 0.0
    %849 = vmatpush.xpose.msra.mxu0 0.0
    %850 = vmatpush.xpose.msra.mxu0 0.0
    %851 = vmatpush.xpose.msra.mxu0 0.0
    %852 = vmatpush.xpose.msra.mxu0 0.0
    %853 = vmatpush.xpose.msra.mxu0 %v586
    %854 = vmatpush.xpose.msra.mxu0 %v510
    %855 = vmatpush.xpose.msra.mxu0 %v445
    %856 = vmatpush.xpose.msra.mxu0 %v380
    %857 = vmatpush.xpose.msra.mxu0 %v315
    %858 = vmatpush.xpose.msra.mxu0 %v250
    %859 = vmatpush.xpose.msra.mxu0 %v185
    %860 = vmatpush.xpose.msra.mxu0 %v120
    %861 = vmatmul.f32.gmra.mxu0 %v843
    %v862 = vpop.f32.mrf.mxu0
    %v863 = vadd.f32 %v570, %v862
    %864 = vdwg.mxu0
    %v865 = vsel %vm608, %v863, -inf
    %866 = vmax.xlane.f32.xlu0 %v865
    %v867 = vpop.xlane.xlu0 %866
    %v868 = vsub.f32 %v863, %v867
    %v869 = vmul.f32 %v868, 1.442695
    %v870 = vpow.pop %v869
    %v871 = vsel %vm608, %v870, 0.0
    %872 = vadd.xlane.f32.xlu0 %v871
    %v873 = vpop.xlane.xlu0 %872
    %v874 = vrcp.pop %v873
    %v875 = vmul.f32 %v870, %v874
    %v877 = vsel %vm608, %v875, 0
    %879 = vmatpush.msra.mxu0 0.0
    %880 = vmatpush.msra.mxu0 0.0
    %881 = vmatpush.msra.mxu0 0.0
    %882 = vmatpush.msra.mxu0 0.0
    %883 = vmatpush.msra.mxu0 0.0
    %884 = vmatpush.msra.mxu0 0.0
    %885 = vmatpush.msra.mxu0 0.0
    %886 = vmatpush.msra.mxu0 0.0
    %887 = vmatpush.msra.mxu0 %v585
    %888 = vmatpush.msra.mxu0 %v509
    %889 = vmatpush.msra.mxu0 %v444
    %890 = vmatpush.msra.mxu0 %v379
    %891 = vmatpush.msra.mxu0 %v314
    %892 = vmatpush.msra.mxu0 %v249
    %893 = vmatpush.msra.mxu0 %v184
    %894 = vmatpush.msra.mxu0 %v119
    %895 = vmatmul.f32.gmra.mxu0 %v877
    %v896 = vpop.f32.mrf.mxu0
    %v897 = vadd.f32 0.0, %v896
    %898 = vdwg.mxu0
    %v899 = vld [vmem:[%s5] sm:$0xff]
    %v900 = vld [vmem:[%s5 + $0x8] sm:$0xff]
    %v901 = vld [vmem:[%s5 + $0x10] sm:$0xff]
    %v902 = vld [vmem:[%s5 + $0x18] sm:$0xff]
    %v903 = vld [vmem:[%s5 + $0x20] sm:$0xff]
    %v904 = vld [vmem:[%s5 + $0x28] sm:$0xff]
    %v905 = vld [vmem:[%s5 + $0x30] sm:$0xff]
    %v906 = vld [vmem:[%s5 + $0x38] sm:$0xff]
    %v907 = vld [vmem:[%s5 + $0x40] sm:$0xff]
    %v908 = vld [vmem:[%s5 + $0x48] sm:$0xff]
    %v909 = vld [vmem:[%s5 + $0x50] sm:$0xff]
    %v910 = vld [vmem:[%s5 + $0x58] sm:$0xff]
    %v911 = vld [vmem:[%s5 + $0x60] sm:$0xff]
    %v912 = vld [vmem:[%s5 + $0x68] sm:$0xff]
    %v913 = vld [vmem:[%s5 + $0x70] sm:$0xff]
    %v914 = vld [vmem:[%s5 + $0x78] sm:$0xff]
    %915 = vmatpush.msra.mxu0 %v914
    %916 = vmatpush.msra.mxu0 %v913
    %917 = vmatpush.msra.mxu0 %v912
    %918 = vmatpush.msra.mxu0 %v911
    %919 = vmatpush.msra.mxu0 %v910
    %920 = vmatpush.msra.mxu0 %v909
    %921 = vmatpush.msra.mxu0 %v908
    %922 = vmatpush.msra.mxu0 %v907
    %923 = vmatpush.msra.mxu0 %v906
    %924 = vmatpush.msra.mxu0 %v905
    %925 = vmatpush.msra.mxu0 %v904
    %926 = vmatpush.msra.mxu0 %v903
    %927 = vmatpush.msra.mxu0 %v902
    %928 = vmatpush.msra.mxu0 %v901
    %929 = vmatpush.msra.mxu0 %v900
    %930 = vmatpush.msra.mxu0 %v899
    %931 = vmatmul.f32.gmra.mxu0 %v840
    %v932 = vpop.f32.mrf.mxu0
    %v933 = vadd.f32 0.0, %v932
    %934 = vdwg.mxu0
    %936 = vrot.lane.b32.xlu0 %v897, 16
    %v937 = vpop.permute.xlu0 %936
    %v939 = vsel %vm691, %v933, %v937
    %v940 = vsel %vm696, %v939, %v771
    %v941 = vld [vmem:[%s6] sm:$0xff]
    %v942 = vld [vmem:[%s6 + $0x8] sm:$0xff]
    %v943 = vld [vmem:[%s6 + $0x10] sm:$0xff]
    %v944 = vld [vmem:[%s6 + $0x18] sm:$0xff]
    %v945 = vld [vmem:[%s6 + $0x20] sm:$0xff]
    %v946 = vld [vmem:[%s6 + $0x28] sm:$0xff]
    %v947 = vld [vmem:[%s6 + $0x30] sm:$0xff]
    %v948 = vld [vmem:[%s6 + $0x38] sm:$0xff]
    %v949 = vld [vmem:[%s6 + $0x40] sm:$0xff]
    %v950 = vld [vmem:[%s6 + $0x48] sm:$0xff]
    %v952 = vsel %vm708, %v940, 0
    %954 = vmatpush.msra.mxu0 0.0
    %955 = vmatpush.msra.mxu0 0.0
    %956 = vmatpush.msra.mxu0 0.0
    %957 = vmatpush.msra.mxu0 0.0
    %958 = vmatpush.msra.mxu0 0.0
    %959 = vmatpush.msra.mxu0 0.0
    %960 = vmatpush.msra.mxu0 %v950
    %961 = vmatpush.msra.mxu0 %v949
    %962 = vmatpush.msra.mxu0 %v948
    %963 = vmatpush.msra.mxu0 %v947
    %964 = vmatpush.msra.mxu0 %v946
    %965 = vmatpush.msra.mxu0 %v945
    %966 = vmatpush.msra.mxu0 %v944
    %967 = vmatpush.msra.mxu0 %v943
    %968 = vmatpush.msra.mxu0 %v942
    %969 = vmatpush.msra.mxu0 %v941
    %970 = vmatmul.f32.gmra.mxu0 %v952
    %v971 = vpop.f32.mrf.mxu0
    %v972 = vadd.f32 %v573, %v971
    %973 = vdwg.mxu0
    %v974 = vxor.u32 %v972, 2147483648
    %v975 = vmul.f32 %v974, 1.442695
    %v976 = vpow.pop %v975
    %v977 = vadd.f32 %v976, 1.0
    %v978 = vrcp.pop %v977
    %v979 = vmul.f32 %v977, %v978
    %v980 = vsub.f32 1.0, %v979
    %v981 = vmul.f32 %v978, %v980
    %v982 = vadd.f32 %v978, %v981
    %vm983 = vweird.f32 %v977
    %vm984 = vweird.f32 %v978
    %vm985 = vmor %vm983, %vm984
    %v986 = vsel %vm985, %v978, %v982
    %v987 = vand.u32 2147483647, %v977
    %vm988 = vcmp.eq.f32.partialorder %v987, 8.507059e+37
    %v989 = vand.u32 %v977, 2147483648
    %v990 = vor.u32 1.1754944e-38, %v989
    %v991 = vsel %vm988, %v990, %v986
    %v992 = vmul.f32 1.0, %v991
    %v993 = vtanh.pop %v972
    %v994 = vmul.f32 %v992, %v762
    %996 = vrot.lane.b32.xlu0 %v993, 64
    %v997 = vpop.permute.xlu0 %996
    %v999 = vmul.f32 %v992, %v997
    %1001 = vrot.lane.b32.xlu0 %v999, 32
    %v1002 = vpop.permute.xlu0 %1001
    %v1004 = vadd.f32 %v994, %v1002
    %v1005 = vtanh.pop %v1004
    %1007 = vrot.lane.b32.xlu0 %v1005, 64
    %v1008 = vpop.permute.xlu0 %1007
    %v1010 = vmul.f32 %v992, %v1008
    %1012 = vrot.lane.b32.xlu0 %v1010, 80
    %v1013 = vpop.permute.xlu0 %1012
    %v1015 = vsel %vm696, %v939, %v1013
    %v1016 = vld [vmem:[%s8] sm:$0xff]
    %v1017 = vld [vmem:[%s8 + $0x8] sm:$0xff]
    %v1018 = vld [vmem:[%s8 + $0x10] sm:$0xff]
    %v1019 = vld [vmem:[%s8 + $0x18] sm:$0xff]
    %v1020 = vld [vmem:[%s8 + $0x20] sm:$0xff]
    %v1021 = vld [vmem:[%s8 + $0x28] sm:$0xff]
    %v1022 = vld [vmem:[%s8 + $0x30] sm:$0xff]
    %v1023 = vld [vmem:[%s8 + $0x38] sm:$0xff]
    %v1024 = vld [vmem:[%s8 + $0x40] sm:$0xff]
    %v1025 = vld [vmem:[%s8 + $0x48] sm:$0xff]
    %v1027 = vsel %vm708, %v1015, 0
    %1029 = vmatpush.msra.mxu0 0.0
    %1030 = vmatpush.msra.mxu0 0.0
    %1031 = vmatpush.msra.mxu0 0.0
    %1032 = vmatpush.msra.mxu0 0.0
    %1033 = vmatpush.msra.mxu0 0.0
    %1034 = vmatpush.msra.mxu0 0.0
    %1035 = vmatpush.msra.mxu0 %v1025
    %1036 = vmatpush.msra.mxu0 %v1024
    %1037 = vmatpush.msra.mxu0 %v1023
    %1038 = vmatpush.msra.mxu0 %v1022
    %1039 = vmatpush.msra.mxu0 %v1021
    %1040 = vmatpush.msra.mxu0 %v1020
    %1041 = vmatpush.msra.mxu0 %v1019
    %1042 = vmatpush.msra.mxu0 %v1018
    %1043 = vmatpush.msra.mxu0 %v1017
    %1044 = vmatpush.msra.mxu0 %v1016
    %1045 = vmatmul.f32.gmra.mxu0 %v1027
    %v1046 = vpop.f32.mrf.mxu0
    %v1047 = vadd.f32 %v577, %v1046
    %1048 = vdwg.mxu0
    %s1049 = scalar_lea.vmem %s10, 16
    %1050 = vst [vmem:[%s1049] sm:$0xff] %v1047
    %s1051 = scalar_lea.vmem %s4, 16
    %v1052 = vld [vmem:[%s1051] sm:$0xff]
    %s1053 = sld [smem:[#allocation2 + $0x2]]
    %p1054 = scmp.eq.s32.totalorder %s1053, 1
    // Predicated region
    $region54: #{seq2seq_forward.1} parent=1 // pred_check
      %p1055 = pneg %p1054
    $region55: #{seq2seq_forward.1} parent=1 // pred_check_branch
      %1057 = sbr.rel (%p1055) target = $region57
    $region56: #{seq2seq_forward.1} parent=1 // pred_region
      _
    $region57: #{seq2seq_forward.1} parent=1 // pred_fallthru
      _
    %p1058 = pneg %p1054
    // Predicated region
    $region58: #{seq2seq_forward.1} parent=1 // pred_check
      _
    $region59: #{seq2seq_forward.1} parent=1 // pred_check_branch
      %1060 = sbr.rel (%p1054) target = $region61
    $region60: #{seq2seq_forward.1} parent=1 // pred_region
      %1061 = vmax.xlane.f32.xlu0 %v1047
      %v1062 = vpop.xlane.xlu0 %1061
      %vm1063 = vcmp.eq.f32.partialorder %v1047, %v1062
      %v1064 = vsel %vm1063, %v580, 128
      %v1065 = vand.u32 %v1064, 65535
      %v1066 = vshra.s32 %v1064, 16
      %v1067 = vcvt.s32.f32 %v1065
      %v1068 = vcvt.s32.f32 %v1066
      %1069 = vmin.xlane.f32.xlu0 %v1068
      %v1070 = vpop.xlane.xlu0 %1069
      %vm1071 = vcmp.eq.f32.partialorder %v1068, %v1070
      %v1072 = vsel %vm1071, %v1067, inf
      %1073 = vmin.xlane.f32.xlu0 %v1072
      %v1074 = vpop.xlane.xlu0 %1073
      %v1075 = vcvt.f32.s32 %v1074
      %v1076 = vcvt.f32.s32 %v1070
      %v1077 = vshll.u32 %v1076, 16
      %v1078 = vadd.s32 %v1077, %v1075
      %vm1079 = vcmp.eq.s32.totalorder %v580, %v1078
      %v1080 = vsel %vm1079, 1, 0
      %v1081 = vcvt.s32.f32 %v1080
    $region61: #{seq2seq_forward.1} parent=1 // pred_fallthru
      %v1082 = vphi %v1052, %v1081
    %1083 = vrot.lane.b32.xlu0 %v1010, 32
    %v1084 = vpop.permute.xlu0 %1083
    %v1085 = vsel %vm53, %v1084, 0
    %1087 = vmatpush.xpose.msra.mxu0 0.0
    %1088 = vmatpush.xpose.msra.mxu0 0.0
    %1089 = vmatpush.xpose.msra.mxu0 0.0
    %1090 = vmatpush.xpose.msra.mxu0 0.0
    %1091 = vmatpush.xpose.msra.mxu0 0.0
    %1092 = vmatpush.xpose.msra.mxu0 0.0
    %1093 = vmatpush.xpose.msra.mxu0 0.0
    %1094 = vmatpush.xpose.msra.mxu0 0.0
    %1095 = vmatpush.xpose.msra.mxu0 %v586
    %1096 = vmatpush.xpose.msra.mxu0 %v510
    %1097 = vmatpush.xpose.msra.mxu0 %v445
    %1098 = vmatpush.xpose.msra.mxu0 %v380
    %1099 = vmatpush.xpose.msra.mxu0 %v315
    %1100 = vmatpush.xpose.msra.mxu0 %v250
    %1101 = vmatpush.xpose.msra.mxu0 %v185
    %1102 = vmatpush.xpose.msra.mxu0 %v120
    %1103 = vmatmul.f32.gmra.mxu0 %v1085
    %v1104 = vpop.f32.mrf.mxu0
    %v1105 = vadd.f32 %v570, %v1104
    %1106 = vdwg.mxu0
    %v1107 = vsel %vm608, %v1105, -inf
    %1108 = vmax.xlane.f32.xlu0 %v1107
    %v1109 = vpop.xlane.xlu0 %1108
    %v1110 = vsub.f32 %v1105, %v1109
    %v1111 = vmul.f32 %v1110, 1.442695
    %v1112 = vpow.pop %v1111
    %v1113 = vsel %vm608, %v1112, 0.0
    %1114 = vadd.xlane.f32.xlu0 %v1113
    %v1115 = vpop.xlane.xlu0 %1114
    %v1116 = vrcp.pop %v1115
    %v1117 = vmul.f32 %v1112, %v1116
    %v1119 = vsel %vm608, %v1117, 0
    %1121 = vmatpush.msra.mxu0 0.0
    %1122 = vmatpush.msra.mxu0 0.0
    %1123 = vmatpush.msra.mxu0 0.0
    %1124 = vmatpush.msra.mxu0 0.0
    %1125 = vmatpush.msra.mxu0 0.0
    %1126 = vmatpush.msra.mxu0 0.0
    %1127 = vmatpush.msra.mxu0 0.0
    %1128 = vmatpush.msra.mxu0 0.0
    %1129 = vmatpush.msra.mxu0 %v585
    %1130 = vmatpush.msra.mxu0 %v509
    %1131 = vmatpush.msra.mxu0 %v444
    %1132 = vmatpush.msra.mxu0 %v379
    %1133 = vmatpush.msra.mxu0 %v314
    %1134 = vmatpush.msra.mxu0 %v249
    %1135 = vmatpush.msra.mxu0 %v184
    %1136 = vmatpush.msra.mxu0 %v119
    %1137 = vmatmul.f32.gmra.mxu0 %v1119
    %v1138 = vpop.f32.mrf.mxu0
    %v1139 = vadd.f32 0.0, %v1138
    %1140 = vdwg.mxu0
    %v1141 = vld [vmem:[%s5] sm:$0xff]
    %v1142 = vld [vmem:[%s5 + $0x8] sm:$0xff]
    %v1143 = vld [vmem:[%s5 + $0x10] sm:$0xff]
    %v1144 = vld [vmem:[%s5 + $0x18] sm:$0xff]
    %v1145 = vld [vmem:[%s5 + $0x20] sm:$0xff]
    %v1146 = vld [vmem:[%s5 + $0x28] sm:$0xff]
    %v1147 = vld [vmem:[%s5 + $0x30] sm:$0xff]
    %v1148 = vld [vmem:[%s5 + $0x38] sm:$0xff]
    %v1149 = vld [vmem:[%s5 + $0x40] sm:$0xff]
    %v1150 = vld [vmem:[%s5 + $0x48] sm:$0xff]
    %v1151 = vld [vmem:[%s5 + $0x50] sm:$0xff]
    %v1152 = vld [vmem:[%s5 + $0x58] sm:$0xff]
    %v1153 = vld [vmem:[%s5 + $0x60] sm:$0xff]
    %v1154 = vld [vmem:[%s5 + $0x68] sm:$0xff]
    %v1155 = vld [vmem:[%s5 + $0x70] sm:$0xff]
    %v1156 = vld [vmem:[%s5 + $0x78] sm:$0xff]
    %1157 = vmatpush.msra.mxu0 %v1156
    %1158 = vmatpush.msra.mxu0 %v1155
    %1159 = vmatpush.msra.mxu0 %v1154
    %1160 = vmatpush.msra.mxu0 %v1153
    %1161 = vmatpush.msra.mxu0 %v1152
    %1162 = vmatpush.msra.mxu0 %v1151
    %1163 = vmatpush.msra.mxu0 %v1150
    %1164 = vmatpush.msra.mxu0 %v1149
    %1165 = vmatpush.msra.mxu0 %v1148
    %1166 = vmatpush.msra.mxu0 %v1147
    %1167 = vmatpush.msra.mxu0 %v1146
    %1168 = vmatpush.msra.mxu0 %v1145
    %1169 = vmatpush.msra.mxu0 %v1144
    %1170 = vmatpush.msra.mxu0 %v1143
    %1171 = vmatpush.msra.mxu0 %v1142
    %1172 = vmatpush.msra.mxu0 %v1141
    %1173 = vmatmul.f32.gmra.mxu0 %v1082
    %v1174 = vpop.f32.mrf.mxu0
    %v1175 = vadd.f32 0.0, %v1174
    %1176 = vdwg.mxu0
    %1178 = vrot.lane.b32.xlu0 %v1139, 16
    %v1179 = vpop.permute.xlu0 %1178
    %v1181 = vsel %vm691, %v1175, %v1179
    %v1182 = vsel %vm696, %v1181, %v1013
    %v1183 = vld [vmem:[%s6] sm:$0xff]
    %v1184 = vld [vmem:[%s6 + $0x8] sm:$0xff]
    %v1185 = vld [vmem:[%s6 + $0x10] sm:$0xff]
    %v1186 = vld [vmem:[%s6 + $0x18] sm:$0xff]
    %v1187 = vld [vmem:[%s6 + $0x20] sm:$0xff]
    %v1188 = vld [vmem:[%s6 + $0x28] sm:$0xff]
    %v1189 = vld [vmem:[%s6 + $0x30] sm:$0xff]
    %v1190 = vld [vmem:[%s6 + $0x38] sm:$0xff]
    %v1191 = vld [vmem:[%s6 + $0x40] sm:$0xff]
    %v1192 = vld [vmem:[%s6 + $0x48] sm:$0xff]
    %v1194 = vsel %vm708, %v1182, 0
    %1196 = vmatpush.msra.mxu0 0.0
    %1197 = vmatpush.msra.mxu0 0.0
    %1198 = vmatpush.msra.mxu0 0.0
    %1199 = vmatpush.msra.mxu0 0.0
    %1200 = vmatpush.msra.mxu0 0.0
    %1201 = vmatpush.msra.mxu0 0.0
    %1202 = vmatpush.msra.mxu0 %v1192
    %1203 = vmatpush.msra.mxu0 %v1191
    %1204 = vmatpush.msra.mxu0 %v1190
    %1205 = vmatpush.msra.mxu0 %v1189
    %1206 = vmatpush.msra.mxu0 %v1188
    %1207 = vmatpush.msra.mxu0 %v1187
    %1208 = vmatpush.msra.mxu0 %v1186
    %1209 = vmatpush.msra.mxu0 %v1185
    %1210 = vmatpush.msra.mxu0 %v1184
    %1211 = vmatpush.msra.mxu0 %v1183
    %1212 = vmatmul.f32.gmra.mxu0 %v1194
    %v1213 = vpop.f32.mrf.mxu0
    %v1214 = vadd.f32 %v573, %v1213
    %1215 = vdwg.mxu0
    %v1216 = vxor.u32 %v1214, 2147483648
    %v1217 = vmul.f32 %v1216, 1.442695
    %v1218 = vpow.pop %v1217
    %v1219 = vadd.f32 %v1218, 1.0
    %v1220 = vrcp.pop %v1219
    %v1221 = vmul.f32 %v1219, %v1220
    %v1222 = vsub.f32 1.0, %v1221
    %v1223 = vmul.f32 %v1220, %v1222
    %v1224 = vadd.f32 %v1220, %v1223
    %vm1225 = vweird.f32 %v1219
    %vm1226 = vweird.f32 %v1220
    %vm1227 = vmor %vm1225, %vm1226
    %v1228 = vsel %vm1227, %v1220, %v1224
    %v1229 = vand.u32 2147483647, %v1219
    %vm1230 = vcmp.eq.f32.partialorder %v1229, 8.507059e+37
    %v1231 = vand.u32 %v1219, 2147483648
    %v1232 = vor.u32 1.1754944e-38, %v1231
    %v1233 = vsel %vm1230, %v1232, %v1228
    %v1234 = vmul.f32 1.0, %v1233
    %v1235 = vtanh.pop %v1214
    %v1236 = vmul.f32 %v1234, %v1004
    %1238 = vrot.lane.b32.xlu0 %v1235, 64
    %v1239 = vpop.permute.xlu0 %1238
    %v1241 = vmul.f32 %v1234, %v1239
    %1243 = vrot.lane.b32.xlu0 %v1241, 32
    %v1244 = vpop.permute.xlu0 %1243
    %v1246 = vadd.f32 %v1236, %v1244
    %v1247 = vtanh.pop %v1246
    %1249 = vrot.lane.b32.xlu0 %v1247, 64
    %v1250 = vpop.permute.xlu0 %1249
    %v1252 = vmul.f32 %v1234, %v1250
    %1254 = vrot.lane.b32.xlu0 %v1252, 80
    %v1255 = vpop.permute.xlu0 %1254
    %v1257 = vsel %vm696, %v1181, %v1255
    %v1258 = vld [vmem:[%s8] sm:$0xff]
    %v1259 = vld [vmem:[%s8 + $0x8] sm:$0xff]
    %v1260 = vld [vmem:[%s8 + $0x10] sm:$0xff]
    %v1261 = vld [vmem:[%s8 + $0x18] sm:$0xff]
    %v1262 = vld [vmem:[%s8 + $0x20] sm:$0xff]
    %v1263 = vld [vmem:[%s8 + $0x28] sm:$0xff]
    %v1264 = vld [vmem:[%s8 + $0x30] sm:$0xff]
    %v1265 = vld [vmem:[%s8 + $0x38] sm:$0xff]
    %v1266 = vld [vmem:[%s8 + $0x40] sm:$0xff]
    %v1267 = vld [vmem:[%s8 + $0x48] sm:$0xff]
    %v1269 = vsel %vm708, %v1257, 0
    %1271 = vmatpush.msra.mxu0 0.0
    %1272 = vmatpush.msra.mxu0 0.0
    %1273 = vmatpush.msra.mxu0 0.0
    %1274 = vmatpush.msra.mxu0 0.0
    %1275 = vmatpush.msra.mxu0 0.0
    %1276 = vmatpush.msra.mxu0 0.0
    %1277 = vmatpush.msra.mxu0 %v1267
    %1278 = vmatpush.msra.mxu0 %v1266
    %1279 = vmatpush.msra.mxu0 %v1265
    %1280 = vmatpush.msra.mxu0 %v1264
    %1281 = vmatpush.msra.mxu0 %v1263
    %1282 = vmatpush.msra.mxu0 %v1262
    %1283 = vmatpush.msra.mxu0 %v1261
    %1284 = vmatpush.msra.mxu0 %v1260
    %1285 = vmatpush.msra.mxu0 %v1259
    %1286 = vmatpush.msra.mxu0 %v1258
    %1287 = vmatmul.f32.gmra.mxu0 %v1269
    %v1288 = vpop.f32.mrf.mxu0
    %v1289 = vadd.f32 %v577, %v1288
    %1290 = vdwg.mxu0
    %s1291 = scalar_lea.vmem %s10, 24
    %1292 = vst [vmem:[%s1291] sm:$0xff] %v1289
    %s1293 = scalar_lea.vmem %s4, 24
    %v1294 = vld [vmem:[%s1293] sm:$0xff]
    %s1295 = sld [smem:[#allocation2 + $0x3]]
    %p1296 = scmp.eq.s32.totalorder %s1295, 1
    // Predicated region
    $region62: #{seq2seq_forward.1} parent=1 // pred_check
      %p1297 = pneg %p1296
    $region63: #{seq2seq_forward.1} parent=1 // pred_check_branch
      %1299 = sbr.rel (%p1297) target = $region65
    $region64: #{seq2seq_forward.1} parent=1 // pred_region
      _
    $region65: #{seq2seq_forward.1} parent=1 // pred_fallthru
      _
    %p1300 = pneg %p1296
    // Predicated region
    $region66: #{seq2seq_forward.1} parent=1 // pred_check
      _
    $region67: #{seq2seq_forward.1} parent=1 // pred_check_branch
      %1302 = sbr.rel (%p1296) target = $region69
    $region68: #{seq2seq_forward.1} parent=1 // pred_region
      %1303 = vmax.xlane.f32.xlu0 %v1289
      %v1304 = vpop.xlane.xlu0 %1303
      %vm1305 = vcmp.eq.f32.partialorder %v1289, %v1304
      %v1306 = vsel %vm1305, %v580, 128
      %v1307 = vand.u32 %v1306, 65535
      %v1308 = vshra.s32 %v1306, 16
      %v1309 = vcvt.s32.f32 %v1307
      %v1310 = vcvt.s32.f32 %v1308
      %1311 = vmin.xlane.f32.xlu0 %v1310
      %v1312 = vpop.xlane.xlu0 %1311
      %vm1313 = vcmp.eq.f32.partialorder %v1310, %v1312
      %v1314 = vsel %vm1313, %v1309, inf
      %1315 = vmin.xlane.f32.xlu0 %v1314
      %v1316 = vpop.xlane.xlu0 %1315
      %v1317 = vcvt.f32.s32 %v1316
      %v1318 = vcvt.f32.s32 %v1312
      %v1319 = vshll.u32 %v1318, 16
      %v1320 = vadd.s32 %v1319, %v1317
      %vm1321 = vcmp.eq.s32.totalorder %v580, %v1320
      %v1322 = vsel %vm1321, 1, 0
      %v1323 = vcvt.s32.f32 %v1322
    $region69: #{seq2seq_forward.1} parent=1 // pred_fallthru
      %v1324 = vphi %v1294, %v1323
    %1325 = vrot.lane.b32.xlu0 %v1252, 32
    %v1326 = vpop.permute.xlu0 %1325
    %v1327 = vsel %vm53, %v1326, 0
    %1329 = vmatpush.xpose.msra.mxu0 0.0
    %1330 = vmatpush.xpose.msra.mxu0 0.0
    %1331 = vmatpush.xpose.msra.mxu0 0.0
    %1332 = vmatpush.xpose.msra.mxu0 0.0
    %1333 = vmatpush.xpose.msra.mxu0 0.0
    %1334 = vmatpush.xpose.msra.mxu0 0.0
    %1335 = vmatpush.xpose.msra.mxu0 0.0
    %1336 = vmatpush.xpose.msra.mxu0 0.0
    %1337 = vmatpush.xpose.msra.mxu0 %v586
    %1338 = vmatpush.xpose.msra.mxu0 %v510
    %1339 = vmatpush.xpose.msra.mxu0 %v445
    %1340 = vmatpush.xpose.msra.mxu0 %v380
    %1341 = vmatpush.xpose.msra.mxu0 %v315
    %1342 = vmatpush.xpose.msra.mxu0 %v250
    %1343 = vmatpush.xpose.msra.mxu0 %v185
    %1344 = vmatpush.xpose.msra.mxu0 %v120
    %1345 = vmatmul.f32.gmra.mxu0 %v1327
    %v1346 = vpop.f32.mrf.mxu0
    %v1347 = vadd.f32 %v570, %v1346
    %1348 = vdwg.mxu0
    %v1349 = vsel %vm608, %v1347, -inf
    %1350 = vmax.xlane.f32.xlu0 %v1349
    %v1351 = vpop.xlane.xlu0 %1350
    %v1352 = vsub.f32 %v1347, %v1351
    %v1353 = vmul.f32 %v1352, 1.442695
    %v1354 = vpow.pop %v1353
    %v1355 = vsel %vm608, %v1354, 0.0
    %1356 = vadd.xlane.f32.xlu0 %v1355
    %v1357 = vpop.xlane.xlu0 %1356
    %v1358 = vrcp.pop %v1357
    %v1359 = vmul.f32 %v1354, %v1358
    %v1361 = vsel %vm608, %v1359, 0
    %1363 = vmatpush.msra.mxu0 0.0
    %1364 = vmatpush.msra.mxu0 0.0
    %1365 = vmatpush.msra.mxu0 0.0
    %1366 = vmatpush.msra.mxu0 0.0
    %1367 = vmatpush.msra.mxu0 0.0
    %1368 = vmatpush.msra.mxu0 0.0
    %1369 = vmatpush.msra.mxu0 0.0
    %1370 = vmatpush.msra.mxu0 0.0
    %1371 = vmatpush.msra.mxu0 %v585
    %1372 = vmatpush.msra.mxu0 %v509
    %1373 = vmatpush.msra.mxu0 %v444
    %1374 = vmatpush.msra.mxu0 %v379
    %1375 = vmatpush.msra.mxu0 %v314
    %1376 = vmatpush.msra.mxu0 %v249
    %1377 = vmatpush.msra.mxu0 %v184
    %1378 = vmatpush.msra.mxu0 %v119
    %1379 = vmatmul.f32.gmra.mxu0 %v1361
    %v1380 = vpop.f32.mrf.mxu0
    %v1381 = vadd.f32 0.0, %v1380
    %1382 = vdwg.mxu0
    %v1383 = vld [vmem:[%s5] sm:$0xff]
    %v1384 = vld [vmem:[%s5 + $0x8] sm:$0xff]
    %v1385 = vld [vmem:[%s5 + $0x10] sm:$0xff]
    %v1386 = vld [vmem:[%s5 + $0x18] sm:$0xff]
    %v1387 = vld [vmem:[%s5 + $0x20] sm:$0xff]
    %v1388 = vld [vmem:[%s5 + $0x28] sm:$0xff]
    %v1389 = vld [vmem:[%s5 + $0x30] sm:$0xff]
    %v1390 = vld [vmem:[%s5 + $0x38] sm:$0xff]
    %v1391 = vld [vmem:[%s5 + $0x40] sm:$0xff]
    %v1392 = vld [vmem:[%s5 + $0x48] sm:$0xff]
    %v1393 = vld [vmem:[%s5 + $0x50] sm:$0xff]
    %v1394 = vld [vmem:[%s5 + $0x58] sm:$0xff]
    %v1395 = vld [vmem:[%s5 + $0x60] sm:$0xff]
    %v1396 = vld [vmem:[%s5 + $0x68] sm:$0xff]
    %v1397 = vld [vmem:[%s5 + $0x70] sm:$0xff]
    %v1398 = vld [vmem:[%s5 + $0x78] sm:$0xff]
    %1399 = vmatpush.msra.mxu0 %v1398
    %1400 = vmatpush.msra.mxu0 %v1397
    %1401 = vmatpush.msra.mxu0 %v1396
    %1402 = vmatpush.msra.mxu0 %v1395
    %1403 = vmatpush.msra.mxu0 %v1394
    %1404 = vmatpush.msra.mxu0 %v1393
    %1405 = vmatpush.msra.mxu0 %v1392
    %1406 = vmatpush.msra.mxu0 %v1391
    %1407 = vmatpush.msra.mxu0 %v1390
    %1408 = vmatpush.msra.mxu0 %v1389
    %1409 = vmatpush.msra.mxu0 %v1388
    %1410 = vmatpush.msra.mxu0 %v1387
    %1411 = vmatpush.msra.mxu0 %v1386
    %1412 = vmatpush.msra.mxu0 %v1385
    %1413 = vmatpush.msra.mxu0 %v1384
    %1414 = vmatpush.msra.mxu0 %v1383
    %1415 = vmatmul.f32.gmra.mxu0 %v1324
    %v1416 = vpop.f32.mrf.mxu0
    %v1417 = vadd.f32 0.0, %v1416
    %1418 = vdwg.mxu0
    %1420 = vrot.lane.b32.xlu0 %v1381, 16
    %v1421 = vpop.permute.xlu0 %1420
    %v1423 = vsel %vm691, %v1417, %v1421
    %v1424 = vsel %vm696, %v1423, %v1255
    %v1425 = vld [vmem:[%s6] sm:$0xff]
    %v1426 = vld [vmem:[%s6 + $0x8] sm:$0xff]
    %v1427 = vld [vmem:[%s6 + $0x10] sm:$0xff]
    %v1428 = vld [vmem:[%s6 + $0x18] sm:$0xff]
    %v1429 = vld [vmem:[%s6 + $0x20] sm:$0xff]
    %v1430 = vld [vmem:[%s6 + $0x28] sm:$0xff]
    %v1431 = vld [vmem:[%s6 + $0x30] sm:$0xff]
    %v1432 = vld [vmem:[%s6 + $0x38] sm:$0xff]
    %v1433 = vld [vmem:[%s6 + $0x40] sm:$0xff]
    %v1434 = vld [vmem:[%s6 + $0x48] sm:$0xff]
    %v1436 = vsel %vm708, %v1424, 0
    %1438 = vmatpush.msra.mxu0 0.0
    %1439 = vmatpush.msra.mxu0 0.0
    %1440 = vmatpush.msra.mxu0 0.0
    %1441 = vmatpush.msra.mxu0 0.0
    %1442 = vmatpush.msra.mxu0 0.0
    %1443 = vmatpush.msra.mxu0 0.0
    %1444 = vmatpush.msra.mxu0 %v1434
    %1445 = vmatpush.msra.mxu0 %v1433
    %1446 = vmatpush.msra.mxu0 %v1432
    %1447 = vmatpush.msra.mxu0 %v1431
    %1448 = vmatpush.msra.mxu0 %v1430
    %1449 = vmatpush.msra.mxu0 %v1429
    %1450 = vmatpush.msra.mxu0 %v1428
    %1451 = vmatpush.msra.mxu0 %v1427
    %1452 = vmatpush.msra.mxu0 %v1426
    %1453 = vmatpush.msra.mxu0 %v1425
    %1454 = vmatmul.f32.gmra.mxu0 %v1436
    %v1455 = vpop.f32.mrf.mxu0
    %v1456 = vadd.f32 %v573, %v1455
    %1457 = vdwg.mxu0
    %v1458 = vxor.u32 %v1456, 2147483648
    %v1459 = vmul.f32 %v1458, 1.442695
    %v1460 = vpow.pop %v1459
    %v1461 = vadd.f32 %v1460, 1.0
    %v1462 = vrcp.pop %v1461
    %v1463 = vmul.f32 %v1461, %v1462
    %v1464 = vsub.f32 1.0, %v1463
    %v1465 = vmul.f32 %v1462, %v1464
    %v1466 = vadd.f32 %v1462, %v1465
    %vm1467 = vweird.f32 %v1461
    %vm1468 = vweird.f32 %v1462
    %vm1469 = vmor %vm1467, %vm1468
    %v1470 = vsel %vm1469, %v1462, %v1466
    %v1471 = vand.u32 2147483647, %v1461
    %vm1472 = vcmp.eq.f32.partialorder %v1471, 8.507059e+37
    %v1473 = vand.u32 %v1461, 2147483648
    %v1474 = vor.u32 1.1754944e-38, %v1473
    %v1475 = vsel %vm1472, %v1474, %v1470
    %v1476 = vmul.f32 1.0, %v1475
    %v1477 = vtanh.pop %v1456
    %v1478 = vmul.f32 %v1476, %v1246
    %1480 = vrot.lane.b32.xlu0 %v1477, 64
    %v1481 = vpop.permute.xlu0 %1480
    %v1483 = vmul.f32 %v1476, %v1481
    %1485 = vrot.lane.b32.xlu0 %v1483, 32
    %v1486 = vpop.permute.xlu0 %1485
    %v1488 = vadd.f32 %v1478, %v1486
    %v1489 = vtanh.pop %v1488
    %1491 = vrot.lane.b32.xlu0 %v1489, 64
    %v1492 = vpop.permute.xlu0 %1491
    %v1494 = vmul.f32 %v1476, %v1492
    %1496 = vrot.lane.b32.xlu0 %v1494, 80
    %v1497 = vpop.permute.xlu0 %1496
    %v1499 = vsel %vm696, %v1423, %v1497
    %v1500 = vld [vmem:[%s8] sm:$0xff]
    %v1501 = vld [vmem:[%s8 + $0x8] sm:$0xff]
    %v1502 = vld [vmem:[%s8 + $0x10] sm:$0xff]
    %v1503 = vld [vmem:[%s8 + $0x18] sm:$0xff]
    %v1504 = vld [vmem:[%s8 + $0x20] sm:$0xff]
    %v1505 = vld [vmem:[%s8 + $0x28] sm:$0xff]
    %v1506 = vld [vmem:[%s8 + $0x30] sm:$0xff]
    %v1507 = vld [vmem:[%s8 + $0x38] sm:$0xff]
    %v1508 = vld [vmem:[%s8 + $0x40] sm:$0xff]
    %v1509 = vld [vmem:[%s8 + $0x48] sm:$0xff]
    %v1511 = vsel %vm708, %v1499, 0
    %1513 = vmatpush.msra.mxu0 0.0
    %1514 = vmatpush.msra.mxu0 0.0
    %1515 = vmatpush.msra.mxu0 0.0
    %1516 = vmatpush.msra.mxu0 0.0
    %1517 = vmatpush.msra.mxu0 0.0
    %1518 = vmatpush.msra.mxu0 0.0
    %1519 = vmatpush.msra.mxu0 %v1509
    %1520 = vmatpush.msra.mxu0 %v1508
    %1521 = vmatpush.msra.mxu0 %v1507
    %1522 = vmatpush.msra.mxu0 %v1506
    %1523 = vmatpush.msra.mxu0 %v1505
    %1524 = vmatpush.msra.mxu0 %v1504
    %1525 = vmatpush.msra.mxu0 %v1503
    %1526 = vmatpush.msra.mxu0 %v1502
    %1527 = vmatpush.msra.mxu0 %v1501
    %1528 = vmatpush.msra.mxu0 %v1500
    %1529 = vmatmul.f32.gmra.mxu0 %v1511
    %v1530 = vpop.f32.mrf.mxu0
    %v1531 = vadd.f32 %v577, %v1530
    %1532 = vdwg.mxu0
    %s1533 = scalar_lea.vmem %s10, 32
    %1534 = vst [vmem:[%s1533] sm:$0xff] %v1531
    %s1535 = scalar_lea.vmem %s4, 32
    %v1536 = vld [vmem:[%s1535] sm:$0xff]
    %s1537 = sld [smem:[#allocation2 + $0x4]]
    %p1538 = scmp.eq.s32.totalorder %s1537, 1
    // Predicated region
    $region70: #{seq2seq_forward.1} parent=1 // pred_check
      %p1539 = pneg %p1538
    $region71: #{seq2seq_forward.1} parent=1 // pred_check_branch
      %1541 = sbr.rel (%p1539) target = $region73
    $region72: #{seq2seq_forward.1} parent=1 // pred_region
      _
    $region73: #{seq2seq_forward.1} parent=1 // pred_fallthru
      _
    %p1542 = pneg %p1538
    // Predicated region
    $region74: #{seq2seq_forward.1} parent=1 // pred_check
      _
    $region75: #{seq2seq_forward.1} parent=1 // pred_check_branch
      %1544 = sbr.rel (%p1538) target = $region77
    $region76: #{seq2seq_forward.1} parent=1 // pred_region
      %1545 = vmax.xlane.f32.xlu0 %v1531
      %v1546 = vpop.xlane.xlu0 %1545
      %vm1547 = vcmp.eq.f32.partialorder %v1531, %v1546
      %v1548 = vsel %vm1547, %v580, 128
      %v1549 = vand.u32 %v1548, 65535
      %v1550 = vshra.s32 %v1548, 16
      %v1551 = vcvt.s32.f32 %v1549
      %v1552 = vcvt.s32.f32 %v1550
      %1553 = vmin.xlane.f32.xlu0 %v1552
      %v1554 = vpop.xlane.xlu0 %1553
      %vm1555 = vcmp.eq.f32.partialorder %v1552, %v1554
      %v1556 = vsel %vm1555, %v1551, inf
      %1557 = vmin.xlane.f32.xlu0 %v1556
      %v1558 = vpop.xlane.xlu0 %1557
      %v1559 = vcvt.f32.s32 %v1558
      %v1560 = vcvt.f32.s32 %v1554
      %v1561 = vshll.u32 %v1560, 16
      %v1562 = vadd.s32 %v1561, %v1559
      %vm1563 = vcmp.eq.s32.totalorder %v580, %v1562
      %v1564 = vsel %vm1563, 1, 0
      %v1565 = vcvt.s32.f32 %v1564
    $region77: #{seq2seq_forward.1} parent=1 // pred_fallthru
      %v1566 = vphi %v1536, %v1565
    %1567 = vrot.lane.b32.xlu0 %v1494, 32
    %v1568 = vpop.permute.xlu0 %1567
    %v1569 = vsel %vm53, %v1568, 0
    %1571 = vmatpush.xpose.msra.mxu0 0.0
    %1572 = vmatpush.xpose.msra.mxu0 0.0
    %1573 = vmatpush.xpose.msra.mxu0 0.0
    %1574 = vmatpush.xpose.msra.mxu0 0.0
    %1575 = vmatpush.xpose.msra.mxu0 0.0
    %1576 = vmatpush.xpose.msra.mxu0 0.0
    %1577 = vmatpush.xpose.msra.mxu0 0.0
    %1578 = vmatpush.xpose.msra.mxu0 0.0
    %1579 = vmatpush.xpose.msra.mxu0 %v586
    %1580 = vmatpush.xpose.msra.mxu0 %v510
    %1581 = vmatpush.xpose.msra.mxu0 %v445
    %1582 = vmatpush.xpose.msra.mxu0 %v380
    %1583 = vmatpush.xpose.msra.mxu0 %v315
    %1584 = vmatpush.xpose.msra.mxu0 %v250
    %1585 = vmatpush.xpose.msra.mxu0 %v185
    %1586 = vmatpush.xpose.msra.mxu0 %v120
    %1587 = vmatmul.f32.gmra.mxu0 %v1569
    %v1588 = vpop.f32.mrf.mxu0
    %v1589 = vadd.f32 %v570, %v1588
    %1590 = vdwg.mxu0
    %v1591 = vsel %vm608, %v1589, -inf
    %1592 = vmax.xlane.f32.xlu0 %v1591
    %v1593 = vpop.xlane.xlu0 %1592
    %v1594 = vsub.f32 %v1589, %v1593
    %v1595 = vmul.f32 %v1594, 1.442695
    %v1596 = vpow.pop %v1595
    %v1597 = vsel %vm608, %v1596, 0.0
    %1598 = vadd.xlane.f32.xlu0 %v1597
    %v1599 = vpop.xlane.xlu0 %1598
    %v1600 = vrcp.pop %v1599
    %v1601 = vmul.f32 %v1596, %v1600
    %v1603 = vsel %vm608, %v1601, 0
    %1605 = vmatpush.msra.mxu0 0.0
    %1606 = vmatpush.msra.mxu0 0.0
    %1607 = vmatpush.msra.mxu0 0.0
    %1608 = vmatpush.msra.mxu0 0.0
    %1609 = vmatpush.msra.mxu0 0.0
    %1610 = vmatpush.msra.mxu0 0.0
    %1611 = vmatpush.msra.mxu0 0.0
    %1612 = vmatpush.msra.mxu0 0.0
    %1613 = vmatpush.msra.mxu0 %v585
    %1614 = vmatpush.msra.mxu0 %v509
    %1615 = vmatpush.msra.mxu0 %v444
    %1616 = vmatpush.msra.mxu0 %v379
    %1617 = vmatpush.msra.mxu0 %v314
    %1618 = vmatpush.msra.mxu0 %v249
    %1619 = vmatpush.msra.mxu0 %v184
    %1620 = vmatpush.msra.mxu0 %v119
    %1621 = vmatmul.f32.gmra.mxu0 %v1603
    %v1622 = vpop.f32.mrf.mxu0
    %v1623 = vadd.f32 0.0, %v1622
    %1624 = vdwg.mxu0
    %v1625 = vld [vmem:[%s5] sm:$0xff]
    %v1626 = vld [vmem:[%s5 + $0x8] sm:$0xff]
    %v1627 = vld [vmem:[%s5 + $0x10] sm:$0xff]
    %v1628 = vld [vmem:[%s5 + $0x18] sm:$0xff]
    %v1629 = vld [vmem:[%s5 + $0x20] sm:$0xff]
    %v1630 = vld [vmem:[%s5 + $0x28] sm:$0xff]
    %v1631 = vld [vmem:[%s5 + $0x30] sm:$0xff]
    %v1632 = vld [vmem:[%s5 + $0x38] sm:$0xff]
    %v1633 = vld [vmem:[%s5 + $0x40] sm:$0xff]
    %v1634 = vld [vmem:[%s5 + $0x48] sm:$0xff]
    %v1635 = vld [vmem:[%s5 + $0x50] sm:$0xff]
    %v1636 = vld [vmem:[%s5 + $0x58] sm:$0xff]
    %v1637 = vld [vmem:[%s5 + $0x60] sm:$0xff]
    %v1638 = vld [vmem:[%s5 + $0x68] sm:$0xff]
    %v1639 = vld [vmem:[%s5 + $0x70] sm:$0xff]
    %v1640 = vld [vmem:[%s5 + $0x78] sm:$0xff]
    %1641 = vmatpush.msra.mxu0 %v1640
    %1642 = vmatpush.msra.mxu0 %v1639
    %1643 = vmatpush.msra.mxu0 %v1638
    %1644 = vmatpush.msra.mxu0 %v1637
    %1645 = vmatpush.msra.mxu0 %v1636
    %1646 = vmatpush.msra.mxu0 %v1635
    %1647 = vmatpush.msra.mxu0 %v1634
    %1648 = vmatpush.msra.mxu0 %v1633
    %1649 = vmatpush.msra.mxu0 %v1632
    %1650 = vmatpush.msra.mxu0 %v1631
    %1651 = vmatpush.msra.mxu0 %v1630
    %1652 = vmatpush.msra.mxu0 %v1629
    %1653 = vmatpush.msra.mxu0 %v1628
    %1654 = vmatpush.msra.mxu0 %v1627
    %1655 = vmatpush.msra.mxu0 %v1626
    %1656 = vmatpush.msra.mxu0 %v1625
    %1657 = vmatmul.f32.gmra.mxu0 %v1566
    %v1658 = vpop.f32.mrf.mxu0
    %v1659 = vadd.f32 0.0, %v1658
    %1660 = vdwg.mxu0
    %1662 = vrot.lane.b32.xlu0 %v1623, 16
    %v1663 = vpop.permute.xlu0 %1662
    %v1665 = vsel %vm691, %v1659, %v1663
    %v1666 = vsel %vm696, %v1665, %v1497
    %v1667 = vld [vmem:[%s6] sm:$0xff]
    %v1668 = vld [vmem:[%s6 + $0x8] sm:$0xff]
    %v1669 = vld [vmem:[%s6 + $0x10] sm:$0xff]
    %v1670 = vld [vmem:[%s6 + $0x18] sm:$0xff]
    %v1671 = vld [vmem:[%s6 + $0x20] sm:$0xff]
    %v1672 = vld [vmem:[%s6 + $0x28] sm:$0xff]
    %v1673 = vld [vmem:[%s6 + $0x30] sm:$0xff]
    %v1674 = vld [vmem:[%s6 + $0x38] sm:$0xff]
    %v1675 = vld [vmem:[%s6 + $0x40] sm:$0xff]
    %v1676 = vld [vmem:[%s6 + $0x48] sm:$0xff]
    %v1678 = vsel %vm708, %v1666, 0
    %1680 = vmatpush.msra.mxu0 0.0
    %1681 = vmatpush.msra.mxu0 0.0
    %1682 = vmatpush.msra.mxu0 0.0
    %1683 = vmatpush.msra.mxu0 0.0
    %1684 = vmatpush.msra.mxu0 0.0
    %1685 = vmatpush.msra.mxu0 0.0
    %1686 = vmatpush.msra.mxu0 %v1676
    %1687 = vmatpush.msra.mxu0 %v1675
    %1688 = vmatpush.msra.mxu0 %v1674
    %1689 = vmatpush.msra.mxu0 %v1673
    %1690 = vmatpush.msra.mxu0 %v1672
    %1691 = vmatpush.msra.mxu0 %v1671
    %1692 = vmatpush.msra.mxu0 %v1670
    %1693 = vmatpush.msra.mxu0 %v1669
    %1694 = vmatpush.msra.mxu0 %v1668
    %1695 = vmatpush.msra.mxu0 %v1667
    %1696 = vmatmul.f32.gmra.mxu0 %v1678
    %v1697 = vpop.f32.mrf.mxu0
    %v1698 = vadd.f32 %v573, %v1697
    %1699 = vdwg.mxu0
    %v1700 = vxor.u32 %v1698, 2147483648
    %v1701 = vmul.f32 %v1700, 1.442695
    %v1702 = vpow.pop %v1701
    %v1703 = vadd.f32 %v1702, 1.0
    %v1704 = vrcp.pop %v1703
    %v1705 = vmul.f32 %v1703, %v1704
    %v1706 = vsub.f32 1.0, %v1705
    %v1707 = vmul.f32 %v1704, %v1706
    %v1708 = vadd.f32 %v1704, %v1707
    %vm1709 = vweird.f32 %v1703
    %vm1710 = vweird.f32 %v1704
    %vm1711 = vmor %vm1709, %vm1710
    %v1712 = vsel %vm1711, %v1704, %v1708
    %v1713 = vand.u32 2147483647, %v1703
    %vm1714 = vcmp.eq.f32.partialorder %v1713, 8.507059e+37
    %v1715 = vand.u32 %v1703, 2147483648
    %v1716 = vor.u32 1.1754944e-38, %v1715
    %v1717 = vsel %vm1714, %v1716, %v1712
    %v1718 = vmul.f32 1.0, %v1717
    %v1719 = vtanh.pop %v1698
    %v1720 = vmul.f32 %v1718, %v1488
    %1722 = vrot.lane.b32.xlu0 %v1719, 64
    %v1723 = vpop.permute.xlu0 %1722
    %v1725 = vmul.f32 %v1718, %v1723
    %1727 = vrot.lane.b32.xlu0 %v1725, 32
    %v1728 = vpop.permute.xlu0 %1727
    %v1730 = vadd.f32 %v1720, %v1728
    %v1731 = vtanh.pop %v1730
    %1733 = vrot.lane.b32.xlu0 %v1731, 64
    %v1734 = vpop.permute.xlu0 %1733
    %v1736 = vmul.f32 %v1718, %v1734
    %1738 = vrot.lane.b32.xlu0 %v1736, 80
    %v1739 = vpop.permute.xlu0 %1738
    %v1741 = vsel %vm696, %v1665, %v1739
    %v1742 = vld [vmem:[%s8] sm:$0xff]
    %v1743 = vld [vmem:[%s8 + $0x8] sm:$0xff]
    %v1744 = vld [vmem:[%s8 + $0x10] sm:$0xff]
    %v1745 = vld [vmem:[%s8 + $0x18] sm:$0xff]
    %v1746 = vld [vmem:[%s8 + $0x20] sm:$0xff]
    %v1747 = vld [vmem:[%s8 + $0x28] sm:$0xff]
    %v1748 = vld [vmem:[%s8 + $0x30] sm:$0xff]
    %v1749 = vld [vmem:[%s8 + $0x38] sm:$0xff]
    %v1750 = vld [vmem:[%s8 + $0x40] sm:$0xff]
    %v1751 = vld [vmem:[%s8 + $0x48] sm:$0xff]
    %v1753 = vsel %vm708, %v1741, 0
    %1755 = vmatpush.msra.mxu0 0.0
    %1756 = vmatpush.msra.mxu0 0.0
    %1757 = vmatpush.msra.mxu0 0.0
    %1758 = vmatpush.msra.mxu0 0.0
    %1759 = vmatpush.msra.mxu0 0.0
    %1760 = vmatpush.msra.mxu0 0.0
    %1761 = vmatpush.msra.mxu0 %v1751
    %1762 = vmatpush.msra.mxu0 %v1750
    %1763 = vmatpush.msra.mxu0 %v1749
    %1764 = vmatpush.msra.mxu0 %v1748
    %1765 = vmatpush.msra.mxu0 %v1747
    %1766 = vmatpush.msra.mxu0 %v1746
    %1767 = vmatpush.msra.mxu0 %v1745
    %1768 = vmatpush.msra.mxu0 %v1744
    %1769 = vmatpush.msra.mxu0 %v1743
    %1770 = vmatpush.msra.mxu0 %v1742
    %1771 = vmatmul.f32.gmra.mxu0 %v1753
    %v1772 = vpop.f32.mrf.mxu0
    %v1773 = vadd.f32 %v577, %v1772
    %1774 = vdwg.mxu0
    %s1775 = scalar_lea.vmem %s10, 40
    %1776 = vst [vmem:[%s1775] sm:$0xff] %v1773
    %s1777 = scalar_lea.vmem %s4, 40
    %v1778 = vld [vmem:[%s1777] sm:$0xff]
    %s1779 = sld [smem:[#allocation2 + $0x5]]
    %p1780 = scmp.eq.s32.totalorder %s1779, 1
    // Predicated region
    $region78: #{seq2seq_forward.1} parent=1 // pred_check
      %p1781 = pneg %p1780
    $region79: #{seq2seq_forward.1} parent=1 // pred_check_branch
      %1783 = sbr.rel (%p1781) target = $region81
    $region80: #{seq2seq_forward.1} parent=1 // pred_region
      _
    $region81: #{seq2seq_forward.1} parent=1 // pred_fallthru
      _
    %p1784 = pneg %p1780
    // Predicated region
    $region82: #{seq2seq_forward.1} parent=1 // pred_check
      _
    $region83: #{seq2seq_forward.1} parent=1 // pred_check_branch
      %1786 = sbr.rel (%p1780) target = $region85
    $region84: #{seq2seq_forward.1} parent=1 // pred_region
      %1787 = vmax.xlane.f32.xlu0 %v1773
      %v1788 = vpop.xlane.xlu0 %1787
      %vm1789 = vcmp.eq.f32.partialorder %v1773, %v1788
      %v1790 = vsel %vm1789, %v580, 128
      %v1791 = vand.u32 %v1790, 65535
      %v1792 = vshra.s32 %v1790, 16
      %v1793 = vcvt.s32.f32 %v1791
      %v1794 = vcvt.s32.f32 %v1792
      %1795 = vmin.xlane.f32.xlu0 %v1794
      %v1796 = vpop.xlane.xlu0 %1795
      %vm1797 = vcmp.eq.f32.partialorder %v1794, %v1796
      %v1798 = vsel %vm1797, %v1793, inf
      %1799 = vmin.xlane.f32.xlu0 %v1798
      %v1800 = vpop.xlane.xlu0 %1799
      %v1801 = vcvt.f32.s32 %v1800
      %v1802 = vcvt.f32.s32 %v1796
      %v1803 = vshll.u32 %v1802, 16
      %v1804 = vadd.s32 %v1803, %v1801
      %vm1805 = vcmp.eq.s32.totalorder %v580, %v1804
      %v1806 = vsel %vm1805, 1, 0
      %v1807 = vcvt.s32.f32 %v1806
    $region85: #{seq2seq_forward.1} parent=1 // pred_fallthru
      %v1808 = vphi %v1778, %v1807
    %1809 = vrot.lane.b32.xlu0 %v1736, 32
    %v1810 = vpop.permute.xlu0 %1809
    %v1811 = vsel %vm53, %v1810, 0
    %1813 = vmatpush.xpose.msra.mxu0 0.0
    %1814 = vmatpush.xpose.msra.mxu0 0.0
    %1815 = vmatpush.xpose.msra.mxu0 0.0
    %1816 = vmatpush.xpose.msra.mxu0 0.0
    %1817 = vmatpush.xpose.msra.mxu0 0.0
    %1818 = vmatpush.xpose.msra.mxu0 0.0
    %1819 = vmatpush.xpose.msra.mxu0 0.0
    %1820 = vmatpush.xpose.msra.mxu0 0.0
    %1821 = vmatpush.xpose.msra.mxu0 %v586
    %1822 = vmatpush.xpose.msra.mxu0 %v510
    %1823 = vmatpush.xpose.msra.mxu0 %v445
    %1824 = vmatpush.xpose.msra.mxu0 %v380
    %1825 = vmatpush.xpose.msra.mxu0 %v315
    %1826 = vmatpush.xpose.msra.mxu0 %v250
    %1827 = vmatpush.xpose.msra.mxu0 %v185
    %1828 = vmatpush.xpose.msra.mxu0 %v120
    %1829 = vmatmul.f32.gmra.mxu0 %v1811
    %v1830 = vpop.f32.mrf.mxu0
    %v1831 = vadd.f32 %v570, %v1830
    %1832 = vdwg.mxu0
    %v1833 = vsel %vm608, %v1831, -inf
    %1834 = vmax.xlane.f32.xlu0 %v1833
    %v1835 = vpop.xlane.xlu0 %1834
    %v1836 = vsub.f32 %v1831, %v1835
    %v1837 = vmul.f32 %v1836, 1.442695
    %v1838 = vpow.pop %v1837
    %v1839 = vsel %vm608, %v1838, 0.0
    %1840 = vadd.xlane.f32.xlu0 %v1839
    %v1841 = vpop.xlane.xlu0 %1840
    %v1842 = vrcp.pop %v1841
    %v1843 = vmul.f32 %v1838, %v1842
    %v1845 = vsel %vm608, %v1843, 0
    %1847 = vmatpush.msra.mxu0 0.0
    %1848 = vmatpush.msra.mxu0 0.0
    %1849 = vmatpush.msra.mxu0 0.0
    %1850 = vmatpush.msra.mxu0 0.0
    %1851 = vmatpush.msra.mxu0 0.0
    %1852 = vmatpush.msra.mxu0 0.0
    %1853 = vmatpush.msra.mxu0 0.0
    %1854 = vmatpush.msra.mxu0 0.0
    %1855 = vmatpush.msra.mxu0 %v585
    %1856 = vmatpush.msra.mxu0 %v509
    %1857 = vmatpush.msra.mxu0 %v444
    %1858 = vmatpush.msra.mxu0 %v379
    %1859 = vmatpush.msra.mxu0 %v314
    %1860 = vmatpush.msra.mxu0 %v249
    %1861 = vmatpush.msra.mxu0 %v184
    %1862 = vmatpush.msra.mxu0 %v119
    %1863 = vmatmul.f32.gmra.mxu0 %v1845
    %v1864 = vpop.f32.mrf.mxu0
    %v1865 = vadd.f32 0.0, %v1864
    %1866 = vdwg.mxu0
    %v1867 = vld [vmem:[%s5] sm:$0xff]
    %v1868 = vld [vmem:[%s5 + $0x8] sm:$0xff]
    %v1869 = vld [vmem:[%s5 + $0x10] sm:$0xff]
    %v1870 = vld [vmem:[%s5 + $0x18] sm:$0xff]
    %v1871 = vld [vmem:[%s5 + $0x20] sm:$0xff]
    %v1872 = vld [vmem:[%s5 + $0x28] sm:$0xff]
    %v1873 = vld [vmem:[%s5 + $0x30] sm:$0xff]
    %v1874 = vld [vmem:[%s5 + $0x38] sm:$0xff]
    %v1875 = vld [vmem:[%s5 + $0x40] sm:$0xff]
    %v1876 = vld [vmem:[%s5 + $0x48] sm:$0xff]
    %v1877 = vld [vmem:[%s5 + $0x50] sm:$0xff]
    %v1878 = vld [vmem:[%s5 + $0x58] sm:$0xff]
    %v1879 = vld [vmem:[%s5 + $0x60] sm:$0xff]
    %v1880 = vld [vmem:[%s5 + $0x68] sm:$0xff]
    %v1881 = vld [vmem:[%s5 + $0x70] sm:$0xff]
    %v1882 = vld [vmem:[%s5 + $0x78] sm:$0xff]
    %1883 = vmatpush.msra.mxu0 %v1882
    %1884 = vmatpush.msra.mxu0 %v1881
    %1885 = vmatpush.msra.mxu0 %v1880
    %1886 = vmatpush.msra.mxu0 %v1879
    %1887 = vmatpush.msra.mxu0 %v1878
    %1888 = vmatpush.msra.mxu0 %v1877
    %1889 = vmatpush.msra.mxu0 %v1876
    %1890 = vmatpush.msra.mxu0 %v1875
    %1891 = vmatpush.msra.mxu0 %v1874
    %1892 = vmatpush.msra.mxu0 %v1873
    %1893 = vmatpush.msra.mxu0 %v1872
    %1894 = vmatpush.msra.mxu0 %v1871
    %1895 = vmatpush.msra.mxu0 %v1870
    %1896 = vmatpush.msra.mxu0 %v1869
    %1897 = vmatpush.msra.mxu0 %v1868
    %1898 = vmatpush.msra.mxu0 %v1867
    %1899 = vmatmul.f32.gmra.mxu0 %v1808
    %v1900 = vpop.f32.mrf.mxu0
    %v1901 = vadd.f32 0.0, %v1900
    %1902 = vdwg.mxu0
    %1904 = vrot.lane.b32.xlu0 %v1865, 16
    %v1905 = vpop.permute.xlu0 %1904
    %v1907 = vsel %vm691, %v1901, %v1905
    %v1908 = vsel %vm696, %v1907, %v1739
    %v1909 = vld [vmem:[%s6] sm:$0xff]
    %v1910 = vld [vmem:[%s6 + $0x8] sm:$0xff]
    %v1911 = vld [vmem:[%s6 + $0x10] sm:$0xff]
    %v1912 = vld [vmem:[%s6 + $0x18] sm:$0xff]
    %v1913 = vld [vmem:[%s6 + $0x20] sm:$0xff]
    %v1914 = vld [vmem:[%s6 + $0x28] sm:$0xff]
    %v1915 = vld [vmem:[%s6 + $0x30] sm:$0xff]
    %v1916 = vld [vmem:[%s6 + $0x38] sm:$0xff]
    %v1917 = vld [vmem:[%s6 + $0x40] sm:$0xff]
    %v1918 = vld [vmem:[%s6 + $0x48] sm:$0xff]
    %v1920 = vsel %vm708, %v1908, 0
    %1922 = vmatpush.msra.mxu0 0.0
    %1923 = vmatpush.msra.mxu0 0.0
    %1924 = vmatpush.msra.mxu0 0.0
    %1925 = vmatpush.msra.mxu0 0.0
    %1926 = vmatpush.msra.mxu0 0.0
    %1927 = vmatpush.msra.mxu0 0.0
    %1928 = vmatpush.msra.mxu0 %v1918
    %1929 = vmatpush.msra.mxu0 %v1917
    %1930 = vmatpush.msra.mxu0 %v1916
    %1931 = vmatpush.msra.mxu0 %v1915
    %1932 = vmatpush.msra.mxu0 %v1914
    %1933 = vmatpush.msra.mxu0 %v1913
    %1934 = vmatpush.msra.mxu0 %v1912
    %1935 = vmatpush.msra.mxu0 %v1911
    %1936 = vmatpush.msra.mxu0 %v1910
    %1937 = vmatpush.msra.mxu0 %v1909
    %1938 = vmatmul.f32.gmra.mxu0 %v1920
    %v1939 = vpop.f32.mrf.mxu0
    %v1940 = vadd.f32 %v573, %v1939
    %1941 = vdwg.mxu0
    %v1942 = vxor.u32 %v1940, 2147483648
    %v1943 = vmul.f32 %v1942, 1.442695
    %v1944 = vpow.pop %v1943
    %v1945 = vadd.f32 %v1944, 1.0
    %v1946 = vrcp.pop %v1945
    %v1947 = vmul.f32 %v1945, %v1946
    %v1948 = vsub.f32 1.0, %v1947
    %v1949 = vmul.f32 %v1946, %v1948
    %v1950 = vadd.f32 %v1946, %v1949
    %vm1951 = vweird.f32 %v1945
    %vm1952 = vweird.f32 %v1946
    %vm1953 = vmor %vm1951, %vm1952
    %v1954 = vsel %vm1953, %v1946, %v1950
    %v1955 = vand.u32 2147483647, %v1945
    %vm1956 = vcmp.eq.f32.partialorder %v1955, 8.507059e+37
    %v1957 = vand.u32 %v1945, 2147483648
    %v1958 = vor.u32 1.1754944e-38, %v1957
    %v1959 = vsel %vm1956, %v1958, %v1954
    %v1960 = vmul.f32 1.0, %v1959
    %v1961 = vtanh.pop %v1940
    %v1962 = vmul.f32 %v1960, %v1730
    %1964 = vrot.lane.b32.xlu0 %v1961, 64
    %v1965 = vpop.permute.xlu0 %1964
    %v1967 = vmul.f32 %v1960, %v1965
    %1969 = vrot.lane.b32.xlu0 %v1967, 32
    %v1970 = vpop.permute.xlu0 %1969
    %v1972 = vadd.f32 %v1962, %v1970
    %v1973 = vtanh.pop %v1972
    %1975 = vrot.lane.b32.xlu0 %v1973, 64
    %v1976 = vpop.permute.xlu0 %1975
    %v1978 = vmul.f32 %v1960, %v1976
    %1980 = vrot.lane.b32.xlu0 %v1978, 80
    %v1981 = vpop.permute.xlu0 %1980
    %v1983 = vsel %vm696, %v1907, %v1981
    %v1984 = vld [vmem:[%s8] sm:$0xff]
    %v1985 = vld [vmem:[%s8 + $0x8] sm:$0xff]
    %v1986 = vld [vmem:[%s8 + $0x10] sm:$0xff]
    %v1987 = vld [vmem:[%s8 + $0x18] sm:$0xff]
    %v1988 = vld [vmem:[%s8 + $0x20] sm:$0xff]
    %v1989 = vld [vmem:[%s8 + $0x28] sm:$0xff]
    %v1990 = vld [vmem:[%s8 + $0x30] sm:$0xff]
    %v1991 = vld [vmem:[%s8 + $0x38] sm:$0xff]
    %v1992 = vld [vmem:[%s8 + $0x40] sm:$0xff]
    %v1993 = vld [vmem:[%s8 + $0x48] sm:$0xff]
    %v1995 = vsel %vm708, %v1983, 0
    %1997 = vmatpush.msra.mxu0 0.0
    %1998 = vmatpush.msra.mxu0 0.0
    %1999 = vmatpush.msra.mxu0 0.0
    %2000 = vmatpush.msra.mxu0 0.0
    %2001 = vmatpush.msra.mxu0 0.0
    %2002 = vmatpush.msra.mxu0 0.0
    %2003 = vmatpush.msra.mxu0 %v1993
    %2004 = vmatpush.msra.mxu0 %v1992
    %2005 = vmatpush.msra.mxu0 %v1991
    %2006 = vmatpush.msra.mxu0 %v1990
    %2007 = vmatpush.msra.mxu0 %v1989
    %2008 = vmatpush.msra.mxu0 %v1988
    %2009 = vmatpush.msra.mxu0 %v1987
    %2010 = vmatpush.msra.mxu0 %v1986
    %2011 = vmatpush.msra.mxu0 %v1985
    %2012 = vmatpush.msra.mxu0 %v1984
    %2013 = vmatmul.f32.gmra.mxu0 %v1995
    %v2014 = vpop.f32.mrf.mxu0
    %v2015 = vadd.f32 %v577, %v2014
    %2016 = vdwg.mxu0
    %s2017 = scalar_lea.vmem %s10, 48
    %2018 = vst [vmem:[%s2017] sm:$0xff] %v2015
    %s2019 = scalar_lea.vmem %s4, 48
    %v2020 = vld [vmem:[%s2019] sm:$0xff]
    %s2021 = sld [smem:[#allocation2 + $0x6]]
    %p2022 = scmp.eq.s32.totalorder %s2021, 1
    // Predicated region
    $region86: #{seq2seq_forward.1} parent=1 // pred_check
      %p2023 = pneg %p2022
    $region87: #{seq2seq_forward.1} parent=1 // pred_check_branch
      %2025 = sbr.rel (%p2023) target = $region89
    $region88: #{seq2seq_forward.1} parent=1 // pred_region
      _
    $region89: #{seq2seq_forward.1} parent=1 // pred_fallthru
      _
    %p2026 = pneg %p2022
    // Predicated region
    $region90: #{seq2seq_forward.1} parent=1 // pred_check
      _
    $region91: #{seq2seq_forward.1} parent=1 // pred_check_branch
      %2028 = sbr.rel (%p2022) target = $region93
    $region92: #{seq2seq_forward.1} parent=1 // pred_region
      %2029 = vmax.xlane.f32.xlu0 %v2015
      %v2030 = vpop.xlane.xlu0 %2029
      %vm2031 = vcmp.eq.f32.partialorder %v2015, %v2030
      %v2032 = vsel %vm2031, %v580, 128
      %v2033 = vand.u32 %v2032, 65535
      %v2034 = vshra.s32 %v2032, 16
      %v2035 = vcvt.s32.f32 %v2033
      %v2036 = vcvt.s32.f32 %v2034
      %2037 = vmin.xlane.f32.xlu0 %v2036
      %v2038 = vpop.xlane.xlu0 %2037
      %vm2039 = vcmp.eq.f32.partialorder %v2036, %v2038
      %v2040 = vsel %vm2039, %v2035, inf
      %2041 = vmin.xlane.f32.xlu0 %v2040
      %v2042 = vpop.xlane.xlu0 %2041
      %v2043 = vcvt.f32.s32 %v2042
      %v2044 = vcvt.f32.s32 %v2038
      %v2045 = vshll.u32 %v2044, 16
      %v2046 = vadd.s32 %v2045, %v2043
      %vm2047 = vcmp.eq.s32.totalorder %v580, %v2046
      %v2048 = vsel %vm2047, 1, 0
      %v2049 = vcvt.s32.f32 %v2048
    $region93: #{seq2seq_forward.1} parent=1 // pred_fallthru
      %v2050 = vphi %v2020, %v2049
    %2051 = vrot.lane.b32.xlu0 %v1978, 32
    %v2052 = vpop.permute.xlu0 %2051
    %v2053 = vsel %vm53, %v2052, 0
    %2055 = vmatpush.xpose.msra.mxu0 0.0
    %2056 = vmatpush.xpose.msra.mxu0 0.0
    %2057 = vmatpush.xpose.msra.mxu0 0.0
    %2058 = vmatpush.xpose.msra.mxu0 0.0
    %2059 = vmatpush.xpose.msra.mxu0 0.0
    %2060 = vmatpush.xpose.msra.mxu0 0.0
    %2061 = vmatpush.xpose.msra.mxu0 0.0
    %2062 = vmatpush.xpose.msra.mxu0 0.0
    %2063 = vmatpush.xpose.msra.mxu0 %v586
    %2064 = vmatpush.xpose.msra.mxu0 %v510
    %2065 = vmatpush.xpose.msra.mxu0 %v445
    %2066 = vmatpush.xpose.msra.mxu0 %v380
    %2067 = vmatpush.xpose.msra.mxu0 %v315
    %2068 = vmatpush.xpose.msra.mxu0 %v250
    %2069 = vmatpush.xpose.msra.mxu0 %v185
    %2070 = vmatpush.xpose.msra.mxu0 %v120
    %2071 = vmatmul.f32.gmra.mxu0 %v2053
    %v2072 = vpop.f32.mrf.mxu0
    %v2073 = vadd.f32 %v570, %v2072
    %2074 = vdwg.mxu0
    %v2075 = vsel %vm608, %v2073, -inf
    %2076 = vmax.xlane.f32.xlu0 %v2075
    %v2077 = vpop.xlane.xlu0 %2076
    %v2078 = vsub.f32 %v2073, %v2077
    %v2079 = vmul.f32 %v2078, 1.442695
    %v2080 = vpow.pop %v2079
    %v2081 = vsel %vm608, %v2080, 0.0
    %2082 = vadd.xlane.f32.xlu0 %v2081
    %v2083 = vpop.xlane.xlu0 %2082
    %v2084 = vrcp.pop %v2083
    %v2085 = vmul.f32 %v2080, %v2084
    %v2087 = vsel %vm608, %v2085, 0
    %2089 = vmatpush.msra.mxu0 0.0
    %2090 = vmatpush.msra.mxu0 0.0
    %2091 = vmatpush.msra.mxu0 0.0
    %2092 = vmatpush.msra.mxu0 0.0
    %2093 = vmatpush.msra.mxu0 0.0
    %2094 = vmatpush.msra.mxu0 0.0
    %2095 = vmatpush.msra.mxu0 0.0
    %2096 = vmatpush.msra.mxu0 0.0
    %2097 = vmatpush.msra.mxu0 %v585
    %2098 = vmatpush.msra.mxu0 %v509
    %2099 = vmatpush.msra.mxu0 %v444
    %2100 = vmatpush.msra.mxu0 %v379
    %2101 = vmatpush.msra.mxu0 %v314
    %2102 = vmatpush.msra.mxu0 %v249
    %2103 = vmatpush.msra.mxu0 %v184
    %2104 = vmatpush.msra.mxu0 %v119
    %2105 = vmatmul.f32.gmra.mxu0 %v2087
    %v2106 = vpop.f32.mrf.mxu0
    %v2107 = vadd.f32 0.0, %v2106
    %2108 = vdwg.mxu0
    %v2109 = vld [vmem:[%s5] sm:$0xff]
    %v2110 = vld [vmem:[%s5 + $0x8] sm:$0xff]
    %v2111 = vld [vmem:[%s5 + $0x10] sm:$0xff]
    %v2112 = vld [vmem:[%s5 + $0x18] sm:$0xff]
    %v2113 = vld [vmem:[%s5 + $0x20] sm:$0xff]
    %v2114 = vld [vmem:[%s5 + $0x28] sm:$0xff]
    %v2115 = vld [vmem:[%s5 + $0x30] sm:$0xff]
    %v2116 = vld [vmem:[%s5 + $0x38] sm:$0xff]
    %v2117 = vld [vmem:[%s5 + $0x40] sm:$0xff]
    %v2118 = vld [vmem:[%s5 + $0x48] sm:$0xff]
    %v2119 = vld [vmem:[%s5 + $0x50] sm:$0xff]
    %v2120 = vld [vmem:[%s5 + $0x58] sm:$0xff]
    %v2121 = vld [vmem:[%s5 + $0x60] sm:$0xff]
    %v2122 = vld [vmem:[%s5 + $0x68] sm:$0xff]
    %v2123 = vld [vmem:[%s5 + $0x70] sm:$0xff]
    %v2124 = vld [vmem:[%s5 + $0x78] sm:$0xff]
    %2125 = vmatpush.msra.mxu0 %v2124
    %2126 = vmatpush.msra.mxu0 %v2123
    %2127 = vmatpush.msra.mxu0 %v2122
    %2128 = vmatpush.msra.mxu0 %v2121
    %2129 = vmatpush.msra.mxu0 %v2120
    %2130 = vmatpush.msra.mxu0 %v2119
    %2131 = vmatpush.msra.mxu0 %v2118
    %2132 = vmatpush.msra.mxu0 %v2117
    %2133 = vmatpush.msra.mxu0 %v2116
    %2134 = vmatpush.msra.mxu0 %v2115
    %2135 = vmatpush.msra.mxu0 %v2114
    %2136 = vmatpush.msra.mxu0 %v2113
    %2137 = vmatpush.msra.mxu0 %v2112
    %2138 = vmatpush.msra.mxu0 %v2111
    %2139 = vmatpush.msra.mxu0 %v2110
    %2140 = vmatpush.msra.mxu0 %v2109
    %2141 = vmatmul.f32.gmra.mxu0 %v2050
    %v2142 = vpop.f32.mrf.mxu0
    %v2143 = vadd.f32 0.0, %v2142
    %2144 = vdwg.mxu0
    %2146 = vrot.lane.b32.xlu0 %v2107, 16
    %v2147 = vpop.permute.xlu0 %2146
    %v2149 = vsel %vm691, %v2143, %v2147
    %v2150 = vsel %vm696, %v2149, %v1981
    %v2151 = vld [vmem:[%s6] sm:$0xff]
    %v2152 = vld [vmem:[%s6 + $0x8] sm:$0xff]
    %v2153 = vld [vmem:[%s6 + $0x10] sm:$0xff]
    %v2154 = vld [vmem:[%s6 + $0x18] sm:$0xff]
    %v2155 = vld [vmem:[%s6 + $0x20] sm:$0xff]
    %v2156 = vld [vmem:[%s6 + $0x28] sm:$0xff]
    %v2157 = vld [vmem:[%s6 + $0x30] sm:$0xff]
    %v2158 = vld [vmem:[%s6 + $0x38] sm:$0xff]
    %v2159 = vld [vmem:[%s6 + $0x40] sm:$0xff]
    %v2160 = vld [vmem:[%s6 + $0x48] sm:$0xff]
    %v2162 = vsel %vm708, %v2150, 0
    %2164 = vmatpush.msra.mxu0 0.0
    %2165 = vmatpush.msra.mxu0 0.0
    %2166 = vmatpush.msra.mxu0 0.0
    %2167 = vmatpush.msra.mxu0 0.0
    %2168 = vmatpush.msra.mxu0 0.0
    %2169 = vmatpush.msra.mxu0 0.0
    %2170 = vmatpush.msra.mxu0 %v2160
    %2171 = vmatpush.msra.mxu0 %v2159
    %2172 = vmatpush.msra.mxu0 %v2158
    %2173 = vmatpush.msra.mxu0 %v2157
    %2174 = vmatpush.msra.mxu0 %v2156
    %2175 = vmatpush.msra.mxu0 %v2155
    %2176 = vmatpush.msra.mxu0 %v2154
    %2177 = vmatpush.msra.mxu0 %v2153
    %2178 = vmatpush.msra.mxu0 %v2152
    %2179 = vmatpush.msra.mxu0 %v2151
    %2180 = vmatmul.f32.gmra.mxu0 %v2162
    %v2181 = vpop.f32.mrf.mxu0
    %v2182 = vadd.f32 %v573, %v2181
    %2183 = vdwg.mxu0
    %v2184 = vxor.u32 %v2182, 2147483648
    %v2185 = vmul.f32 %v2184, 1.442695
    %v2186 = vpow.pop %v2185
    %v2187 = vadd.f32 %v2186, 1.0
    %v2188 = vrcp.pop %v2187
    %v2189 = vmul.f32 %v2187, %v2188
    %v2190 = vsub.f32 1.0, %v2189
    %v2191 = vmul.f32 %v2188, %v2190
    %v2192 = vadd.f32 %v2188, %v2191
    %vm2193 = vweird.f32 %v2187
    %vm2194 = vweird.f32 %v2188
    %vm2195 = vmor %vm2193, %vm2194
    %v2196 = vsel %vm2195, %v2188, %v2192
    %v2197 = vand.u32 2147483647, %v2187
    %vm2198 = vcmp.eq.f32.partialorder %v2197, 8.507059e+37
    %v2199 = vand.u32 %v2187, 2147483648
    %v2200 = vor.u32 1.1754944e-38, %v2199
    %v2201 = vsel %vm2198, %v2200, %v2196
    %v2202 = vmul.f32 1.0, %v2201
    %v2203 = vtanh.pop %v2182
    %v2204 = vmul.f32 %v2202, %v1972
    %2206 = vrot.lane.b32.xlu0 %v2203, 64
    %v2207 = vpop.permute.xlu0 %2206
    %v2209 = vmul.f32 %v2202, %v2207
    %2211 = vrot.lane.b32.xlu0 %v2209, 32
    %v2212 = vpop.permute.xlu0 %2211
    %v2214 = vadd.f32 %v2204, %v2212
    %v2215 = vtanh.pop %v2214
    %2217 = vrot.lane.b32.xlu0 %v2215, 64
    %v2218 = vpop.permute.xlu0 %2217
    %v2220 = vmul.f32 %v2202, %v2218
    %2222 = vrot.lane.b32.xlu0 %v2220, 80
    %v2223 = vpop.permute.xlu0 %2222
    %v2225 = vsel %vm696, %v2149, %v2223
    %v2226 = vld [vmem:[%s8] sm:$0xff]
    %v2227 = vld [vmem:[%s8 + $0x8] sm:$0xff]
    %v2228 = vld [vmem:[%s8 + $0x10] sm:$0xff]
    %v2229 = vld [vmem:[%s8 + $0x18] sm:$0xff]
    %v2230 = vld [vmem:[%s8 + $0x20] sm:$0xff]
    %v2231 = vld [vmem:[%s8 + $0x28] sm:$0xff]
    %v2232 = vld [vmem:[%s8 + $0x30] sm:$0xff]
    %v2233 = vld [vmem:[%s8 + $0x38] sm:$0xff]
    %v2234 = vld [vmem:[%s8 + $0x40] sm:$0xff]
    %v2235 = vld [vmem:[%s8 + $0x48] sm:$0xff]
    %v2237 = vsel %vm708, %v2225, 0
    %2239 = vmatpush.msra.mxu0 0.0
    %2240 = vmatpush.msra.mxu0 0.0
    %2241 = vmatpush.msra.mxu0 0.0
    %2242 = vmatpush.msra.mxu0 0.0
    %2243 = vmatpush.msra.mxu0 0.0
    %2244 = vmatpush.msra.mxu0 0.0
    %2245 = vmatpush.msra.mxu0 %v2235
    %2246 = vmatpush.msra.mxu0 %v2234
    %2247 = vmatpush.msra.mxu0 %v2233
    %2248 = vmatpush.msra.mxu0 %v2232
    %2249 = vmatpush.msra.mxu0 %v2231
    %2250 = vmatpush.msra.mxu0 %v2230
    %2251 = vmatpush.msra.mxu0 %v2229
    %2252 = vmatpush.msra.mxu0 %v2228
    %2253 = vmatpush.msra.mxu0 %v2227
    %2254 = vmatpush.msra.mxu0 %v2226
    %2255 = vmatmul.f32.gmra.mxu0 %v2237
    %v2256 = vpop.f32.mrf.mxu0
    %v2257 = vadd.f32 %v577, %v2256
    %2258 = vdwg.mxu0
    %s2259 = scalar_lea.vmem %s10, 56
    %2260 = vst [vmem:[%s2259] sm:$0xff] %v2257
    // Predicated region
    $region94: #{seq2seq_forward.1} parent=1 // pred_check
      _
    $region95: #{seq2seq_forward.1} parent=1 // pred_check_branch
      %2262 = sbr.rel (0) target = $region97
    $region96: #{seq2seq_forward.1} parent=1 // pred_region
      _
    $region97: #{seq2seq_forward.1} parent=1 // pred_fallthru
      _
    // Predicated region
    $region98: #{seq2seq_forward.1} parent=1 // pred_check
      _
    $region99: #{seq2seq_forward.1} parent=1 // pred_check_branch
      %2264 = sbr.rel (0) target = $region101
    $region100: #{seq2seq_forward.1} parent=1 // pred_region
      _
    $region101: #{seq2seq_forward.1} parent=1 // pred_fallthru
      _
    %2265 = vsyncpa [#allocation3], 1

</llo_original>
